<compile_context>
chip_gen: v6e
topology: v6e:2x2x1
jax: 0.10.0
libtpu: 0.0.40
codegen_flags: <defaults>
</compile_context>

<pallas_src>
import functools

import jax
import jax.numpy as jnp
from jax import lax
from jax.experimental import pallas as pl
from jax.experimental.pallas import tpu as pltpu


# ----------------------------------------------------------------------------
# Fused kernel: conv3x3(pad=1) + bias + ReLU + (pixel+crop) mean + FC
# One grid step per batch element; all crops of that element processed at once.
# ----------------------------------------------------------------------------
def _fused_kernel(xflat_ref, w_ref, bc_ref, mask_ref, fwt_ref, fbc_ref, out_ref,
                  *, Wp, Lout, inv_count):
    # xflat_ref: (C, Lg)   channel-major, spatially flattened padded crops,
    #                      with a `guard` of zeros on both ends (Lg = Lout+2*guard)
    # w_ref    : (9, F, C) 3x3 conv weights per tap, (out_ch, in_ch)
    # bc_ref   : (F, 1)    conv bias
    # mask_ref : (1, Lout) 1.0 at valid interior pixels, 0.0 at halo positions
    # fwt_ref  : (Kp, F)   FC weight transposed, rows zero-padded to Kp
    # fbc_ref  : (Kp, 1)   FC bias (zero-padded)
    # out_ref  : (Kp, 1)   averaged logits for this batch element
    guard = Wp + 1

    # 3x3 'same' conv on padded coordinates: each tap is a constant-offset
    # lane slice of the flattened slab -> one (F,C)x(C,Lout) MXU matmul.
    acc = None
    for t in range(9):
        kh, kw = divmod(t, 3)
        off = (kh - 1) * Wp + (kw - 1)
        patch = xflat_ref[:, pl.ds(guard + off, Lout)]            # (C, Lout)
        contrib = jnp.dot(w_ref[t], patch,
                          preferred_element_type=jnp.float32)     # (F, Lout)
        acc = contrib if acc is None else acc + contrib

    # Bias + ReLU, zero out halo positions, then one mean over all valid
    # (crop, pixel) positions (pixel mean and crop mean fused).
    y = jnp.maximum(acc + bc_ref[...], 0.0)                       # (F, Lout)
    pooled = jnp.sum(y * mask_ref[...], axis=1, keepdims=True) * inv_count  # (F, 1)

    # FC after the mean (mean commutes with the affine layer).
    out_ref[...] = (
        jnp.dot(fwt_ref[...], pooled, preferred_element_type=jnp.float32)
        + fbc_ref[...]
    )


def fused_forward(xflat, w9, bc, mask_row, fwT, fbc, *, Wp, Lout, inv_count):
    B, C, Lg = xflat.shape
    F = w9.shape[1]
    Kp = fwT.shape[0]
    kernel = functools.partial(_fused_kernel, Wp=Wp, Lout=Lout,
                               inv_count=inv_count)
    return pl.pallas_call(
        kernel,
        out_shape=jax.ShapeDtypeStruct((B, Kp, 1), jnp.float32),
        grid_spec=pltpu.PrefetchScalarGridSpec(
            num_scalar_prefetch=0,
            grid=(B,),
            in_specs=[
                pl.BlockSpec((None, C, Lg), lambda i: (i, 0, 0)),
                pl.BlockSpec((9, F, C), lambda i: (0, 0, 0)),
                pl.BlockSpec((F, 1), lambda i: (0, 0)),
                pl.BlockSpec((1, Lout), lambda i: (0, 0)),
                pl.BlockSpec((Kp, F), lambda i: (0, 0)),
                pl.BlockSpec((Kp, 1), lambda i: (0, 0)),
            ],
            out_specs=pl.BlockSpec((None, Kp, 1), lambda i: (i, 0, 0)),
        ),
        compiler_params=pltpu.CompilerParams(
            dimension_semantics=("parallel",)
        ),
    )(xflat, w9, bc, mask_row, fwT, fbc)


# ----------------------------------------------------------------------------
# Model wrapper (reproduces model_dhp.Model.forward semantics)
# ----------------------------------------------------------------------------
def model_forward(x, params, crop):
    """x: (b, n_crops, C, H, W) if crop > 1 else (b, C, H, W); NCHW like PyTorch."""
    if crop > 1:
        b, n_crops, c, h, w = x.shape
    else:
        x = x[:, None]                                 # (b, 1, c, h, w)
        b, n_crops, c, h, w = x.shape

    Hp, Wp = h + 2, w + 2
    guard = Wp + 1
    Lout = n_crops * Hp * Wp

    # Layout plumbing (XLA glue): channel-major, 1-pixel halo pad, spatial
    # flatten, plus a guard of zeros so every tap slice stays in-bounds.
    xc = jnp.transpose(x.astype(jnp.float32), (0, 2, 1, 3, 4))   # (b,C,Nc,H,W)
    xp = jnp.pad(xc, ((0, 0), (0, 0), (0, 0), (1, 1), (1, 1)))   # (b,C,Nc,Hp,Wp)
    xflat = xp.reshape(b, c, Lout)
    xflat = jnp.pad(xflat, ((0, 0), (0, 0), (guard, guard)))     # (b,C,Lg)

    conv_w = params["conv_w"].astype(jnp.float32)      # (3, 3, C, F) HWIO
    F = conv_w.shape[-1]
    w9 = jnp.transpose(conv_w.reshape(9, c, F), (0, 2, 1))       # (9, F, C)
    bc = params["conv_b"].astype(jnp.float32).reshape(F, 1)

    fc_w = params["fc_w"].astype(jnp.float32)          # (F, K)
    fc_b = params["fc_b"].astype(jnp.float32)
    K = fc_w.shape[-1]
    Kp = ((K + 127) // 128) * 128
    fwT = jnp.zeros((Kp, F), jnp.float32).at[:K, :].set(fc_w.T)
    fbc = jnp.zeros((Kp, 1), jnp.float32).at[:K, 0].set(fc_b)

    # Validity mask over padded positions: interior pixels only.
    hp_i = jnp.arange(Hp)
    wp_i = jnp.arange(Wp)
    v2d = ((hp_i[:, None] >= 1) & (hp_i[:, None] <= h) &
           (wp_i[None, :] >= 1) & (wp_i[None, :] <= w)).astype(jnp.float32)
    mask_row = jnp.tile(v2d.reshape(1, Hp * Wp), (1, n_crops))   # (1, Lout)

    out = fused_forward(xflat, w9, bc, mask_row, fwT, fbc,
                        Wp=Wp, Lout=Lout,
                        inv_count=1.0 / float(n_crops * h * w))  # (b, Kp, 1)
    return out[:, :K, 0]                                         # (b, K)


def make_params(key, c_in, c_feat, n_classes):
    k1, k2, k3, k4 = jax.random.split(key, 4)
    return {
        "conv_w": 0.1 * jax.random.normal(k1, (3, 3, c_in, c_feat), jnp.float32),
        "conv_b": 0.1 * jax.random.normal(k2, (c_feat,), jnp.float32),
        "fc_w": 0.1 * jax.random.normal(k3, (c_feat, n_classes), jnp.float32),
        "fc_b": 0.1 * jax.random.normal(k4, (n_classes,), jnp.float32),
    }


def reference_forward(x, params, crop):
    """Pure-JAX reference for validation."""
    if crop > 1:
        b, n_crops, c, h, w = x.shape
        x = x.reshape(-1, c, h, w)
    else:
        b, n_crops = x.shape[0], 1
    x = x.astype(jnp.float32)
    y = lax.conv_general_dilated(
        x, params["conv_w"], window_strides=(1, 1), padding="SAME",
        dimension_numbers=("NCHW", "HWIO", "NCHW"),
    ) + params["conv_b"][None, :, None, None]
    y = jnp.maximum(y, 0.0)
    y = jnp.mean(y, axis=(2, 3))                      # (N, F)
    logits = y @ params["fc_w"] + params["fc_b"]      # (N, K)
    if crop > 1:
        logits = logits.reshape(b, n_crops, -1).mean(axis=1)
    return logits


if __name__ == "__main__":
    key = jax.random.PRNGKey(0)
    B, N_CROPS, C, H, W = 2, 3, 4, 16, 16
    F, K = 16, 10                                     # hidden channels, classes

    kx, kp = jax.random.split(key)
    x = jax.random.normal(kx, (B, N_CROPS, C, H, W), jnp.float32)
    params = make_params(kp, C, F, K)

    # crop > 1 path (crops folded into batch, logits averaged over crops)
    out = jax.jit(lambda xx: model_forward(xx, params, crop=N_CROPS))(x)
    out = jax.block_until_ready(out)
    ref = reference_forward(x, params, crop=N_CROPS)
    assert out.shape == (B, K), out.shape
    assert jnp.allclose(out, ref, atol=1e-4, rtol=1e-3), (
        float(jnp.max(jnp.abs(out - ref)))
    )

    # crop == 1 path (plain forward)
    x1 = x[:, 0]                                      # (B, C, H, W)
    out1 = jax.jit(lambda xx: model_forward(xx, params, crop=1))(x1)
    out1 = jax.block_until_ready(out1)
    ref1 = reference_forward(x1, params, crop=1)
    assert out1.shape == (B, K), out1.shape
    assert jnp.allclose(out1, ref1, atol=1e-4, rtol=1e-3), (
        float(jnp.max(jnp.abs(out1 - ref1)))
    )

    print("KERNEL_OK")
</pallas_src>

<mosaic_0001>
module attributes {stable_mosaic.version = 11 : i64} {
  func.func @_fused_kernel(%arg0: i32, %arg1: memref<1x4x1010xf32, #tpu.memory_space<vmem>>, %arg2: memref<9x16x4xf32, #tpu.memory_space<vmem>>, %arg3: memref<16x1xf32, #tpu.memory_space<vmem>>, %arg4: memref<1x972xf32, #tpu.memory_space<vmem>>, %arg5: memref<128x16xf32, #tpu.memory_space<vmem>>, %arg6: memref<128x1xf32, #tpu.memory_space<vmem>>, %arg7: memref<1x128x1xf32, #tpu.memory_space<vmem>>) attributes {dimension_semantics = [#tpu.dimension_semantics<parallel>], iteration_bounds = array<i64: 2>, scalar_prefetch = 0 : i64, scratch_operands = 0 : i64, tpu.core_type = #tpu.core_type<tc>, window_params = [{transform_indices = @transform_0, window_bounds = array<i64: 1, 4, 1010>}, {pipeline_mode = #tpu.pipeline_mode<synchronous>, transform_indices = @transform_1, window_bounds = array<i64: 9, 16, 4>}, {pipeline_mode = #tpu.pipeline_mode<synchronous>, transform_indices = @transform_2, window_bounds = array<i64: 16, 1>}, {pipeline_mode = #tpu.pipeline_mode<synchronous>, transform_indices = @transform_3, window_bounds = array<i64: 1, 972>}, {pipeline_mode = #tpu.pipeline_mode<synchronous>, transform_indices = @transform_4, window_bounds = array<i64: 128, 16>}, {pipeline_mode = #tpu.pipeline_mode<synchronous>, transform_indices = @transform_5, window_bounds = array<i64: 128, 1>}, {transform_indices = @transform_6, window_bounds = array<i64: 1, 128, 1>}]} {
    %c0 = arith.constant 0 : index
    %c0_0 = arith.constant 0 : index
    %c0_1 = arith.constant 0 : index
    %0 = vector.load %arg1[%c0, %c0_0, %c0_1] : memref<1x4x1010xf32, #tpu.memory_space<vmem>>, vector<1x4x972xf32>
    %1 = vector.shape_cast %0 : vector<1x4x972xf32> to vector<4x972xf32>
    %c0_2 = arith.constant 0 : index
    %c0_3 = arith.constant 0 : index
    %c0_4 = arith.constant 0 : index
    %2 = vector.load %arg2[%c0_2, %c0_3, %c0_4] : memref<9x16x4xf32, #tpu.memory_space<vmem>>, vector<1x16x4xf32>
    %3 = vector.shape_cast %2 : vector<1x16x4xf32> to vector<16x4xf32>
    %cst = arith.constant dense<0.000000e+00> : vector<16x972xf32>
    %4 = tpu.matmul %3, %1, %cst {dimension_numbers = #tpu.dot_dimension_numbers<[1], [0], [0], [1], [0, 0, 1, 1], [], []>} : vector<16x4xf32>, vector<4x972xf32>, vector<16x972xf32> -> vector<16x972xf32>
    %c0_5 = arith.constant 0 : index
    %c0_6 = arith.constant 0 : index
    %c1 = arith.constant 1 : index
    %5 = vector.load %arg1[%c0_5, %c0_6, %c1] : memref<1x4x1010xf32, #tpu.memory_space<vmem>>, vector<1x4x972xf32>
    %6 = vector.shape_cast %5 : vector<1x4x972xf32> to vector<4x972xf32>
    %c1_7 = arith.constant 1 : index
    %c0_8 = arith.constant 0 : index
    %c0_9 = arith.constant 0 : index
    %7 = vector.load %arg2[%c1_7, %c0_8, %c0_9] : memref<9x16x4xf32, #tpu.memory_space<vmem>>, vector<1x16x4xf32>
    %8 = vector.shape_cast %7 : vector<1x16x4xf32> to vector<16x4xf32>
    %cst_10 = arith.constant dense<0.000000e+00> : vector<16x972xf32>
    %9 = tpu.matmul %8, %6, %cst_10 {dimension_numbers = #tpu.dot_dimension_numbers<[1], [0], [0], [1], [0, 0, 1, 1], [], []>} : vector<16x4xf32>, vector<4x972xf32>, vector<16x972xf32> -> vector<16x972xf32>
    %10 = arith.addf %4, %9 : vector<16x972xf32>
    %c0_11 = arith.constant 0 : index
    %c0_12 = arith.constant 0 : index
    %c2 = arith.constant 2 : index
    %11 = vector.load %arg1[%c0_11, %c0_12, %c2] : memref<1x4x1010xf32, #tpu.memory_space<vmem>>, vector<1x4x972xf32>
    %12 = vector.shape_cast %11 : vector<1x4x972xf32> to vector<4x972xf32>
    %c2_13 = arith.constant 2 : index
    %c0_14 = arith.constant 0 : index
    %c0_15 = arith.constant 0 : index
    %13 = vector.load %arg2[%c2_13, %c0_14, %c0_15] : memref<9x16x4xf32, #tpu.memory_space<vmem>>, vector<1x16x4xf32>
    %14 = vector.shape_cast %13 : vector<1x16x4xf32> to vector<16x4xf32>
    %cst_16 = arith.constant dense<0.000000e+00> : vector<16x972xf32>
    %15 = tpu.matmul %14, %12, %cst_16 {dimension_numbers = #tpu.dot_dimension_numbers<[1], [0], [0], [1], [0, 0, 1, 1], [], []>} : vector<16x4xf32>, vector<4x972xf32>, vector<16x972xf32> -> vector<16x972xf32>
    %16 = arith.addf %10, %15 : vector<16x972xf32>
    %c0_17 = arith.constant 0 : index
    %c0_18 = arith.constant 0 : index
    %c18 = arith.constant 18 : index
    %17 = vector.load %arg1[%c0_17, %c0_18, %c18] : memref<1x4x1010xf32, #tpu.memory_space<vmem>>, vector<1x4x972xf32>
    %18 = vector.shape_cast %17 : vector<1x4x972xf32> to vector<4x972xf32>
    %c3 = arith.constant 3 : index
    %c0_19 = arith.constant 0 : index
    %c0_20 = arith.constant 0 : index
    %19 = vector.load %arg2[%c3, %c0_19, %c0_20] : memref<9x16x4xf32, #tpu.memory_space<vmem>>, vector<1x16x4xf32>
    %20 = vector.shape_cast %19 : vector<1x16x4xf32> to vector<16x4xf32>
    %cst_21 = arith.constant dense<0.000000e+00> : vector<16x972xf32>
    %21 = tpu.matmul %20, %18, %cst_21 {dimension_numbers = #tpu.dot_dimension_numbers<[1], [0], [0], [1], [0, 0, 1, 1], [], []>} : vector<16x4xf32>, vector<4x972xf32>, vector<16x972xf32> -> vector<16x972xf32>
    %22 = arith.addf %16, %21 : vector<16x972xf32>
    %c0_22 = arith.constant 0 : index
    %c0_23 = arith.constant 0 : index
    %c19 = arith.constant 19 : index
    %23 = vector.load %arg1[%c0_22, %c0_23, %c19] : memref<1x4x1010xf32, #tpu.memory_space<vmem>>, vector<1x4x972xf32>
    %24 = vector.shape_cast %23 : vector<1x4x972xf32> to vector<4x972xf32>
    %c4 = arith.constant 4 : index
    %c0_24 = arith.constant 0 : index
    %c0_25 = arith.constant 0 : index
    %25 = vector.load %arg2[%c4, %c0_24, %c0_25] : memref<9x16x4xf32, #tpu.memory_space<vmem>>, vector<1x16x4xf32>
    %26 = vector.shape_cast %25 : vector<1x16x4xf32> to vector<16x4xf32>
    %cst_26 = arith.constant dense<0.000000e+00> : vector<16x972xf32>
    %27 = tpu.matmul %26, %24, %cst_26 {dimension_numbers = #tpu.dot_dimension_numbers<[1], [0], [0], [1], [0, 0, 1, 1], [], []>} : vector<16x4xf32>, vector<4x972xf32>, vector<16x972xf32> -> vector<16x972xf32>
    %28 = arith.addf %22, %27 : vector<16x972xf32>
    %c0_27 = arith.constant 0 : index
    %c0_28 = arith.constant 0 : index
    %c20 = arith.constant 20 : index
    %29 = vector.load %arg1[%c0_27, %c0_28, %c20] : memref<1x4x1010xf32, #tpu.memory_space<vmem>>, vector<1x4x972xf32>
    %30 = vector.shape_cast %29 : vector<1x4x972xf32> to vector<4x972xf32>
    %c5 = arith.constant 5 : index
    %c0_29 = arith.constant 0 : index
    %c0_30 = arith.constant 0 : index
    %31 = vector.load %arg2[%c5, %c0_29, %c0_30] : memref<9x16x4xf32, #tpu.memory_space<vmem>>, vector<1x16x4xf32>
    %32 = vector.shape_cast %31 : vector<1x16x4xf32> to vector<16x4xf32>
    %cst_31 = arith.constant dense<0.000000e+00> : vector<16x972xf32>
    %33 = tpu.matmul %32, %30, %cst_31 {dimension_numbers = #tpu.dot_dimension_numbers<[1], [0], [0], [1], [0, 0, 1, 1], [], []>} : vector<16x4xf32>, vector<4x972xf32>, vector<16x972xf32> -> vector<16x972xf32>
    %34 = arith.addf %28, %33 : vector<16x972xf32>
    %c0_32 = arith.constant 0 : index
    %c0_33 = arith.constant 0 : index
    %c36 = arith.constant 36 : index
    %35 = vector.load %arg1[%c0_32, %c0_33, %c36] : memref<1x4x1010xf32, #tpu.memory_space<vmem>>, vector<1x4x972xf32>
    %36 = vector.shape_cast %35 : vector<1x4x972xf32> to vector<4x972xf32>
    %c6 = arith.constant 6 : index
    %c0_34 = arith.constant 0 : index
    %c0_35 = arith.constant 0 : index
    %37 = vector.load %arg2[%c6, %c0_34, %c0_35] : memref<9x16x4xf32, #tpu.memory_space<vmem>>, vector<1x16x4xf32>
    %38 = vector.shape_cast %37 : vector<1x16x4xf32> to vector<16x4xf32>
    %cst_36 = arith.constant dense<0.000000e+00> : vector<16x972xf32>
    %39 = tpu.matmul %38, %36, %cst_36 {dimension_numbers = #tpu.dot_dimension_numbers<[1], [0], [0], [1], [0, 0, 1, 1], [], []>} : vector<16x4xf32>, vector<4x972xf32>, vector<16x972xf32> -> vector<16x972xf32>
    %40 = arith.addf %34, %39 : vector<16x972xf32>
    %c0_37 = arith.constant 0 : index
    %c0_38 = arith.constant 0 : index
    %c37 = arith.constant 37 : index
    %41 = vector.load %arg1[%c0_37, %c0_38, %c37] : memref<1x4x1010xf32, #tpu.memory_space<vmem>>, vector<1x4x972xf32>
    %42 = vector.shape_cast %41 : vector<1x4x972xf32> to vector<4x972xf32>
    %c7 = arith.constant 7 : index
    %c0_39 = arith.constant 0 : index
    %c0_40 = arith.constant 0 : index
    %43 = vector.load %arg2[%c7, %c0_39, %c0_40] : memref<9x16x4xf32, #tpu.memory_space<vmem>>, vector<1x16x4xf32>
    %44 = vector.shape_cast %43 : vector<1x16x4xf32> to vector<16x4xf32>
    %cst_41 = arith.constant dense<0.000000e+00> : vector<16x972xf32>
    %45 = tpu.matmul %44, %42, %cst_41 {dimension_numbers = #tpu.dot_dimension_numbers<[1], [0], [0], [1], [0, 0, 1, 1], [], []>} : vector<16x4xf32>, vector<4x972xf32>, vector<16x972xf32> -> vector<16x972xf32>
    %46 = arith.addf %40, %45 : vector<16x972xf32>
    %c0_42 = arith.constant 0 : index
    %c0_43 = arith.constant 0 : index
    %c38 = arith.constant 38 : index
    %47 = vector.load %arg1[%c0_42, %c0_43, %c38] : memref<1x4x1010xf32, #tpu.memory_space<vmem>>, vector<1x4x972xf32>
    %48 = vector.shape_cast %47 : vector<1x4x972xf32> to vector<4x972xf32>
    %c8 = arith.constant 8 : index
    %c0_44 = arith.constant 0 : index
    %c0_45 = arith.constant 0 : index
    %49 = vector.load %arg2[%c8, %c0_44, %c0_45] : memref<9x16x4xf32, #tpu.memory_space<vmem>>, vector<1x16x4xf32>
    %50 = vector.shape_cast %49 : vector<1x16x4xf32> to vector<16x4xf32>
    %cst_46 = arith.constant dense<0.000000e+00> : vector<16x972xf32>
    %51 = tpu.matmul %50, %48, %cst_46 {dimension_numbers = #tpu.dot_dimension_numbers<[1], [0], [0], [1], [0, 0, 1, 1], [], []>} : vector<16x4xf32>, vector<4x972xf32>, vector<16x972xf32> -> vector<16x972xf32>
    %52 = arith.addf %46, %51 : vector<16x972xf32>
    %c0_47 = arith.constant 0 : index
    %c0_48 = arith.constant 0 : index
    %53 = vector.load %arg3[%c0_47, %c0_48] : memref<16x1xf32, #tpu.memory_space<vmem>>, vector<16x1xf32>
    %54 = vector.broadcast %53 : vector<16x1xf32> to vector<16x972xf32>
    %55 = arith.addf %52, %54 : vector<16x972xf32>
    %cst_49 = arith.constant 0.000000e+00 : f32
    %56 = vector.broadcast %cst_49 : f32 to vector<16x972xf32>
    %57 = arith.maximumf %55, %56 : vector<16x972xf32>
    %c0_50 = arith.constant 0 : index
    %c0_51 = arith.constant 0 : index
    %58 = vector.load %arg4[%c0_50, %c0_51] : memref<1x972xf32, #tpu.memory_space<vmem>>, vector<1x972xf32>
    %59 = vector.broadcast %58 : vector<1x972xf32> to vector<16x972xf32>
    %60 = arith.mulf %57, %59 : vector<16x972xf32>
    %cst_52 = arith.constant dense<0.000000e+00> : vector<16xf32>
    %61 = vector.multi_reduction <add>, %60, %cst_52 [1] : vector<16x972xf32> to vector<16xf32>
    %62 = vector.shape_cast %61 : vector<16xf32> to vector<16x1xf32>
    %cst_53 = arith.constant 0.00130208337 : f32
    %63 = vector.broadcast %cst_53 : f32 to vector<16x1xf32>
    %64 = arith.mulf %62, %63 : vector<16x1xf32>
    %c0_54 = arith.constant 0 : index
    %c0_55 = arith.constant 0 : index
    %65 = vector.load %arg5[%c0_54, %c0_55] : memref<128x16xf32, #tpu.memory_space<vmem>>, vector<128x16xf32>
    %cst_56 = arith.constant dense<0.000000e+00> : vector<128x1xf32>
    %66 = tpu.matmul %65, %64, %cst_56 {dimension_numbers = #tpu.dot_dimension_numbers<[1], [0], [0], [1], [0, 0, 1, 1], [], []>} : vector<128x16xf32>, vector<16x1xf32>, vector<128x1xf32> -> vector<128x1xf32>
    %c0_57 = arith.constant 0 : index
    %c0_58 = arith.constant 0 : index
    %67 = vector.load %arg6[%c0_57, %c0_58] : memref<128x1xf32, #tpu.memory_space<vmem>>, vector<128x1xf32>
    %68 = arith.addf %66, %67 : vector<128x1xf32>
    %c0_59 = arith.constant 0 : index
    %c0_60 = arith.constant 0 : index
    %c0_61 = arith.constant 0 : index
    %69 = vector.load %arg7[%c0_59, %c0_60, %c0_61] : memref<1x128x1xf32, #tpu.memory_space<vmem>>, vector<1x128x1xf32>
    %70 = vector.shape_cast %69 : vector<1x128x1xf32> to vector<128x1xf32>
    %71 = vector.shape_cast %68 : vector<128x1xf32> to vector<1x128x1xf32>
    tpu.vector_store %arg7[%c0_59, %c0_60, %c0_61], %71 {strides = array<i32>} : memref<1x128x1xf32, #tpu.memory_space<vmem>>, vector<1x128x1xf32>,
    return
  }
  func.func @transform_0(%arg0: i32) -> (i32, i32, i32) {
    %c0_i32 = arith.constant 0 : i32
    %c0_i32_0 = arith.constant 0 : i32
    %c0_i32_1 = arith.constant 0 : i32
    return %arg0, %c0_i32, %c0_i32_0 : i32, i32, i32
  }
  func.func @transform_1(%arg0: i32) -> (i32, i32, i32) {
    %c0_i32 = arith.constant 0 : i32
    %c0_i32_0 = arith.constant 0 : i32
    %c0_i32_1 = arith.constant 0 : i32
    %c0_i32_2 = arith.constant 0 : i32
    return %c0_i32, %c0_i32_0, %c0_i32_1 : i32, i32, i32
  }
  func.func @transform_2(%arg0: i32) -> (i32, i32) {
    %c0_i32 = arith.constant 0 : i32
    %c0_i32_0 = arith.constant 0 : i32
    %c0_i32_1 = arith.constant 0 : i32
    return %c0_i32, %c0_i32_0 : i32, i32
  }
  func.func @transform_3(%arg0: i32) -> (i32, i32) {
    %c0_i32 = arith.constant 0 : i32
    %c0_i32_0 = arith.constant 0 : i32
    %c0_i32_1 = arith.constant 0 : i32
    return %c0_i32, %c0_i32_0 : i32, i32
  }
  func.func @transform_4(%arg0: i32) -> (i32, i32) {
    %c0_i32 = arith.constant 0 : i32
    %c0_i32_0 = arith.constant 0 : i32
    %c0_i32_1 = arith.constant 0 : i32
    return %c0_i32, %c0_i32_0 : i32, i32
  }
  func.func @transform_5(%arg0: i32) -> (i32, i32) {
    %c0_i32 = arith.constant 0 : i32
    %c0_i32_0 = arith.constant 0 : i32
    %c0_i32_1 = arith.constant 0 : i32
    return %c0_i32, %c0_i32_0 : i32, i32
  }
  func.func @transform_6(%arg0: i32) -> (i32, i32, i32) {
    %c0_i32 = arith.constant 0 : i32
    %c0_i32_0 = arith.constant 0 : i32
    %c0_i32_1 = arith.constant 0 : i32
    return %arg0, %c0_i32, %c0_i32_0 : i32, i32, i32
  }
}

</mosaic_0001>

<llo_original>
// kernel: _lambda_.1
$region0: #{_lambda_.1}
  #allocation0 [shape = 'u32[]', space=smem, size = 0x4, offset = 0x4, fixed_abs, tag = 'smem constant byte address 0x4 - core index']
  #allocation1 [shape = 'u32[144,128]{1,0:T(1,128)}', space=vmem, size = 0x12000, scoped, tag = 'internal scratch']
  %s0 = inlined_call_operand.vmem [shape: f32[2,4,1010], index: 0, kind: input, shape index: {}]
  %s1 = inlined_call_operand.vmem [shape: f32[9,16,4], index: 1, kind: input, shape index: {}]
  %s2 = inlined_call_operand.vmem [shape: f32[16,1], index: 2, kind: input, shape index: {}]
  %s3 = inlined_call_operand.vmem [shape: f32[1,972], index: 3, kind: input, shape index: {}]
  %s4 = inlined_call_operand.vmem [shape: f32[128,16], index: 4, kind: input, shape index: {}]
  %s5 = inlined_call_operand.vmem [shape: f32[128,1], index: 5, kind: input, shape index: {}]
  %s6 = inlined_call_operand.vmem [shape: f32[2,128,1], index: 6, kind: output, shape index: {}]
  %s7 = sld [smem:[#allocation0]]
  $region57: #{_lambda_.1} parent=0
    _
  %s9 = ssub.s32 1, %s7
  %s10 = scalar_select 0, %s9, %s7
  loop: start=0, step=1, limit=4
  $region2: #{_lambda_.1} parent=0 // loop_pre_header
    _
  $region3: #{_lambda_.1} parent=0 // loop_header
    %s12 = sphi 0, %s16
    %p13 = scmp.ge.s32.totalorder %s12, 4
    %s22 = sphi 0, %s24
    %s25 = sphi 0, %s22
    %s26 = sphi 0, %s25
    %s42 = sphi 0, %s26
    %s46 = sphi 0, %s46
    %s48 = sphi 0, %s46
    %s49 = sphi 0, %s48
    %s63 = sphi 0, %s49
    %s67 = sphi 0, %s67
    %s69 = sphi 0, %s67
    %s70 = sphi 0, %s69
    %s84 = sphi 0, %s70
    %s88 = sphi 0, %s88
    %s90 = sphi 0, %s88
    %s91 = sphi 0, %s90
    %s105 = sphi 0, %s91
    %s109 = sphi 0, %s109
    %s111 = sphi 0, %s109
    %s112 = sphi 0, %s111
    %s126 = sphi 0, %s112
    %s130 = sphi 0, %s130
    %s132 = sphi 0, %s130
    %s133 = sphi 0, %s132
    %s147 = sphi 0, %s133
    %s153 = sphi 0, %s155
    %s156 = sphi 0, %s153
    %s157 = sphi 0, %s156
    %s173 = sphi 0, %s157
  $region4: #{_lambda_.1} parent=0 // loop_header_branch
    %15 = sbr.rel (%p13) target = $region8
  $region5: #{_lambda_.1} parent=0 // loop_body
    %s17 = ssub.s32 %s12, 1
    %s18 = ssub.s32 %s12, 2
    %s19 = sadd.s32 %s12, 1
    %s20 = ssub.s32 %s12, %s19
    %p21 = scmp.eq.s32.totalorder %s20, 0
    %s23 = sadd.s32 %s22, 1
    %s24 = scalar_select %p21, %s22, %s23
    %p27 = pneg %p21
    %p28 = scmp.eq.s32.totalorder %s12, 1
    %p29 = por %p27, %p28
    %p30 = scmp.ne.s32.totalorder %s22, %s25
    %p31 = scmp.eq.s32.totalorder %s12, 0
    %p32 = por %p30, %p31
    %p33 = scmp.ne.s32.totalorder %s22, %s25
    %p34 = scmp.eq.s32.totalorder %s17, 1
    %p35 = por %p33, %p34
    %p36 = scmp.ne.s32.totalorder %s25, %s26
    %p37 = scmp.eq.s32.totalorder %s17, 0
    %p38 = por %p36, %p37
    %p39 = scmp.ne.s32.totalorder %s25, %s26
    %p40 = scmp.eq.s32.totalorder %s18, 1
    %p41 = por %p39, %p40
    %p43 = scmp.ne.s32.totalorder %s26, %s42
    %p44 = scmp.eq.s32.totalorder %s18, 0
    %p45 = por %p43, %p44
    %s47 = sadd.s32 %s46, 1
    %p50 = scmp.eq.s32.totalorder %s12, 1
    %p51 = scmp.ne.s32.totalorder %s46, %s48
    %p52 = scmp.eq.s32.totalorder %s12, 0
    %p53 = por %p51, %p52
    %p54 = scmp.ne.s32.totalorder %s46, %s48
    %p55 = scmp.eq.s32.totalorder %s17, 1
    %p56 = por %p54, %p55
    %p57 = scmp.ne.s32.totalorder %s48, %s49
    %p58 = scmp.eq.s32.totalorder %s17, 0
    %p59 = por %p57, %p58
    %p60 = scmp.ne.s32.totalorder %s48, %s49
    %p61 = scmp.eq.s32.totalorder %s18, 1
    %p62 = por %p60, %p61
    %p64 = scmp.ne.s32.totalorder %s49, %s63
    %p65 = scmp.eq.s32.totalorder %s18, 0
    %p66 = por %p64, %p65
    %s68 = sadd.s32 %s67, 1
    %p71 = scmp.eq.s32.totalorder %s12, 1
    %p72 = scmp.ne.s32.totalorder %s67, %s69
    %p73 = scmp.eq.s32.totalorder %s12, 0
    %p74 = por %p72, %p73
    %p75 = scmp.ne.s32.totalorder %s67, %s69
    %p76 = scmp.eq.s32.totalorder %s17, 1
    %p77 = por %p75, %p76
    %p78 = scmp.ne.s32.totalorder %s69, %s70
    %p79 = scmp.eq.s32.totalorder %s17, 0
    %p80 = por %p78, %p79
    %p81 = scmp.ne.s32.totalorder %s69, %s70
    %p82 = scmp.eq.s32.totalorder %s18, 1
    %p83 = por %p81, %p82
    %p85 = scmp.ne.s32.totalorder %s70, %s84
    %p86 = scmp.eq.s32.totalorder %s18, 0
    %p87 = por %p85, %p86
    %s89 = sadd.s32 %s88, 1
    %p92 = scmp.eq.s32.totalorder %s12, 1
    %p93 = scmp.ne.s32.totalorder %s88, %s90
    %p94 = scmp.eq.s32.totalorder %s12, 0
    %p95 = por %p93, %p94
    %p96 = scmp.ne.s32.totalorder %s88, %s90
    %p97 = scmp.eq.s32.totalorder %s17, 1
    %p98 = por %p96, %p97
    %p99 = scmp.ne.s32.totalorder %s90, %s91
    %p100 = scmp.eq.s32.totalorder %s17, 0
    %p101 = por %p99, %p100
    %p102 = scmp.ne.s32.totalorder %s90, %s91
    %p103 = scmp.eq.s32.totalorder %s18, 1
    %p104 = por %p102, %p103
    %p106 = scmp.ne.s32.totalorder %s91, %s105
    %p107 = scmp.eq.s32.totalorder %s18, 0
    %p108 = por %p106, %p107
    %s110 = sadd.s32 %s109, 1
    %p113 = scmp.eq.s32.totalorder %s12, 1
    %p114 = scmp.ne.s32.totalorder %s109, %s111
    %p115 = scmp.eq.s32.totalorder %s12, 0
    %p116 = por %p114, %p115
    %p117 = scmp.ne.s32.totalorder %s109, %s111
    %p118 = scmp.eq.s32.totalorder %s17, 1
    %p119 = por %p117, %p118
    %p120 = scmp.ne.s32.totalorder %s111, %s112
    %p121 = scmp.eq.s32.totalorder %s17, 0
    %p122 = por %p120, %p121
    %p123 = scmp.ne.s32.totalorder %s111, %s112
    %p124 = scmp.eq.s32.totalorder %s18, 1
    %p125 = por %p123, %p124
    %p127 = scmp.ne.s32.totalorder %s112, %s126
    %p128 = scmp.eq.s32.totalorder %s18, 0
    %p129 = por %p127, %p128
    %s131 = sadd.s32 %s130, 1
    %p134 = scmp.eq.s32.totalorder %s12, 1
    %p135 = scmp.ne.s32.totalorder %s130, %s132
    %p136 = scmp.eq.s32.totalorder %s12, 0
    %p137 = por %p135, %p136
    %p138 = scmp.ne.s32.totalorder %s130, %s132
    %p139 = scmp.eq.s32.totalorder %s17, 1
    %p140 = por %p138, %p139
    %p141 = scmp.ne.s32.totalorder %s132, %s133
    %p142 = scmp.eq.s32.totalorder %s17, 0
    %p143 = por %p141, %p142
    %p144 = scmp.ne.s32.totalorder %s132, %s133
    %p145 = scmp.eq.s32.totalorder %s18, 1
    %p146 = por %p144, %p145
    %p148 = scmp.ne.s32.totalorder %s133, %s147
    %p149 = scmp.eq.s32.totalorder %s18, 0
    %p150 = por %p148, %p149
    %s151 = ssub.s32 %s12, %s19
    %p152 = scmp.eq.s32.totalorder %s151, 0
    %s154 = sadd.s32 %s153, 1
    %s155 = scalar_select %p152, %s153, %s154
    %p158 = pneg %p152
    %p159 = scmp.eq.s32.totalorder %s12, 1
    %p160 = por %p158, %p159
    %p161 = scmp.ne.s32.totalorder %s153, %s156
    %p162 = scmp.eq.s32.totalorder %s12, 0
    %p163 = por %p161, %p162
    %p164 = scmp.ne.s32.totalorder %s153, %s156
    %p165 = scmp.eq.s32.totalorder %s17, 1
    %p166 = por %p164, %p165
    %p167 = scmp.ne.s32.totalorder %s156, %s157
    %p168 = scmp.eq.s32.totalorder %s17, 0
    %p169 = por %p167, %p168
    %p170 = scmp.ne.s32.totalorder %s156, %s157
    %p171 = scmp.eq.s32.totalorder %s18, 1
    %p172 = por %p170, %p171
    %p174 = scmp.ne.s32.totalorder %s157, %s173
    %p175 = scmp.eq.s32.totalorder %s18, 0
    %p176 = por %p174, %p175
    %p177 = scmp.le.s32.totalorder 1, %s12
    %p178 = scmp.lt.s32.totalorder %s12, 3
    %p179 = pnand %p177, %p178
    %p180 = pneg %p179
    // Predicated region
    $region9: #{_lambda_.1} parent=5 // pred_check
      _
    $region10: #{_lambda_.1} parent=5 // pred_check_branch
      %182 = sbr.rel (%p179) target = $region12
    $region11: #{_lambda_.1} parent=5 // pred_region
      %s183 = ssub.s32 %s12, 1
      // Predicated region
      $region13: #{_lambda_.1} parent=11 // pred_check
        %p184 = pneg %p59
      $region14: #{_lambda_.1} parent=11 // pred_check_branch
        %186 = sbr.rel (%p184) target = $region16
      $region15: #{_lambda_.1} parent=11 // pred_region
        _
      $region16: #{_lambda_.1} parent=11 // pred_fallthru
        _
      // Predicated region
      $region17: #{_lambda_.1} parent=11 // pred_check
        %p187 = pneg %p80
      $region18: #{_lambda_.1} parent=11 // pred_check_branch
        %189 = sbr.rel (%p187) target = $region20
      $region19: #{_lambda_.1} parent=11 // pred_region
        _
      $region20: #{_lambda_.1} parent=11 // pred_fallthru
        _
      // Predicated region
      $region21: #{_lambda_.1} parent=11 // pred_check
        %p190 = pneg %p101
      $region22: #{_lambda_.1} parent=11 // pred_check_branch
        %192 = sbr.rel (%p190) target = $region24
      $region23: #{_lambda_.1} parent=11 // pred_region
        _
      $region24: #{_lambda_.1} parent=11 // pred_fallthru
        _
      // Predicated region
      $region25: #{_lambda_.1} parent=11 // pred_check
        %p193 = pneg %p122
      $region26: #{_lambda_.1} parent=11 // pred_check_branch
        %195 = sbr.rel (%p193) target = $region28
      $region27: #{_lambda_.1} parent=11 // pred_region
        _
      $region28: #{_lambda_.1} parent=11 // pred_fallthru
        _
      // Predicated region
      $region29: #{_lambda_.1} parent=11 // pred_check
        %p196 = pneg %p143
      $region30: #{_lambda_.1} parent=11 // pred_check_branch
        %198 = sbr.rel (%p196) target = $region32
      $region31: #{_lambda_.1} parent=11 // pred_region
        _
      $region32: #{_lambda_.1} parent=11 // pred_fallthru
        _
    $region12: #{_lambda_.1} parent=5 // pred_fallthru
      _
    %p199 = scmp.lt.s32.totalorder %s12, 2
    // Predicated region
    $region33: #{_lambda_.1} parent=5 // pred_check
      %p200 = pneg %p199
    $region34: #{_lambda_.1} parent=5 // pred_check_branch
      %202 = sbr.rel (%p200) target = $region36
    $region35: #{_lambda_.1} parent=5 // pred_region
      // Predicated region
      $region37: #{_lambda_.1} parent=35 // pred_check
        %p203 = pneg %p32
      $region38: #{_lambda_.1} parent=35 // pred_check_branch
        %205 = sbr.rel (%p203) target = $region40
      $region39: #{_lambda_.1} parent=35 // pred_region
        %p206 = scmp.lt.s32.totalorder %s12, 1
        %s207 = scalar_select %p206, %s12, 1
        %s208 = smul.addr %s207, 8
        %s209 = smul.addr %s208, 4
        %s210 = scalar_lea.vmem %s0, %s209
      $region40: #{_lambda_.1} parent=35 // pred_fallthru
        _
    $region36: #{_lambda_.1} parent=5 // pred_fallthru
      _
    %p211 = scmp.le.s32.totalorder 1, %s12
    %p212 = scmp.lt.s32.totalorder %s12, 3
    %p213 = pnand %p211, %p212
    %p214 = pneg %p213
    // Predicated region
    $region41: #{_lambda_.1} parent=5 // pred_check
      _
    $region42: #{_lambda_.1} parent=5 // pred_check_branch
      %216 = sbr.rel (%p213) target = $region44
    $region43: #{_lambda_.1} parent=5 // pred_region
      %s217 = ssub.s32 %s12, 1
      %p218 = scmp.lt.s32.totalorder %s17, 1
      %s219 = scalar_select %p218, %s17, 1
      %s220 = smul.addr %s219, 8
      %s221 = smul.addr %s220, 4
      %s222 = scalar_lea.vmem %s0, %s221
      %p223 = pneg %p38
      %p224 = pneg %p35
      %p225 = pneg %p59
      %p226 = pneg %p56
      %p227 = pneg %p80
      %p228 = pneg %p77
      %p229 = pneg %p101
      %p230 = pneg %p98
      %p231 = pneg %p122
      %p232 = pneg %p119
      %p233 = pneg %p143
      %p234 = pneg %p140
      %p235 = pneg %p169
      %p236 = pneg %p166
      %p237 = scmp.lt.s32.totalorder %s17, 1
      %s238 = scalar_select %p237, %s17, 1
      %s239 = smul.addr %s238, 16
      %s240 = smul.addr %s239, 8
      %s241 = scalar_lea.vmem %s6, %s240
      %p242 = scmp.lt.s32.totalorder %s17, 1
      %s243 = scalar_select %p242, %s17, 1
      %s244 = smul.addr %s243, 8
      %s245 = smul.addr %s244, 4
      %s246 = scalar_lea.vmem %s0, %s245
      %p247 = scmp.lt.s32.totalorder %s17, 1
      %s248 = scalar_select %p247, %s17, 1
      %s249 = smul.addr %s248, 16
      %s250 = smul.addr %s249, 8
      %s251 = scalar_lea.vmem %s6, %s250
      %v252 = vld [vmem:[%s246] sm:$0xff]
      %v253 = vld [vmem:[%s246 + $0x8] sm:$0xff]
      %v254 = vld [vmem:[%s246 + $0x10] sm:$0xff]
      %v255 = vld [vmem:[%s246 + $0x18] sm:$0xff]
      %v256 = vld [vmem:[%s1] sm:$0xff]
      %v257 = vld [vmem:[%s1 + $0x8] sm:$0xff]
      %s258 = scalar_lea.vmem %s1, 16
      %v259 = vld [vmem:[%s258] sm:$0xff]
      %v260 = vld [vmem:[%s258 + $0x8] sm:$0xff]
      %v265 = vcombine.high %v252, %v252
      %v266 = vcombine.high %v253, %v253
      %v267 = vcombine.high %v254, %v254
      %v268 = vcombine.high %v255, %v255
      %269 = vrot.lane.b32.xlu0 %v252, 127
      %v270 = vpop.permute.xlu0 %269
      %271 = vrot.lane.b32.xlu0 %v265, 127
      %v272 = vpop.permute.xlu0 %271
      %273 = vrot.lane.b32.xlu0 %v253, 127
      %v274 = vpop.permute.xlu0 %273
      %275 = vrot.lane.b32.xlu0 %v266, 127
      %v276 = vpop.permute.xlu0 %275
      %277 = vrot.lane.b32.xlu0 %v254, 127
      %v278 = vpop.permute.xlu0 %277
      %279 = vrot.lane.b32.xlu0 %v267, 127
      %v280 = vpop.permute.xlu0 %279
      %281 = vrot.lane.b32.xlu0 %v255, 127
      %v282 = vpop.permute.xlu0 %281
      %283 = vrot.lane.b32.xlu0 %v268, 127
      %v284 = vpop.permute.xlu0 %283
      %vm285 = vcmask 1039360
      %v286 = vsel %vm285, %v270, %v272
      %v287 = vsel %vm285, %v272, %v274
      %v288 = vsel %vm285, %v274, %v276
      %v289 = vsel %vm285, %v276, %v278
      %v290 = vsel %vm285, %v278, %v280
      %v291 = vsel %vm285, %v280, %v282
      %v292 = vsel %vm285, %v282, %v284
      %vm293 = vcmask 31744
      %v295 = vsel %vm293, %v259, 0
      %v298 = vsel %vm293, %v260, 0
      %vm300 = vcmask 1043456
      %v301 = vsel %vm300, %v286, 0
      %v303 = vsel %vm300, %v287, 0
      %v305 = vsel %vm300, %v288, 0
      %v307 = vsel %vm300, %v289, 0
      %v309 = vsel %vm300, %v290, 0
      %v311 = vsel %vm300, %v291, 0
      %v313 = vsel %vm300, %v292, 0
      %v315 = vsel %vm300, %v284, 0
      %317 = vmatprep.subr.mxu0 0.0
      %318 = vmatpush1.msra.mxu0 0.0
      %319 = vmatprep.subr.mxu0 0.0
      %320 = vmatpush1.msra.mxu0 0.0
      %321 = vmatprep.subr.mxu0 0.0
      %322 = vmatpush1.msra.mxu0 0.0
      %323 = vmatprep.subr.mxu0 0.0
      %324 = vmatpush1.msra.mxu0 0.0
      %325 = vmatprep.subr.mxu0 0.0
      %326 = vmatpush1.msra.mxu0 0.0
      %327 = vmatprep.subr.mxu0 0.0
      %328 = vmatpush1.msra.mxu0 0.0
      %329 = vmatprep.subr.mxu0 0.0
      %330 = vmatpush1.msra.mxu0 0.0
      %331 = vmatprep.subr.mxu0 0.0
      %332 = vmatpush1.msra.mxu0 0.0
      %333 = vmatprep.subr.mxu0 0.0
      %334 = vmatpush1.msra.mxu0 0.0
      %335 = vmatprep.subr.mxu0 0.0
      %336 = vmatpush1.msra.mxu0 0.0
      %337 = vmatprep.subr.mxu0 0.0
      %338 = vmatpush1.msra.mxu0 0.0
      %339 = vmatprep.subr.mxu0 0.0
      %340 = vmatpush1.msra.mxu0 0.0
      %341 = vmatprep.subr.mxu0 0.0
      %342 = vmatpush1.msra.mxu0 0.0
      %343 = vmatprep.subr.mxu0 0.0
      %344 = vmatpush1.msra.mxu0 0.0
      %345 = vmatprep.subr.mxu0 0.0
      %346 = vmatpush1.msra.mxu0 0.0
      %347 = vmatprep.subr.mxu0 %v303
      %348 = vmatpush1.msra.mxu0 %v301
      %349 = vmatprep.subr.mxu0 0.0
      %350 = vmatpush2.msra.mxu0 0.0
      %351 = vmatprep.subr.mxu0 0.0
      %352 = vmatpush2.msra.mxu0 0.0
      %353 = vmatprep.subr.mxu0 0.0
      %354 = vmatpush2.msra.mxu0 0.0
      %355 = vmatprep.subr.mxu0 0.0
      %356 = vmatpush2.msra.mxu0 0.0
      %357 = vmatprep.subr.mxu0 0.0
      %358 = vmatpush2.msra.mxu0 0.0
      %359 = vmatprep.subr.mxu0 0.0
      %360 = vmatpush2.msra.mxu0 0.0
      %361 = vmatprep.subr.mxu0 0.0
      %362 = vmatpush2.msra.mxu0 0.0
      %363 = vmatprep.subr.mxu0 0.0
      %364 = vmatpush2.msra.mxu0 0.0
      %365 = vmatprep.subr.mxu0 0.0
      %366 = vmatpush2.msra.mxu0 0.0
      %367 = vmatprep.subr.mxu0 0.0
      %368 = vmatpush2.msra.mxu0 0.0
      %369 = vmatprep.subr.mxu0 0.0
      %370 = vmatpush2.msra.mxu0 0.0
      %371 = vmatprep.subr.mxu0 0.0
      %372 = vmatpush2.msra.mxu0 0.0
      %373 = vmatprep.subr.mxu0 0.0
      %374 = vmatpush2.msra.mxu0 0.0
      %375 = vmatprep.subr.mxu0 0.0
      %376 = vmatpush2.msra.mxu0 0.0
      %377 = vmatprep.subr.mxu0 0.0
      %378 = vmatpush2.msra.mxu0 0.0
      %379 = vmatprep.subr.mxu0 0.0
      %380 = vmatpush2.msra.mxu0 0.0
      %381 = vmatprep.mubr.f32.mxu0 0.0
      %382 = vmatmul.mubr.f32.gmra.mxu0 %v295
      %v383 = vpop.f32.mrf.mxu0
      %v384 = vadd.f32 0.0, %v383
      %v385 = vpop.f32.mrf.mxu0
      %v386 = vadd.f32 0.0, %v385
      %387 = vmatprep.mubr.f32.mxu0 0.0
      %388 = vmatmul.mubr.f32.gmra.mxu0 %v298
      %v389 = vpop.f32.mrf.mxu0
      %v390 = vadd.f32 0.0, %v389
      %v391 = vpop.f32.mrf.mxu0
      %v392 = vadd.f32 0.0, %v391
      %393 = vdwg.mxu0
      %394 = vmatprep.subr.mxu0 0.0
      %395 = vmatpush1.msra.mxu0 0.0
      %396 = vmatprep.subr.mxu0 0.0
      %397 = vmatpush1.msra.mxu0 0.0
      %398 = vmatprep.subr.mxu0 0.0
      %399 = vmatpush1.msra.mxu0 0.0
      %400 = vmatprep.subr.mxu0 0.0
      %401 = vmatpush1.msra.mxu0 0.0
      %402 = vmatprep.subr.mxu0 0.0
      %403 = vmatpush1.msra.mxu0 0.0
      %404 = vmatprep.subr.mxu0 0.0
      %405 = vmatpush1.msra.mxu0 0.0
      %406 = vmatprep.subr.mxu0 0.0
      %407 = vmatpush1.msra.mxu0 0.0
      %408 = vmatprep.subr.mxu0 0.0
      %409 = vmatpush1.msra.mxu0 0.0
      %410 = vmatprep.subr.mxu0 0.0
      %411 = vmatpush1.msra.mxu0 0.0
      %412 = vmatprep.subr.mxu0 0.0
      %413 = vmatpush1.msra.mxu0 0.0
      %414 = vmatprep.subr.mxu0 0.0
      %415 = vmatpush1.msra.mxu0 0.0
      %416 = vmatprep.subr.mxu0 0.0
      %417 = vmatpush1.msra.mxu0 0.0
      %418 = vmatprep.subr.mxu0 0.0
      %419 = vmatpush1.msra.mxu0 0.0
      %420 = vmatprep.subr.mxu0 0.0
      %421 = vmatpush1.msra.mxu0 0.0
      %422 = vmatprep.subr.mxu0 0.0
      %423 = vmatpush1.msra.mxu0 0.0
      %424 = vmatprep.subr.mxu0 %v307
      %425 = vmatpush1.msra.mxu0 %v305
      %426 = vmatprep.subr.mxu0 0.0
      %427 = vmatpush2.msra.mxu0 0.0
      %428 = vmatprep.subr.mxu0 0.0
      %429 = vmatpush2.msra.mxu0 0.0
      %430 = vmatprep.subr.mxu0 0.0
      %431 = vmatpush2.msra.mxu0 0.0
      %432 = vmatprep.subr.mxu0 0.0
      %433 = vmatpush2.msra.mxu0 0.0
      %434 = vmatprep.subr.mxu0 0.0
      %435 = vmatpush2.msra.mxu0 0.0
      %436 = vmatprep.subr.mxu0 0.0
      %437 = vmatpush2.msra.mxu0 0.0
      %438 = vmatprep.subr.mxu0 0.0
      %439 = vmatpush2.msra.mxu0 0.0
      %440 = vmatprep.subr.mxu0 0.0
      %441 = vmatpush2.msra.mxu0 0.0
      %442 = vmatprep.subr.mxu0 0.0
      %443 = vmatpush2.msra.mxu0 0.0
      %444 = vmatprep.subr.mxu0 0.0
      %445 = vmatpush2.msra.mxu0 0.0
      %446 = vmatprep.subr.mxu0 0.0
      %447 = vmatpush2.msra.mxu0 0.0
      %448 = vmatprep.subr.mxu0 0.0
      %449 = vmatpush2.msra.mxu0 0.0
      %450 = vmatprep.subr.mxu0 0.0
      %451 = vmatpush2.msra.mxu0 0.0
      %452 = vmatprep.subr.mxu0 0.0
      %453 = vmatpush2.msra.mxu0 0.0
      %454 = vmatprep.subr.mxu0 0.0
      %455 = vmatpush2.msra.mxu0 0.0
      %456 = vmatprep.subr.mxu0 0.0
      %457 = vmatpush2.msra.mxu0 0.0
      %458 = vmatprep.mubr.f32.mxu0 0.0
      %459 = vmatmul.mubr.f32.gmra.mxu0 %v295
      %v460 = vpop.f32.mrf.mxu0
      %v461 = vadd.f32 0.0, %v460
      %v462 = vpop.f32.mrf.mxu0
      %v463 = vadd.f32 0.0, %v462
      %464 = vmatprep.mubr.f32.mxu0 0.0
      %465 = vmatmul.mubr.f32.gmra.mxu0 %v298
      %v466 = vpop.f32.mrf.mxu0
      %v467 = vadd.f32 0.0, %v466
      %v468 = vpop.f32.mrf.mxu0
      %v469 = vadd.f32 0.0, %v468
      %470 = vdwg.mxu0
      %471 = vmatprep.subr.mxu0 0.0
      %472 = vmatpush1.msra.mxu0 0.0
      %473 = vmatprep.subr.mxu0 0.0
      %474 = vmatpush1.msra.mxu0 0.0
      %475 = vmatprep.subr.mxu0 0.0
      %476 = vmatpush1.msra.mxu0 0.0
      %477 = vmatprep.subr.mxu0 0.0
      %478 = vmatpush1.msra.mxu0 0.0
      %479 = vmatprep.subr.mxu0 0.0
      %480 = vmatpush1.msra.mxu0 0.0
      %481 = vmatprep.subr.mxu0 0.0
      %482 = vmatpush1.msra.mxu0 0.0
      %483 = vmatprep.subr.mxu0 0.0
      %484 = vmatpush1.msra.mxu0 0.0
      %485 = vmatprep.subr.mxu0 0.0
      %486 = vmatpush1.msra.mxu0 0.0
      %487 = vmatprep.subr.mxu0 0.0
      %488 = vmatpush1.msra.mxu0 0.0
      %489 = vmatprep.subr.mxu0 0.0
      %490 = vmatpush1.msra.mxu0 0.0
      %491 = vmatprep.subr.mxu0 0.0
      %492 = vmatpush1.msra.mxu0 0.0
      %493 = vmatprep.subr.mxu0 0.0
      %494 = vmatpush1.msra.mxu0 0.0
      %495 = vmatprep.subr.mxu0 0.0
      %496 = vmatpush1.msra.mxu0 0.0
      %497 = vmatprep.subr.mxu0 0.0
      %498 = vmatpush1.msra.mxu0 0.0
      %499 = vmatprep.subr.mxu0 0.0
      %500 = vmatpush1.msra.mxu0 0.0
      %501 = vmatprep.subr.mxu0 %v311
      %502 = vmatpush1.msra.mxu0 %v309
      %503 = vmatprep.subr.mxu0 0.0
      %504 = vmatpush2.msra.mxu0 0.0
      %505 = vmatprep.subr.mxu0 0.0
      %506 = vmatpush2.msra.mxu0 0.0
      %507 = vmatprep.subr.mxu0 0.0
      %508 = vmatpush2.msra.mxu0 0.0
      %509 = vmatprep.subr.mxu0 0.0
      %510 = vmatpush2.msra.mxu0 0.0
      %511 = vmatprep.subr.mxu0 0.0
      %512 = vmatpush2.msra.mxu0 0.0
      %513 = vmatprep.subr.mxu0 0.0
      %514 = vmatpush2.msra.mxu0 0.0
      %515 = vmatprep.subr.mxu0 0.0
      %516 = vmatpush2.msra.mxu0 0.0
      %517 = vmatprep.subr.mxu0 0.0
      %518 = vmatpush2.msra.mxu0 0.0
      %519 = vmatprep.subr.mxu0 0.0
      %520 = vmatpush2.msra.mxu0 0.0
      %521 = vmatprep.subr.mxu0 0.0
      %522 = vmatpush2.msra.mxu0 0.0
      %523 = vmatprep.subr.mxu0 0.0
      %524 = vmatpush2.msra.mxu0 0.0
      %525 = vmatprep.subr.mxu0 0.0
      %526 = vmatpush2.msra.mxu0 0.0
      %527 = vmatprep.subr.mxu0 0.0
      %528 = vmatpush2.msra.mxu0 0.0
      %529 = vmatprep.subr.mxu0 0.0
      %530 = vmatpush2.msra.mxu0 0.0
      %531 = vmatprep.subr.mxu0 0.0
      %532 = vmatpush2.msra.mxu0 0.0
      %533 = vmatprep.subr.mxu0 0.0
      %534 = vmatpush2.msra.mxu0 0.0
      %535 = vmatprep.mubr.f32.mxu0 0.0
      %536 = vmatmul.mubr.f32.gmra.mxu0 %v295
      %v537 = vpop.f32.mrf.mxu0
      %v538 = vadd.f32 0.0, %v537
      %v539 = vpop.f32.mrf.mxu0
      %v540 = vadd.f32 0.0, %v539
      %541 = vmatprep.mubr.f32.mxu0 0.0
      %542 = vmatmul.mubr.f32.gmra.mxu0 %v298
      %v543 = vpop.f32.mrf.mxu0
      %v544 = vadd.f32 0.0, %v543
      %v545 = vpop.f32.mrf.mxu0
      %v546 = vadd.f32 0.0, %v545
      %547 = vdwg.mxu0
      %548 = vmatprep.subr.mxu0 0.0
      %549 = vmatpush1.msra.mxu0 0.0
      %550 = vmatprep.subr.mxu0 0.0
      %551 = vmatpush1.msra.mxu0 0.0
      %552 = vmatprep.subr.mxu0 0.0
      %553 = vmatpush1.msra.mxu0 0.0
      %554 = vmatprep.subr.mxu0 0.0
      %555 = vmatpush1.msra.mxu0 0.0
      %556 = vmatprep.subr.mxu0 0.0
      %557 = vmatpush1.msra.mxu0 0.0
      %558 = vmatprep.subr.mxu0 0.0
      %559 = vmatpush1.msra.mxu0 0.0
      %560 = vmatprep.subr.mxu0 0.0
      %561 = vmatpush1.msra.mxu0 0.0
      %562 = vmatprep.subr.mxu0 0.0
      %563 = vmatpush1.msra.mxu0 0.0
      %564 = vmatprep.subr.mxu0 0.0
      %565 = vmatpush1.msra.mxu0 0.0
      %566 = vmatprep.subr.mxu0 0.0
      %567 = vmatpush1.msra.mxu0 0.0
      %568 = vmatprep.subr.mxu0 0.0
      %569 = vmatpush1.msra.mxu0 0.0
      %570 = vmatprep.subr.mxu0 0.0
      %571 = vmatpush1.msra.mxu0 0.0
      %572 = vmatprep.subr.mxu0 0.0
      %573 = vmatpush1.msra.mxu0 0.0
      %574 = vmatprep.subr.mxu0 0.0
      %575 = vmatpush1.msra.mxu0 0.0
      %576 = vmatprep.subr.mxu0 0.0
      %577 = vmatpush1.msra.mxu0 0.0
      %578 = vmatprep.subr.mxu0 %v315
      %579 = vmatpush1.msra.mxu0 %v313
      %580 = vmatprep.subr.mxu0 0.0
      %581 = vmatpush2.msra.mxu0 0.0
      %582 = vmatprep.subr.mxu0 0.0
      %583 = vmatpush2.msra.mxu0 0.0
      %584 = vmatprep.subr.mxu0 0.0
      %585 = vmatpush2.msra.mxu0 0.0
      %586 = vmatprep.subr.mxu0 0.0
      %587 = vmatpush2.msra.mxu0 0.0
      %588 = vmatprep.subr.mxu0 0.0
      %589 = vmatpush2.msra.mxu0 0.0
      %590 = vmatprep.subr.mxu0 0.0
      %591 = vmatpush2.msra.mxu0 0.0
      %592 = vmatprep.subr.mxu0 0.0
      %593 = vmatpush2.msra.mxu0 0.0
      %594 = vmatprep.subr.mxu0 0.0
      %595 = vmatpush2.msra.mxu0 0.0
      %596 = vmatprep.subr.mxu0 0.0
      %597 = vmatpush2.msra.mxu0 0.0
      %598 = vmatprep.subr.mxu0 0.0
      %599 = vmatpush2.msra.mxu0 0.0
      %600 = vmatprep.subr.mxu0 0.0
      %601 = vmatpush2.msra.mxu0 0.0
      %602 = vmatprep.subr.mxu0 0.0
      %603 = vmatpush2.msra.mxu0 0.0
      %604 = vmatprep.subr.mxu0 0.0
      %605 = vmatpush2.msra.mxu0 0.0
      %606 = vmatprep.subr.mxu0 0.0
      %607 = vmatpush2.msra.mxu0 0.0
      %608 = vmatprep.subr.mxu0 0.0
      %609 = vmatpush2.msra.mxu0 0.0
      %610 = vmatprep.subr.mxu0 0.0
      %611 = vmatpush2.msra.mxu0 0.0
      %612 = vmatprep.mubr.f32.mxu0 0.0
      %613 = vmatmul.mubr.f32.gmra.mxu0 %v295
      %v614 = vpop.f32.mrf.mxu0
      %v615 = vadd.f32 0.0, %v614
      %v616 = vpop.f32.mrf.mxu0
      %v617 = vadd.f32 0.0, %v616
      %618 = vmatprep.mubr.f32.mxu0 0.0
      %619 = vmatmul.mubr.f32.gmra.mxu0 %v298
      %v620 = vpop.f32.mrf.mxu0
      %v621 = vadd.f32 0.0, %v620
      %v622 = vpop.f32.mrf.mxu0
      %v623 = vadd.f32 0.0, %v622
      %624 = vdwg.mxu0
      %v626 = vsel %vm293, %v256, 0
      %v629 = vsel %vm293, %v257, 0
      %v631 = vsel %vm300, %v252, 0
      %v633 = vsel %vm300, %v265, 0
      %v635 = vsel %vm300, %v253, 0
      %v637 = vsel %vm300, %v266, 0
      %v639 = vsel %vm300, %v254, 0
      %v641 = vsel %vm300, %v267, 0
      %v643 = vsel %vm300, %v255, 0
      %v645 = vsel %vm300, %v268, 0
      %647 = vmatprep.subr.mxu0 0.0
      %648 = vmatpush1.msra.mxu0 0.0
      %649 = vmatprep.subr.mxu0 0.0
      %650 = vmatpush1.msra.mxu0 0.0
      %651 = vmatprep.subr.mxu0 0.0
      %652 = vmatpush1.msra.mxu0 0.0
      %653 = vmatprep.subr.mxu0 0.0
      %654 = vmatpush1.msra.mxu0 0.0
      %655 = vmatprep.subr.mxu0 0.0
      %656 = vmatpush1.msra.mxu0 0.0
      %657 = vmatprep.subr.mxu0 0.0
      %658 = vmatpush1.msra.mxu0 0.0
      %659 = vmatprep.subr.mxu0 0.0
      %660 = vmatpush1.msra.mxu0 0.0
      %661 = vmatprep.subr.mxu0 0.0
      %662 = vmatpush1.msra.mxu0 0.0
      %663 = vmatprep.subr.mxu0 0.0
      %664 = vmatpush1.msra.mxu0 0.0
      %665 = vmatprep.subr.mxu0 0.0
      %666 = vmatpush1.msra.mxu0 0.0
      %667 = vmatprep.subr.mxu0 0.0
      %668 = vmatpush1.msra.mxu0 0.0
      %669 = vmatprep.subr.mxu0 0.0
      %670 = vmatpush1.msra.mxu0 0.0
      %671 = vmatprep.subr.mxu0 0.0
      %672 = vmatpush1.msra.mxu0 0.0
      %673 = vmatprep.subr.mxu0 0.0
      %674 = vmatpush1.msra.mxu0 0.0
      %675 = vmatprep.subr.mxu0 0.0
      %676 = vmatpush1.msra.mxu0 0.0
      %677 = vmatprep.subr.mxu0 %v633
      %678 = vmatpush1.msra.mxu0 %v631
      %679 = vmatprep.subr.mxu0 0.0
      %680 = vmatpush2.msra.mxu0 0.0
      %681 = vmatprep.subr.mxu0 0.0
      %682 = vmatpush2.msra.mxu0 0.0
      %683 = vmatprep.subr.mxu0 0.0
      %684 = vmatpush2.msra.mxu0 0.0
      %685 = vmatprep.subr.mxu0 0.0
      %686 = vmatpush2.msra.mxu0 0.0
      %687 = vmatprep.subr.mxu0 0.0
      %688 = vmatpush2.msra.mxu0 0.0
      %689 = vmatprep.subr.mxu0 0.0
      %690 = vmatpush2.msra.mxu0 0.0
      %691 = vmatprep.subr.mxu0 0.0
      %692 = vmatpush2.msra.mxu0 0.0
      %693 = vmatprep.subr.mxu0 0.0
      %694 = vmatpush2.msra.mxu0 0.0
      %695 = vmatprep.subr.mxu0 0.0
      %696 = vmatpush2.msra.mxu0 0.0
      %697 = vmatprep.subr.mxu0 0.0
      %698 = vmatpush2.msra.mxu0 0.0
      %699 = vmatprep.subr.mxu0 0.0
      %700 = vmatpush2.msra.mxu0 0.0
      %701 = vmatprep.subr.mxu0 0.0
      %702 = vmatpush2.msra.mxu0 0.0
      %703 = vmatprep.subr.mxu0 0.0
      %704 = vmatpush2.msra.mxu0 0.0
      %705 = vmatprep.subr.mxu0 0.0
      %706 = vmatpush2.msra.mxu0 0.0
      %707 = vmatprep.subr.mxu0 0.0
      %708 = vmatpush2.msra.mxu0 0.0
      %709 = vmatprep.subr.mxu0 0.0
      %710 = vmatpush2.msra.mxu0 0.0
      %711 = vmatprep.mubr.f32.mxu0 0.0
      %712 = vmatmul.mubr.f32.gmra.mxu0 %v626
      %v713 = vpop.f32.mrf.mxu0
      %v714 = vadd.f32 %v384, %v713
      %v715 = vpop.f32.mrf.mxu0
      %v716 = vadd.f32 %v386, %v715
      %717 = vmatprep.mubr.f32.mxu0 0.0
      %718 = vmatmul.mubr.f32.gmra.mxu0 %v629
      %v719 = vpop.f32.mrf.mxu0
      %v720 = vadd.f32 %v390, %v719
      %v721 = vpop.f32.mrf.mxu0
      %v722 = vadd.f32 %v392, %v721
      %723 = vdwg.mxu0
      %724 = vmatprep.subr.mxu0 0.0
      %725 = vmatpush1.msra.mxu0 0.0
      %726 = vmatprep.subr.mxu0 0.0
      %727 = vmatpush1.msra.mxu0 0.0
      %728 = vmatprep.subr.mxu0 0.0
      %729 = vmatpush1.msra.mxu0 0.0
      %730 = vmatprep.subr.mxu0 0.0
      %731 = vmatpush1.msra.mxu0 0.0
      %732 = vmatprep.subr.mxu0 0.0
      %733 = vmatpush1.msra.mxu0 0.0
      %734 = vmatprep.subr.mxu0 0.0
      %735 = vmatpush1.msra.mxu0 0.0
      %736 = vmatprep.subr.mxu0 0.0
      %737 = vmatpush1.msra.mxu0 0.0
      %738 = vmatprep.subr.mxu0 0.0
      %739 = vmatpush1.msra.mxu0 0.0
      %740 = vmatprep.subr.mxu0 0.0
      %741 = vmatpush1.msra.mxu0 0.0
      %742 = vmatprep.subr.mxu0 0.0
      %743 = vmatpush1.msra.mxu0 0.0
      %744 = vmatprep.subr.mxu0 0.0
      %745 = vmatpush1.msra.mxu0 0.0
      %746 = vmatprep.subr.mxu0 0.0
      %747 = vmatpush1.msra.mxu0 0.0
      %748 = vmatprep.subr.mxu0 0.0
      %749 = vmatpush1.msra.mxu0 0.0
      %750 = vmatprep.subr.mxu0 0.0
      %751 = vmatpush1.msra.mxu0 0.0
      %752 = vmatprep.subr.mxu0 0.0
      %753 = vmatpush1.msra.mxu0 0.0
      %754 = vmatprep.subr.mxu0 %v637
      %755 = vmatpush1.msra.mxu0 %v635
      %756 = vmatprep.subr.mxu0 0.0
      %757 = vmatpush2.msra.mxu0 0.0
      %758 = vmatprep.subr.mxu0 0.0
      %759 = vmatpush2.msra.mxu0 0.0
      %760 = vmatprep.subr.mxu0 0.0
      %761 = vmatpush2.msra.mxu0 0.0
      %762 = vmatprep.subr.mxu0 0.0
      %763 = vmatpush2.msra.mxu0 0.0
      %764 = vmatprep.subr.mxu0 0.0
      %765 = vmatpush2.msra.mxu0 0.0
      %766 = vmatprep.subr.mxu0 0.0
      %767 = vmatpush2.msra.mxu0 0.0
      %768 = vmatprep.subr.mxu0 0.0
      %769 = vmatpush2.msra.mxu0 0.0
      %770 = vmatprep.subr.mxu0 0.0
      %771 = vmatpush2.msra.mxu0 0.0
      %772 = vmatprep.subr.mxu0 0.0
      %773 = vmatpush2.msra.mxu0 0.0
      %774 = vmatprep.subr.mxu0 0.0
      %775 = vmatpush2.msra.mxu0 0.0
      %776 = vmatprep.subr.mxu0 0.0
      %777 = vmatpush2.msra.mxu0 0.0
      %778 = vmatprep.subr.mxu0 0.0
      %779 = vmatpush2.msra.mxu0 0.0
      %780 = vmatprep.subr.mxu0 0.0
      %781 = vmatpush2.msra.mxu0 0.0
      %782 = vmatprep.subr.mxu0 0.0
      %783 = vmatpush2.msra.mxu0 0.0
      %784 = vmatprep.subr.mxu0 0.0
      %785 = vmatpush2.msra.mxu0 0.0
      %786 = vmatprep.subr.mxu0 0.0
      %787 = vmatpush2.msra.mxu0 0.0
      %788 = vmatprep.mubr.f32.mxu0 0.0
      %789 = vmatmul.mubr.f32.gmra.mxu0 %v626
      %v790 = vpop.f32.mrf.mxu0
      %v791 = vadd.f32 %v461, %v790
      %v792 = vpop.f32.mrf.mxu0
      %v793 = vadd.f32 %v463, %v792
      %794 = vmatprep.mubr.f32.mxu0 0.0
      %795 = vmatmul.mubr.f32.gmra.mxu0 %v629
      %v796 = vpop.f32.mrf.mxu0
      %v797 = vadd.f32 %v467, %v796
      %v798 = vpop.f32.mrf.mxu0
      %v799 = vadd.f32 %v469, %v798
      %800 = vdwg.mxu0
      %801 = vmatprep.subr.mxu0 0.0
      %802 = vmatpush1.msra.mxu0 0.0
      %803 = vmatprep.subr.mxu0 0.0
      %804 = vmatpush1.msra.mxu0 0.0
      %805 = vmatprep.subr.mxu0 0.0
      %806 = vmatpush1.msra.mxu0 0.0
      %807 = vmatprep.subr.mxu0 0.0
      %808 = vmatpush1.msra.mxu0 0.0
      %809 = vmatprep.subr.mxu0 0.0
      %810 = vmatpush1.msra.mxu0 0.0
      %811 = vmatprep.subr.mxu0 0.0
      %812 = vmatpush1.msra.mxu0 0.0
      %813 = vmatprep.subr.mxu0 0.0
      %814 = vmatpush1.msra.mxu0 0.0
      %815 = vmatprep.subr.mxu0 0.0
      %816 = vmatpush1.msra.mxu0 0.0
      %817 = vmatprep.subr.mxu0 0.0
      %818 = vmatpush1.msra.mxu0 0.0
      %819 = vmatprep.subr.mxu0 0.0
      %820 = vmatpush1.msra.mxu0 0.0
      %821 = vmatprep.subr.mxu0 0.0
      %822 = vmatpush1.msra.mxu0 0.0
      %823 = vmatprep.subr.mxu0 0.0
      %824 = vmatpush1.msra.mxu0 0.0
      %825 = vmatprep.subr.mxu0 0.0
      %826 = vmatpush1.msra.mxu0 0.0
      %827 = vmatprep.subr.mxu0 0.0
      %828 = vmatpush1.msra.mxu0 0.0
      %829 = vmatprep.subr.mxu0 0.0
      %830 = vmatpush1.msra.mxu0 0.0
      %831 = vmatprep.subr.mxu0 %v641
      %832 = vmatpush1.msra.mxu0 %v639
      %833 = vmatprep.subr.mxu0 0.0
      %834 = vmatpush2.msra.mxu0 0.0
      %835 = vmatprep.subr.mxu0 0.0
      %836 = vmatpush2.msra.mxu0 0.0
      %837 = vmatprep.subr.mxu0 0.0
      %838 = vmatpush2.msra.mxu0 0.0
      %839 = vmatprep.subr.mxu0 0.0
      %840 = vmatpush2.msra.mxu0 0.0
      %841 = vmatprep.subr.mxu0 0.0
      %842 = vmatpush2.msra.mxu0 0.0
      %843 = vmatprep.subr.mxu0 0.0
      %844 = vmatpush2.msra.mxu0 0.0
      %845 = vmatprep.subr.mxu0 0.0
      %846 = vmatpush2.msra.mxu0 0.0
      %847 = vmatprep.subr.mxu0 0.0
      %848 = vmatpush2.msra.mxu0 0.0
      %849 = vmatprep.subr.mxu0 0.0
      %850 = vmatpush2.msra.mxu0 0.0
      %851 = vmatprep.subr.mxu0 0.0
      %852 = vmatpush2.msra.mxu0 0.0
      %853 = vmatprep.subr.mxu0 0.0
      %854 = vmatpush2.msra.mxu0 0.0
      %855 = vmatprep.subr.mxu0 0.0
      %856 = vmatpush2.msra.mxu0 0.0
      %857 = vmatprep.subr.mxu0 0.0
      %858 = vmatpush2.msra.mxu0 0.0
      %859 = vmatprep.subr.mxu0 0.0
      %860 = vmatpush2.msra.mxu0 0.0
      %861 = vmatprep.subr.mxu0 0.0
      %862 = vmatpush2.msra.mxu0 0.0
      %863 = vmatprep.subr.mxu0 0.0
      %864 = vmatpush2.msra.mxu0 0.0
      %865 = vmatprep.mubr.f32.mxu0 0.0
      %866 = vmatmul.mubr.f32.gmra.mxu0 %v626
      %v867 = vpop.f32.mrf.mxu0
      %v868 = vadd.f32 %v538, %v867
      %v869 = vpop.f32.mrf.mxu0
      %v870 = vadd.f32 %v540, %v869
      %871 = vmatprep.mubr.f32.mxu0 0.0
      %872 = vmatmul.mubr.f32.gmra.mxu0 %v629
      %v873 = vpop.f32.mrf.mxu0
      %v874 = vadd.f32 %v544, %v873
      %v875 = vpop.f32.mrf.mxu0
      %v876 = vadd.f32 %v546, %v875
      %877 = vdwg.mxu0
      %878 = vmatprep.subr.mxu0 0.0
      %879 = vmatpush1.msra.mxu0 0.0
      %880 = vmatprep.subr.mxu0 0.0
      %881 = vmatpush1.msra.mxu0 0.0
      %882 = vmatprep.subr.mxu0 0.0
      %883 = vmatpush1.msra.mxu0 0.0
      %884 = vmatprep.subr.mxu0 0.0
      %885 = vmatpush1.msra.mxu0 0.0
      %886 = vmatprep.subr.mxu0 0.0
      %887 = vmatpush1.msra.mxu0 0.0
      %888 = vmatprep.subr.mxu0 0.0
      %889 = vmatpush1.msra.mxu0 0.0
      %890 = vmatprep.subr.mxu0 0.0
      %891 = vmatpush1.msra.mxu0 0.0
      %892 = vmatprep.subr.mxu0 0.0
      %893 = vmatpush1.msra.mxu0 0.0
      %894 = vmatprep.subr.mxu0 0.0
      %895 = vmatpush1.msra.mxu0 0.0
      %896 = vmatprep.subr.mxu0 0.0
      %897 = vmatpush1.msra.mxu0 0.0
      %898 = vmatprep.subr.mxu0 0.0
      %899 = vmatpush1.msra.mxu0 0.0
      %900 = vmatprep.subr.mxu0 0.0
      %901 = vmatpush1.msra.mxu0 0.0
      %902 = vmatprep.subr.mxu0 0.0
      %903 = vmatpush1.msra.mxu0 0.0
      %904 = vmatprep.subr.mxu0 0.0
      %905 = vmatpush1.msra.mxu0 0.0
      %906 = vmatprep.subr.mxu0 0.0
      %907 = vmatpush1.msra.mxu0 0.0
      %908 = vmatprep.subr.mxu0 %v645
      %909 = vmatpush1.msra.mxu0 %v643
      %910 = vmatprep.subr.mxu0 0.0
      %911 = vmatpush2.msra.mxu0 0.0
      %912 = vmatprep.subr.mxu0 0.0
      %913 = vmatpush2.msra.mxu0 0.0
      %914 = vmatprep.subr.mxu0 0.0
      %915 = vmatpush2.msra.mxu0 0.0
      %916 = vmatprep.subr.mxu0 0.0
      %917 = vmatpush2.msra.mxu0 0.0
      %918 = vmatprep.subr.mxu0 0.0
      %919 = vmatpush2.msra.mxu0 0.0
      %920 = vmatprep.subr.mxu0 0.0
      %921 = vmatpush2.msra.mxu0 0.0
      %922 = vmatprep.subr.mxu0 0.0
      %923 = vmatpush2.msra.mxu0 0.0
      %924 = vmatprep.subr.mxu0 0.0
      %925 = vmatpush2.msra.mxu0 0.0
      %926 = vmatprep.subr.mxu0 0.0
      %927 = vmatpush2.msra.mxu0 0.0
      %928 = vmatprep.subr.mxu0 0.0
      %929 = vmatpush2.msra.mxu0 0.0
      %930 = vmatprep.subr.mxu0 0.0
      %931 = vmatpush2.msra.mxu0 0.0
      %932 = vmatprep.subr.mxu0 0.0
      %933 = vmatpush2.msra.mxu0 0.0
      %934 = vmatprep.subr.mxu0 0.0
      %935 = vmatpush2.msra.mxu0 0.0
      %936 = vmatprep.subr.mxu0 0.0
      %937 = vmatpush2.msra.mxu0 0.0
      %938 = vmatprep.subr.mxu0 0.0
      %939 = vmatpush2.msra.mxu0 0.0
      %940 = vmatprep.subr.mxu0 0.0
      %941 = vmatpush2.msra.mxu0 0.0
      %942 = vmatprep.mubr.f32.mxu0 0.0
      %943 = vmatmul.mubr.f32.gmra.mxu0 %v626
      %v944 = vpop.f32.mrf.mxu0
      %v945 = vadd.f32 %v615, %v944
      %v946 = vpop.f32.mrf.mxu0
      %v947 = vadd.f32 %v617, %v946
      %948 = vmatprep.mubr.f32.mxu0 0.0
      %949 = vmatmul.mubr.f32.gmra.mxu0 %v629
      %v950 = vpop.f32.mrf.mxu0
      %v951 = vadd.f32 %v621, %v950
      %v952 = vpop.f32.mrf.mxu0
      %v953 = vadd.f32 %v623, %v952
      %954 = vdwg.mxu0
      %v955 = vld [vmem:[%s246] sm:$0xff]
      %v956 = vld [vmem:[%s246 + $0x8] sm:$0xff]
      %v957 = vld [vmem:[%s246 + $0x10] sm:$0xff]
      %v958 = vld [vmem:[%s246 + $0x18] sm:$0xff]
      %s959 = scalar_lea.vmem %s1, 32
      %v960 = vld [vmem:[%s959] sm:$0xff]
      %v961 = vld [vmem:[%s959 + $0x8] sm:$0xff]
      %v966 = vcombine.high %v955, %v955
      %v967 = vcombine.high %v956, %v956
      %v968 = vcombine.high %v957, %v957
      %v969 = vcombine.high %v958, %v958
      %970 = vrot.lane.b32.xlu0 %v955, 126
      %v971 = vpop.permute.xlu0 %970
      %972 = vrot.lane.b32.xlu0 %v966, 126
      %v973 = vpop.permute.xlu0 %972
      %974 = vrot.lane.b32.xlu0 %v956, 126
      %v975 = vpop.permute.xlu0 %974
      %976 = vrot.lane.b32.xlu0 %v967, 126
      %v977 = vpop.permute.xlu0 %976
      %978 = vrot.lane.b32.xlu0 %v957, 126
      %v979 = vpop.permute.xlu0 %978
      %980 = vrot.lane.b32.xlu0 %v968, 126
      %v981 = vpop.permute.xlu0 %980
      %982 = vrot.lane.b32.xlu0 %v958, 126
      %v983 = vpop.permute.xlu0 %982
      %984 = vrot.lane.b32.xlu0 %v969, 126
      %v985 = vpop.permute.xlu0 %984
      %vm986 = vcmask 1031168
      %v987 = vsel %vm986, %v971, %v973
      %v988 = vsel %vm986, %v973, %v975
      %v989 = vsel %vm986, %v975, %v977
      %v990 = vsel %vm986, %v977, %v979
      %v991 = vsel %vm986, %v979, %v981
      %v992 = vsel %vm986, %v981, %v983
      %v993 = vsel %vm986, %v983, %v985
      %v995 = vsel %vm293, %v960, 0
      %v998 = vsel %vm293, %v961, 0
      %v1000 = vsel %vm300, %v987, 0
      %v1002 = vsel %vm300, %v988, 0
      %v1004 = vsel %vm300, %v989, 0
      %v1006 = vsel %vm300, %v990, 0
      %v1008 = vsel %vm300, %v991, 0
      %v1010 = vsel %vm300, %v992, 0
      %v1012 = vsel %vm300, %v993, 0
      %v1014 = vsel %vm300, %v985, 0
      %1016 = vmatprep.subr.mxu0 0.0
      %1017 = vmatpush1.msra.mxu0 0.0
      %1018 = vmatprep.subr.mxu0 0.0
      %1019 = vmatpush1.msra.mxu0 0.0
      %1020 = vmatprep.subr.mxu0 0.0
      %1021 = vmatpush1.msra.mxu0 0.0
      %1022 = vmatprep.subr.mxu0 0.0
      %1023 = vmatpush1.msra.mxu0 0.0
      %1024 = vmatprep.subr.mxu0 0.0
      %1025 = vmatpush1.msra.mxu0 0.0
      %1026 = vmatprep.subr.mxu0 0.0
      %1027 = vmatpush1.msra.mxu0 0.0
      %1028 = vmatprep.subr.mxu0 0.0
      %1029 = vmatpush1.msra.mxu0 0.0
      %1030 = vmatprep.subr.mxu0 0.0
      %1031 = vmatpush1.msra.mxu0 0.0
      %1032 = vmatprep.subr.mxu0 0.0
      %1033 = vmatpush1.msra.mxu0 0.0
      %1034 = vmatprep.subr.mxu0 0.0
      %1035 = vmatpush1.msra.mxu0 0.0
      %1036 = vmatprep.subr.mxu0 0.0
      %1037 = vmatpush1.msra.mxu0 0.0
      %1038 = vmatprep.subr.mxu0 0.0
      %1039 = vmatpush1.msra.mxu0 0.0
      %1040 = vmatprep.subr.mxu0 0.0
      %1041 = vmatpush1.msra.mxu0 0.0
      %1042 = vmatprep.subr.mxu0 0.0
      %1043 = vmatpush1.msra.mxu0 0.0
      %1044 = vmatprep.subr.mxu0 0.0
      %1045 = vmatpush1.msra.mxu0 0.0
      %1046 = vmatprep.subr.mxu0 %v1002
      %1047 = vmatpush1.msra.mxu0 %v1000
      %1048 = vmatprep.subr.mxu0 0.0
      %1049 = vmatpush2.msra.mxu0 0.0
      %1050 = vmatprep.subr.mxu0 0.0
      %1051 = vmatpush2.msra.mxu0 0.0
      %1052 = vmatprep.subr.mxu0 0.0
      %1053 = vmatpush2.msra.mxu0 0.0
      %1054 = vmatprep.subr.mxu0 0.0
      %1055 = vmatpush2.msra.mxu0 0.0
      %1056 = vmatprep.subr.mxu0 0.0
      %1057 = vmatpush2.msra.mxu0 0.0
      %1058 = vmatprep.subr.mxu0 0.0
      %1059 = vmatpush2.msra.mxu0 0.0
      %1060 = vmatprep.subr.mxu0 0.0
      %1061 = vmatpush2.msra.mxu0 0.0
      %1062 = vmatprep.subr.mxu0 0.0
      %1063 = vmatpush2.msra.mxu0 0.0
      %1064 = vmatprep.subr.mxu0 0.0
      %1065 = vmatpush2.msra.mxu0 0.0
      %1066 = vmatprep.subr.mxu0 0.0
      %1067 = vmatpush2.msra.mxu0 0.0
      %1068 = vmatprep.subr.mxu0 0.0
      %1069 = vmatpush2.msra.mxu0 0.0
      %1070 = vmatprep.subr.mxu0 0.0
      %1071 = vmatpush2.msra.mxu0 0.0
      %1072 = vmatprep.subr.mxu0 0.0
      %1073 = vmatpush2.msra.mxu0 0.0
      %1074 = vmatprep.subr.mxu0 0.0
      %1075 = vmatpush2.msra.mxu0 0.0
      %1076 = vmatprep.subr.mxu0 0.0
      %1077 = vmatpush2.msra.mxu0 0.0
      %1078 = vmatprep.subr.mxu0 0.0
      %1079 = vmatpush2.msra.mxu0 0.0
      %1080 = vmatprep.mubr.f32.mxu0 0.0
      %1081 = vmatmul.mubr.f32.gmra.mxu0 %v995
      %v1082 = vpop.f32.mrf.mxu0
      %v1083 = vadd.f32 0.0, %v1082
      %v1084 = vpop.f32.mrf.mxu0
      %v1085 = vadd.f32 0.0, %v1084
      %1086 = vmatprep.mubr.f32.mxu0 0.0
      %1087 = vmatmul.mubr.f32.gmra.mxu0 %v998
      %v1088 = vpop.f32.mrf.mxu0
      %v1089 = vadd.f32 0.0, %v1088
      %v1090 = vpop.f32.mrf.mxu0
      %v1091 = vadd.f32 0.0, %v1090
      %1092 = vdwg.mxu0
      %1093 = vmatprep.subr.mxu0 0.0
      %1094 = vmatpush1.msra.mxu0 0.0
      %1095 = vmatprep.subr.mxu0 0.0
      %1096 = vmatpush1.msra.mxu0 0.0
      %1097 = vmatprep.subr.mxu0 0.0
      %1098 = vmatpush1.msra.mxu0 0.0
      %1099 = vmatprep.subr.mxu0 0.0
      %1100 = vmatpush1.msra.mxu0 0.0
      %1101 = vmatprep.subr.mxu0 0.0
      %1102 = vmatpush1.msra.mxu0 0.0
      %1103 = vmatprep.subr.mxu0 0.0
      %1104 = vmatpush1.msra.mxu0 0.0
      %1105 = vmatprep.subr.mxu0 0.0
      %1106 = vmatpush1.msra.mxu0 0.0
      %1107 = vmatprep.subr.mxu0 0.0
      %1108 = vmatpush1.msra.mxu0 0.0
      %1109 = vmatprep.subr.mxu0 0.0
      %1110 = vmatpush1.msra.mxu0 0.0
      %1111 = vmatprep.subr.mxu0 0.0
      %1112 = vmatpush1.msra.mxu0 0.0
      %1113 = vmatprep.subr.mxu0 0.0
      %1114 = vmatpush1.msra.mxu0 0.0
      %1115 = vmatprep.subr.mxu0 0.0
      %1116 = vmatpush1.msra.mxu0 0.0
      %1117 = vmatprep.subr.mxu0 0.0
      %1118 = vmatpush1.msra.mxu0 0.0
      %1119 = vmatprep.subr.mxu0 0.0
      %1120 = vmatpush1.msra.mxu0 0.0
      %1121 = vmatprep.subr.mxu0 0.0
      %1122 = vmatpush1.msra.mxu0 0.0
      %1123 = vmatprep.subr.mxu0 %v1006
      %1124 = vmatpush1.msra.mxu0 %v1004
      %1125 = vmatprep.subr.mxu0 0.0
      %1126 = vmatpush2.msra.mxu0 0.0
      %1127 = vmatprep.subr.mxu0 0.0
      %1128 = vmatpush2.msra.mxu0 0.0
      %1129 = vmatprep.subr.mxu0 0.0
      %1130 = vmatpush2.msra.mxu0 0.0
      %1131 = vmatprep.subr.mxu0 0.0
      %1132 = vmatpush2.msra.mxu0 0.0
      %1133 = vmatprep.subr.mxu0 0.0
      %1134 = vmatpush2.msra.mxu0 0.0
      %1135 = vmatprep.subr.mxu0 0.0
      %1136 = vmatpush2.msra.mxu0 0.0
      %1137 = vmatprep.subr.mxu0 0.0
      %1138 = vmatpush2.msra.mxu0 0.0
      %1139 = vmatprep.subr.mxu0 0.0
      %1140 = vmatpush2.msra.mxu0 0.0
      %1141 = vmatprep.subr.mxu0 0.0
      %1142 = vmatpush2.msra.mxu0 0.0
      %1143 = vmatprep.subr.mxu0 0.0
      %1144 = vmatpush2.msra.mxu0 0.0
      %1145 = vmatprep.subr.mxu0 0.0
      %1146 = vmatpush2.msra.mxu0 0.0
      %1147 = vmatprep.subr.mxu0 0.0
      %1148 = vmatpush2.msra.mxu0 0.0
      %1149 = vmatprep.subr.mxu0 0.0
      %1150 = vmatpush2.msra.mxu0 0.0
      %1151 = vmatprep.subr.mxu0 0.0
      %1152 = vmatpush2.msra.mxu0 0.0
      %1153 = vmatprep.subr.mxu0 0.0
      %1154 = vmatpush2.msra.mxu0 0.0
      %1155 = vmatprep.subr.mxu0 0.0
      %1156 = vmatpush2.msra.mxu0 0.0
      %1157 = vmatprep.mubr.f32.mxu0 0.0
      %1158 = vmatmul.mubr.f32.gmra.mxu0 %v995
      %v1159 = vpop.f32.mrf.mxu0
      %v1160 = vadd.f32 0.0, %v1159
      %v1161 = vpop.f32.mrf.mxu0
      %v1162 = vadd.f32 0.0, %v1161
      %1163 = vmatprep.mubr.f32.mxu0 0.0
      %1164 = vmatmul.mubr.f32.gmra.mxu0 %v998
      %v1165 = vpop.f32.mrf.mxu0
      %v1166 = vadd.f32 0.0, %v1165
      %v1167 = vpop.f32.mrf.mxu0
      %v1168 = vadd.f32 0.0, %v1167
      %1169 = vdwg.mxu0
      %1170 = vmatprep.subr.mxu0 0.0
      %1171 = vmatpush1.msra.mxu0 0.0
      %1172 = vmatprep.subr.mxu0 0.0
      %1173 = vmatpush1.msra.mxu0 0.0
      %1174 = vmatprep.subr.mxu0 0.0
      %1175 = vmatpush1.msra.mxu0 0.0
      %1176 = vmatprep.subr.mxu0 0.0
      %1177 = vmatpush1.msra.mxu0 0.0
      %1178 = vmatprep.subr.mxu0 0.0
      %1179 = vmatpush1.msra.mxu0 0.0
      %1180 = vmatprep.subr.mxu0 0.0
      %1181 = vmatpush1.msra.mxu0 0.0
      %1182 = vmatprep.subr.mxu0 0.0
      %1183 = vmatpush1.msra.mxu0 0.0
      %1184 = vmatprep.subr.mxu0 0.0
      %1185 = vmatpush1.msra.mxu0 0.0
      %1186 = vmatprep.subr.mxu0 0.0
      %1187 = vmatpush1.msra.mxu0 0.0
      %1188 = vmatprep.subr.mxu0 0.0
      %1189 = vmatpush1.msra.mxu0 0.0
      %1190 = vmatprep.subr.mxu0 0.0
      %1191 = vmatpush1.msra.mxu0 0.0
      %1192 = vmatprep.subr.mxu0 0.0
      %1193 = vmatpush1.msra.mxu0 0.0
      %1194 = vmatprep.subr.mxu0 0.0
      %1195 = vmatpush1.msra.mxu0 0.0
      %1196 = vmatprep.subr.mxu0 0.0
      %1197 = vmatpush1.msra.mxu0 0.0
      %1198 = vmatprep.subr.mxu0 0.0
      %1199 = vmatpush1.msra.mxu0 0.0
      %1200 = vmatprep.subr.mxu0 %v1010
      %1201 = vmatpush1.msra.mxu0 %v1008
      %1202 = vmatprep.subr.mxu0 0.0
      %1203 = vmatpush2.msra.mxu0 0.0
      %1204 = vmatprep.subr.mxu0 0.0
      %1205 = vmatpush2.msra.mxu0 0.0
      %1206 = vmatprep.subr.mxu0 0.0
      %1207 = vmatpush2.msra.mxu0 0.0
      %1208 = vmatprep.subr.mxu0 0.0
      %1209 = vmatpush2.msra.mxu0 0.0
      %1210 = vmatprep.subr.mxu0 0.0
      %1211 = vmatpush2.msra.mxu0 0.0
      %1212 = vmatprep.subr.mxu0 0.0
      %1213 = vmatpush2.msra.mxu0 0.0
      %1214 = vmatprep.subr.mxu0 0.0
      %1215 = vmatpush2.msra.mxu0 0.0
      %1216 = vmatprep.subr.mxu0 0.0
      %1217 = vmatpush2.msra.mxu0 0.0
      %1218 = vmatprep.subr.mxu0 0.0
      %1219 = vmatpush2.msra.mxu0 0.0
      %1220 = vmatprep.subr.mxu0 0.0
      %1221 = vmatpush2.msra.mxu0 0.0
      %1222 = vmatprep.subr.mxu0 0.0
      %1223 = vmatpush2.msra.mxu0 0.0
      %1224 = vmatprep.subr.mxu0 0.0
      %1225 = vmatpush2.msra.mxu0 0.0
      %1226 = vmatprep.subr.mxu0 0.0
      %1227 = vmatpush2.msra.mxu0 0.0
      %1228 = vmatprep.subr.mxu0 0.0
      %1229 = vmatpush2.msra.mxu0 0.0
      %1230 = vmatprep.subr.mxu0 0.0
      %1231 = vmatpush2.msra.mxu0 0.0
      %1232 = vmatprep.subr.mxu0 0.0
      %1233 = vmatpush2.msra.mxu0 0.0
      %1234 = vmatprep.mubr.f32.mxu0 0.0
      %1235 = vmatmul.mubr.f32.gmra.mxu0 %v995
      %v1236 = vpop.f32.mrf.mxu0
      %v1237 = vadd.f32 0.0, %v1236
      %v1238 = vpop.f32.mrf.mxu0
      %v1239 = vadd.f32 0.0, %v1238
      %1240 = vmatprep.mubr.f32.mxu0 0.0
      %1241 = vmatmul.mubr.f32.gmra.mxu0 %v998
      %v1242 = vpop.f32.mrf.mxu0
      %v1243 = vadd.f32 0.0, %v1242
      %v1244 = vpop.f32.mrf.mxu0
      %v1245 = vadd.f32 0.0, %v1244
      %1246 = vdwg.mxu0
      %1247 = vmatprep.subr.mxu0 0.0
      %1248 = vmatpush1.msra.mxu0 0.0
      %1249 = vmatprep.subr.mxu0 0.0
      %1250 = vmatpush1.msra.mxu0 0.0
      %1251 = vmatprep.subr.mxu0 0.0
      %1252 = vmatpush1.msra.mxu0 0.0
      %1253 = vmatprep.subr.mxu0 0.0
      %1254 = vmatpush1.msra.mxu0 0.0
      %1255 = vmatprep.subr.mxu0 0.0
      %1256 = vmatpush1.msra.mxu0 0.0
      %1257 = vmatprep.subr.mxu0 0.0
      %1258 = vmatpush1.msra.mxu0 0.0
      %1259 = vmatprep.subr.mxu0 0.0
      %1260 = vmatpush1.msra.mxu0 0.0
      %1261 = vmatprep.subr.mxu0 0.0
      %1262 = vmatpush1.msra.mxu0 0.0
      %1263 = vmatprep.subr.mxu0 0.0
      %1264 = vmatpush1.msra.mxu0 0.0
      %1265 = vmatprep.subr.mxu0 0.0
      %1266 = vmatpush1.msra.mxu0 0.0
      %1267 = vmatprep.subr.mxu0 0.0
      %1268 = vmatpush1.msra.mxu0 0.0
      %1269 = vmatprep.subr.mxu0 0.0
      %1270 = vmatpush1.msra.mxu0 0.0
      %1271 = vmatprep.subr.mxu0 0.0
      %1272 = vmatpush1.msra.mxu0 0.0
      %1273 = vmatprep.subr.mxu0 0.0
      %1274 = vmatpush1.msra.mxu0 0.0
      %1275 = vmatprep.subr.mxu0 0.0
      %1276 = vmatpush1.msra.mxu0 0.0
      %1277 = vmatprep.subr.mxu0 %v1014
      %1278 = vmatpush1.msra.mxu0 %v1012
      %1279 = vmatprep.subr.mxu0 0.0
      %1280 = vmatpush2.msra.mxu0 0.0
      %1281 = vmatprep.subr.mxu0 0.0
      %1282 = vmatpush2.msra.mxu0 0.0
      %1283 = vmatprep.subr.mxu0 0.0
      %1284 = vmatpush2.msra.mxu0 0.0
      %1285 = vmatprep.subr.mxu0 0.0
      %1286 = vmatpush2.msra.mxu0 0.0
      %1287 = vmatprep.subr.mxu0 0.0
      %1288 = vmatpush2.msra.mxu0 0.0
      %1289 = vmatprep.subr.mxu0 0.0
      %1290 = vmatpush2.msra.mxu0 0.0
      %1291 = vmatprep.subr.mxu0 0.0
      %1292 = vmatpush2.msra.mxu0 0.0
      %1293 = vmatprep.subr.mxu0 0.0
      %1294 = vmatpush2.msra.mxu0 0.0
      %1295 = vmatprep.subr.mxu0 0.0
      %1296 = vmatpush2.msra.mxu0 0.0
      %1297 = vmatprep.subr.mxu0 0.0
      %1298 = vmatpush2.msra.mxu0 0.0
      %1299 = vmatprep.subr.mxu0 0.0
      %1300 = vmatpush2.msra.mxu0 0.0
      %1301 = vmatprep.subr.mxu0 0.0
      %1302 = vmatpush2.msra.mxu0 0.0
      %1303 = vmatprep.subr.mxu0 0.0
      %1304 = vmatpush2.msra.mxu0 0.0
      %1305 = vmatprep.subr.mxu0 0.0
      %1306 = vmatpush2.msra.mxu0 0.0
      %1307 = vmatprep.subr.mxu0 0.0
      %1308 = vmatpush2.msra.mxu0 0.0
      %1309 = vmatprep.subr.mxu0 0.0
      %1310 = vmatpush2.msra.mxu0 0.0
      %1311 = vmatprep.mubr.f32.mxu0 0.0
      %1312 = vmatmul.mubr.f32.gmra.mxu0 %v995
      %v1313 = vpop.f32.mrf.mxu0
      %v1314 = vadd.f32 0.0, %v1313
      %v1315 = vpop.f32.mrf.mxu0
      %v1316 = vadd.f32 0.0, %v1315
      %1317 = vmatprep.mubr.f32.mxu0 0.0
      %1318 = vmatmul.mubr.f32.gmra.mxu0 %v998
      %v1319 = vpop.f32.mrf.mxu0
      %v1320 = vadd.f32 0.0, %v1319
      %v1321 = vpop.f32.mrf.mxu0
      %v1322 = vadd.f32 0.0, %v1321
      %1323 = vdwg.mxu0
      %v1324 = vadd.f32 %v714, %v1083
      %v1325 = vadd.f32 %v716, %v1085
      %v1326 = vadd.f32 %v791, %v1160
      %v1327 = vadd.f32 %v793, %v1162
      %v1328 = vadd.f32 %v868, %v1237
      %v1329 = vadd.f32 %v870, %v1239
      %v1330 = vadd.f32 %v945, %v1314
      %v1331 = vadd.f32 %v947, %v1316
      %v1332 = vadd.f32 %v720, %v1089
      %v1333 = vadd.f32 %v722, %v1091
      %v1334 = vadd.f32 %v797, %v1166
      %v1335 = vadd.f32 %v799, %v1168
      %v1336 = vadd.f32 %v874, %v1243
      %v1337 = vadd.f32 %v876, %v1245
      %v1338 = vadd.f32 %v951, %v1320
      %v1339 = vadd.f32 %v953, %v1322
      %v1340 = vld [vmem:[%s246] sm:$0xff]
      %v1341 = vld [vmem:[%s246 + $0x8] sm:$0xff]
      %v1342 = vld [vmem:[%s246 + $0x10] sm:$0xff]
      %v1343 = vld [vmem:[%s246 + $0x18] sm:$0xff]
      %s1344 = scalar_lea.vmem %s1, 48
      %v1345 = vld [vmem:[%s1344] sm:$0xff]
      %v1346 = vld [vmem:[%s1344 + $0x8] sm:$0xff]
      %v1351 = vcombine.high %v1340, %v1340
      %v1352 = vcombine.high %v1341, %v1341
      %v1353 = vcombine.high %v1342, %v1342
      %v1354 = vcombine.high %v1343, %v1343
      %1355 = vrot.lane.b32.xlu0 %v1340, 110
      %v1356 = vpop.permute.xlu0 %1355
      %1357 = vrot.lane.b32.xlu0 %v1351, 110
      %v1358 = vpop.permute.xlu0 %1357
      %1359 = vrot.lane.b32.xlu0 %v1341, 110
      %v1360 = vpop.permute.xlu0 %1359
      %1361 = vrot.lane.b32.xlu0 %v1352, 110
      %v1362 = vpop.permute.xlu0 %1361
      %1363 = vrot.lane.b32.xlu0 %v1342, 110
      %v1364 = vpop.permute.xlu0 %1363
      %1365 = vrot.lane.b32.xlu0 %v1353, 110
      %v1366 = vpop.permute.xlu0 %1365
      %1367 = vrot.lane.b32.xlu0 %v1343, 110
      %v1368 = vpop.permute.xlu0 %1367
      %1369 = vrot.lane.b32.xlu0 %v1354, 110
      %v1370 = vpop.permute.xlu0 %1369
      %vm1371 = vcmask 900096
      %v1372 = vsel %vm1371, %v1356, %v1358
      %v1373 = vsel %vm1371, %v1358, %v1360
      %v1374 = vsel %vm1371, %v1360, %v1362
      %v1375 = vsel %vm1371, %v1362, %v1364
      %v1376 = vsel %vm1371, %v1364, %v1366
      %v1377 = vsel %vm1371, %v1366, %v1368
      %v1378 = vsel %vm1371, %v1368, %v1370
      %v1380 = vsel %vm293, %v1345, 0
      %v1383 = vsel %vm293, %v1346, 0
      %v1385 = vsel %vm300, %v1372, 0
      %v1387 = vsel %vm300, %v1373, 0
      %v1389 = vsel %vm300, %v1374, 0
      %v1391 = vsel %vm300, %v1375, 0
      %v1393 = vsel %vm300, %v1376, 0
      %v1395 = vsel %vm300, %v1377, 0
      %v1397 = vsel %vm300, %v1378, 0
      %v1399 = vsel %vm300, %v1370, 0
      %1401 = vmatprep.subr.mxu0 0.0
      %1402 = vmatpush1.msra.mxu0 0.0
      %1403 = vmatprep.subr.mxu0 0.0
      %1404 = vmatpush1.msra.mxu0 0.0
      %1405 = vmatprep.subr.mxu0 0.0
      %1406 = vmatpush1.msra.mxu0 0.0
      %1407 = vmatprep.subr.mxu0 0.0
      %1408 = vmatpush1.msra.mxu0 0.0
      %1409 = vmatprep.subr.mxu0 0.0
      %1410 = vmatpush1.msra.mxu0 0.0
      %1411 = vmatprep.subr.mxu0 0.0
      %1412 = vmatpush1.msra.mxu0 0.0
      %1413 = vmatprep.subr.mxu0 0.0
      %1414 = vmatpush1.msra.mxu0 0.0
      %1415 = vmatprep.subr.mxu0 0.0
      %1416 = vmatpush1.msra.mxu0 0.0
      %1417 = vmatprep.subr.mxu0 0.0
      %1418 = vmatpush1.msra.mxu0 0.0
      %1419 = vmatprep.subr.mxu0 0.0
      %1420 = vmatpush1.msra.mxu0 0.0
      %1421 = vmatprep.subr.mxu0 0.0
      %1422 = vmatpush1.msra.mxu0 0.0
      %1423 = vmatprep.subr.mxu0 0.0
      %1424 = vmatpush1.msra.mxu0 0.0
      %1425 = vmatprep.subr.mxu0 0.0
      %1426 = vmatpush1.msra.mxu0 0.0
      %1427 = vmatprep.subr.mxu0 0.0
      %1428 = vmatpush1.msra.mxu0 0.0
      %1429 = vmatprep.subr.mxu0 0.0
      %1430 = vmatpush1.msra.mxu0 0.0
      %1431 = vmatprep.subr.mxu0 %v1387
      %1432 = vmatpush1.msra.mxu0 %v1385
      %1433 = vmatprep.subr.mxu0 0.0
      %1434 = vmatpush2.msra.mxu0 0.0
      %1435 = vmatprep.subr.mxu0 0.0
      %1436 = vmatpush2.msra.mxu0 0.0
      %1437 = vmatprep.subr.mxu0 0.0
      %1438 = vmatpush2.msra.mxu0 0.0
      %1439 = vmatprep.subr.mxu0 0.0
      %1440 = vmatpush2.msra.mxu0 0.0
      %1441 = vmatprep.subr.mxu0 0.0
      %1442 = vmatpush2.msra.mxu0 0.0
      %1443 = vmatprep.subr.mxu0 0.0
      %1444 = vmatpush2.msra.mxu0 0.0
      %1445 = vmatprep.subr.mxu0 0.0
      %1446 = vmatpush2.msra.mxu0 0.0
      %1447 = vmatprep.subr.mxu0 0.0
      %1448 = vmatpush2.msra.mxu0 0.0
      %1449 = vmatprep.subr.mxu0 0.0
      %1450 = vmatpush2.msra.mxu0 0.0
      %1451 = vmatprep.subr.mxu0 0.0
      %1452 = vmatpush2.msra.mxu0 0.0
      %1453 = vmatprep.subr.mxu0 0.0
      %1454 = vmatpush2.msra.mxu0 0.0
      %1455 = vmatprep.subr.mxu0 0.0
      %1456 = vmatpush2.msra.mxu0 0.0
      %1457 = vmatprep.subr.mxu0 0.0
      %1458 = vmatpush2.msra.mxu0 0.0
      %1459 = vmatprep.subr.mxu0 0.0
      %1460 = vmatpush2.msra.mxu0 0.0
      %1461 = vmatprep.subr.mxu0 0.0
      %1462 = vmatpush2.msra.mxu0 0.0
      %1463 = vmatprep.subr.mxu0 0.0
      %1464 = vmatpush2.msra.mxu0 0.0
      %1465 = vmatprep.mubr.f32.mxu0 0.0
      %1466 = vmatmul.mubr.f32.gmra.mxu0 %v1380
      %v1467 = vpop.f32.mrf.mxu0
      %v1468 = vadd.f32 0.0, %v1467
      %v1469 = vpop.f32.mrf.mxu0
      %v1470 = vadd.f32 0.0, %v1469
      %1471 = vmatprep.mubr.f32.mxu0 0.0
      %1472 = vmatmul.mubr.f32.gmra.mxu0 %v1383
      %v1473 = vpop.f32.mrf.mxu0
      %v1474 = vadd.f32 0.0, %v1473
      %v1475 = vpop.f32.mrf.mxu0
      %v1476 = vadd.f32 0.0, %v1475
      %1477 = vdwg.mxu0
      %1478 = vmatprep.subr.mxu0 0.0
      %1479 = vmatpush1.msra.mxu0 0.0
      %1480 = vmatprep.subr.mxu0 0.0
      %1481 = vmatpush1.msra.mxu0 0.0
      %1482 = vmatprep.subr.mxu0 0.0
      %1483 = vmatpush1.msra.mxu0 0.0
      %1484 = vmatprep.subr.mxu0 0.0
      %1485 = vmatpush1.msra.mxu0 0.0
      %1486 = vmatprep.subr.mxu0 0.0
      %1487 = vmatpush1.msra.mxu0 0.0
      %1488 = vmatprep.subr.mxu0 0.0
      %1489 = vmatpush1.msra.mxu0 0.0
      %1490 = vmatprep.subr.mxu0 0.0
      %1491 = vmatpush1.msra.mxu0 0.0
      %1492 = vmatprep.subr.mxu0 0.0
      %1493 = vmatpush1.msra.mxu0 0.0
      %1494 = vmatprep.subr.mxu0 0.0
      %1495 = vmatpush1.msra.mxu0 0.0
      %1496 = vmatprep.subr.mxu0 0.0
      %1497 = vmatpush1.msra.mxu0 0.0
      %1498 = vmatprep.subr.mxu0 0.0
      %1499 = vmatpush1.msra.mxu0 0.0
      %1500 = vmatprep.subr.mxu0 0.0
      %1501 = vmatpush1.msra.mxu0 0.0
      %1502 = vmatprep.subr.mxu0 0.0
      %1503 = vmatpush1.msra.mxu0 0.0
      %1504 = vmatprep.subr.mxu0 0.0
      %1505 = vmatpush1.msra.mxu0 0.0
      %1506 = vmatprep.subr.mxu0 0.0
      %1507 = vmatpush1.msra.mxu0 0.0
      %1508 = vmatprep.subr.mxu0 %v1391
      %1509 = vmatpush1.msra.mxu0 %v1389
      %1510 = vmatprep.subr.mxu0 0.0
      %1511 = vmatpush2.msra.mxu0 0.0
      %1512 = vmatprep.subr.mxu0 0.0
      %1513 = vmatpush2.msra.mxu0 0.0
      %1514 = vmatprep.subr.mxu0 0.0
      %1515 = vmatpush2.msra.mxu0 0.0
      %1516 = vmatprep.subr.mxu0 0.0
      %1517 = vmatpush2.msra.mxu0 0.0
      %1518 = vmatprep.subr.mxu0 0.0
      %1519 = vmatpush2.msra.mxu0 0.0
      %1520 = vmatprep.subr.mxu0 0.0
      %1521 = vmatpush2.msra.mxu0 0.0
      %1522 = vmatprep.subr.mxu0 0.0
      %1523 = vmatpush2.msra.mxu0 0.0
      %1524 = vmatprep.subr.mxu0 0.0
      %1525 = vmatpush2.msra.mxu0 0.0
      %1526 = vmatprep.subr.mxu0 0.0
      %1527 = vmatpush2.msra.mxu0 0.0
      %1528 = vmatprep.subr.mxu0 0.0
      %1529 = vmatpush2.msra.mxu0 0.0
      %1530 = vmatprep.subr.mxu0 0.0
      %1531 = vmatpush2.msra.mxu0 0.0
      %1532 = vmatprep.subr.mxu0 0.0
      %1533 = vmatpush2.msra.mxu0 0.0
      %1534 = vmatprep.subr.mxu0 0.0
      %1535 = vmatpush2.msra.mxu0 0.0
      %1536 = vmatprep.subr.mxu0 0.0
      %1537 = vmatpush2.msra.mxu0 0.0
      %1538 = vmatprep.subr.mxu0 0.0
      %1539 = vmatpush2.msra.mxu0 0.0
      %1540 = vmatprep.subr.mxu0 0.0
      %1541 = vmatpush2.msra.mxu0 0.0
      %1542 = vmatprep.mubr.f32.mxu0 0.0
      %1543 = vmatmul.mubr.f32.gmra.mxu0 %v1380
      %v1544 = vpop.f32.mrf.mxu0
      %v1545 = vadd.f32 0.0, %v1544
      %v1546 = vpop.f32.mrf.mxu0
      %v1547 = vadd.f32 0.0, %v1546
      %1548 = vmatprep.mubr.f32.mxu0 0.0
      %1549 = vmatmul.mubr.f32.gmra.mxu0 %v1383
      %v1550 = vpop.f32.mrf.mxu0
      %v1551 = vadd.f32 0.0, %v1550
      %v1552 = vpop.f32.mrf.mxu0
      %v1553 = vadd.f32 0.0, %v1552
      %1554 = vdwg.mxu0
      %1555 = vmatprep.subr.mxu0 0.0
      %1556 = vmatpush1.msra.mxu0 0.0
      %1557 = vmatprep.subr.mxu0 0.0
      %1558 = vmatpush1.msra.mxu0 0.0
      %1559 = vmatprep.subr.mxu0 0.0
      %1560 = vmatpush1.msra.mxu0 0.0
      %1561 = vmatprep.subr.mxu0 0.0
      %1562 = vmatpush1.msra.mxu0 0.0
      %1563 = vmatprep.subr.mxu0 0.0
      %1564 = vmatpush1.msra.mxu0 0.0
      %1565 = vmatprep.subr.mxu0 0.0
      %1566 = vmatpush1.msra.mxu0 0.0
      %1567 = vmatprep.subr.mxu0 0.0
      %1568 = vmatpush1.msra.mxu0 0.0
      %1569 = vmatprep.subr.mxu0 0.0
      %1570 = vmatpush1.msra.mxu0 0.0
      %1571 = vmatprep.subr.mxu0 0.0
      %1572 = vmatpush1.msra.mxu0 0.0
      %1573 = vmatprep.subr.mxu0 0.0
      %1574 = vmatpush1.msra.mxu0 0.0
      %1575 = vmatprep.subr.mxu0 0.0
      %1576 = vmatpush1.msra.mxu0 0.0
      %1577 = vmatprep.subr.mxu0 0.0
      %1578 = vmatpush1.msra.mxu0 0.0
      %1579 = vmatprep.subr.mxu0 0.0
      %1580 = vmatpush1.msra.mxu0 0.0
      %1581 = vmatprep.subr.mxu0 0.0
      %1582 = vmatpush1.msra.mxu0 0.0
      %1583 = vmatprep.subr.mxu0 0.0
      %1584 = vmatpush1.msra.mxu0 0.0
      %1585 = vmatprep.subr.mxu0 %v1395
      %1586 = vmatpush1.msra.mxu0 %v1393
      %1587 = vmatprep.subr.mxu0 0.0
      %1588 = vmatpush2.msra.mxu0 0.0
      %1589 = vmatprep.subr.mxu0 0.0
      %1590 = vmatpush2.msra.mxu0 0.0
      %1591 = vmatprep.subr.mxu0 0.0
      %1592 = vmatpush2.msra.mxu0 0.0
      %1593 = vmatprep.subr.mxu0 0.0
      %1594 = vmatpush2.msra.mxu0 0.0
      %1595 = vmatprep.subr.mxu0 0.0
      %1596 = vmatpush2.msra.mxu0 0.0
      %1597 = vmatprep.subr.mxu0 0.0
      %1598 = vmatpush2.msra.mxu0 0.0
      %1599 = vmatprep.subr.mxu0 0.0
      %1600 = vmatpush2.msra.mxu0 0.0
      %1601 = vmatprep.subr.mxu0 0.0
      %1602 = vmatpush2.msra.mxu0 0.0
      %1603 = vmatprep.subr.mxu0 0.0
      %1604 = vmatpush2.msra.mxu0 0.0
      %1605 = vmatprep.subr.mxu0 0.0
      %1606 = vmatpush2.msra.mxu0 0.0
      %1607 = vmatprep.subr.mxu0 0.0
      %1608 = vmatpush2.msra.mxu0 0.0
      %1609 = vmatprep.subr.mxu0 0.0
      %1610 = vmatpush2.msra.mxu0 0.0
      %1611 = vmatprep.subr.mxu0 0.0
      %1612 = vmatpush2.msra.mxu0 0.0
      %1613 = vmatprep.subr.mxu0 0.0
      %1614 = vmatpush2.msra.mxu0 0.0
      %1615 = vmatprep.subr.mxu0 0.0
      %1616 = vmatpush2.msra.mxu0 0.0
      %1617 = vmatprep.subr.mxu0 0.0
      %1618 = vmatpush2.msra.mxu0 0.0
      %1619 = vmatprep.mubr.f32.mxu0 0.0
      %1620 = vmatmul.mubr.f32.gmra.mxu0 %v1380
      %v1621 = vpop.f32.mrf.mxu0
      %v1622 = vadd.f32 0.0, %v1621
      %v1623 = vpop.f32.mrf.mxu0
      %v1624 = vadd.f32 0.0, %v1623
      %1625 = vmatprep.mubr.f32.mxu0 0.0
      %1626 = vmatmul.mubr.f32.gmra.mxu0 %v1383
      %v1627 = vpop.f32.mrf.mxu0
      %v1628 = vadd.f32 0.0, %v1627
      %v1629 = vpop.f32.mrf.mxu0
      %v1630 = vadd.f32 0.0, %v1629
      %1631 = vdwg.mxu0
      %1632 = vmatprep.subr.mxu0 0.0
      %1633 = vmatpush1.msra.mxu0 0.0
      %1634 = vmatprep.subr.mxu0 0.0
      %1635 = vmatpush1.msra.mxu0 0.0
      %1636 = vmatprep.subr.mxu0 0.0
      %1637 = vmatpush1.msra.mxu0 0.0
      %1638 = vmatprep.subr.mxu0 0.0
      %1639 = vmatpush1.msra.mxu0 0.0
      %1640 = vmatprep.subr.mxu0 0.0
      %1641 = vmatpush1.msra.mxu0 0.0
      %1642 = vmatprep.subr.mxu0 0.0
      %1643 = vmatpush1.msra.mxu0 0.0
      %1644 = vmatprep.subr.mxu0 0.0
      %1645 = vmatpush1.msra.mxu0 0.0
      %1646 = vmatprep.subr.mxu0 0.0
      %1647 = vmatpush1.msra.mxu0 0.0
      %1648 = vmatprep.subr.mxu0 0.0
      %1649 = vmatpush1.msra.mxu0 0.0
      %1650 = vmatprep.subr.mxu0 0.0
      %1651 = vmatpush1.msra.mxu0 0.0
      %1652 = vmatprep.subr.mxu0 0.0
      %1653 = vmatpush1.msra.mxu0 0.0
      %1654 = vmatprep.subr.mxu0 0.0
      %1655 = vmatpush1.msra.mxu0 0.0
      %1656 = vmatprep.subr.mxu0 0.0
      %1657 = vmatpush1.msra.mxu0 0.0
      %1658 = vmatprep.subr.mxu0 0.0
      %1659 = vmatpush1.msra.mxu0 0.0
      %1660 = vmatprep.subr.mxu0 0.0
      %1661 = vmatpush1.msra.mxu0 0.0
      %1662 = vmatprep.subr.mxu0 %v1399
      %1663 = vmatpush1.msra.mxu0 %v1397
      %1664 = vmatprep.subr.mxu0 0.0
      %1665 = vmatpush2.msra.mxu0 0.0
      %1666 = vmatprep.subr.mxu0 0.0
      %1667 = vmatpush2.msra.mxu0 0.0
      %1668 = vmatprep.subr.mxu0 0.0
      %1669 = vmatpush2.msra.mxu0 0.0
      %1670 = vmatprep.subr.mxu0 0.0
      %1671 = vmatpush2.msra.mxu0 0.0
      %1672 = vmatprep.subr.mxu0 0.0
      %1673 = vmatpush2.msra.mxu0 0.0
      %1674 = vmatprep.subr.mxu0 0.0
      %1675 = vmatpush2.msra.mxu0 0.0
      %1676 = vmatprep.subr.mxu0 0.0
      %1677 = vmatpush2.msra.mxu0 0.0
      %1678 = vmatprep.subr.mxu0 0.0
      %1679 = vmatpush2.msra.mxu0 0.0
      %1680 = vmatprep.subr.mxu0 0.0
      %1681 = vmatpush2.msra.mxu0 0.0
      %1682 = vmatprep.subr.mxu0 0.0
      %1683 = vmatpush2.msra.mxu0 0.0
      %1684 = vmatprep.subr.mxu0 0.0
      %1685 = vmatpush2.msra.mxu0 0.0
      %1686 = vmatprep.subr.mxu0 0.0
      %1687 = vmatpush2.msra.mxu0 0.0
      %1688 = vmatprep.subr.mxu0 0.0
      %1689 = vmatpush2.msra.mxu0 0.0
      %1690 = vmatprep.subr.mxu0 0.0
      %1691 = vmatpush2.msra.mxu0 0.0
      %1692 = vmatprep.subr.mxu0 0.0
      %1693 = vmatpush2.msra.mxu0 0.0
      %1694 = vmatprep.subr.mxu0 0.0
      %1695 = vmatpush2.msra.mxu0 0.0
      %1696 = vmatprep.mubr.f32.mxu0 0.0
      %1697 = vmatmul.mubr.f32.gmra.mxu0 %v1380
      %v1698 = vpop.f32.mrf.mxu0
      %v1699 = vadd.f32 0.0, %v1698
      %v1700 = vpop.f32.mrf.mxu0
      %v1701 = vadd.f32 0.0, %v1700
      %1702 = vmatprep.mubr.f32.mxu0 0.0
      %1703 = vmatmul.mubr.f32.gmra.mxu0 %v1383
      %v1704 = vpop.f32.mrf.mxu0
      %v1705 = vadd.f32 0.0, %v1704
      %v1706 = vpop.f32.mrf.mxu0
      %v1707 = vadd.f32 0.0, %v1706
      %1708 = vdwg.mxu0
      %v1709 = vadd.f32 %v1324, %v1468
      %v1710 = vadd.f32 %v1325, %v1470
      %v1711 = vadd.f32 %v1326, %v1545
      %v1712 = vadd.f32 %v1327, %v1547
      %v1713 = vadd.f32 %v1328, %v1622
      %v1714 = vadd.f32 %v1329, %v1624
      %v1715 = vadd.f32 %v1330, %v1699
      %v1716 = vadd.f32 %v1331, %v1701
      %v1717 = vadd.f32 %v1332, %v1474
      %v1718 = vadd.f32 %v1333, %v1476
      %v1719 = vadd.f32 %v1334, %v1551
      %v1720 = vadd.f32 %v1335, %v1553
      %v1721 = vadd.f32 %v1336, %v1628
      %v1722 = vadd.f32 %v1337, %v1630
      %v1723 = vadd.f32 %v1338, %v1705
      %v1724 = vadd.f32 %v1339, %v1707
      %v1725 = vld [vmem:[%s246] sm:$0xff]
      %v1726 = vld [vmem:[%s246 + $0x8] sm:$0xff]
      %v1727 = vld [vmem:[%s246 + $0x10] sm:$0xff]
      %v1728 = vld [vmem:[%s246 + $0x18] sm:$0xff]
      %s1729 = scalar_lea.vmem %s1, 64
      %v1730 = vld [vmem:[%s1729] sm:$0xff]
      %v1731 = vld [vmem:[%s1729 + $0x8] sm:$0xff]
      %v1736 = vcombine.high %v1725, %v1725
      %v1737 = vcombine.high %v1726, %v1726
      %v1738 = vcombine.high %v1727, %v1727
      %v1739 = vcombine.high %v1728, %v1728
      %1740 = vrot.lane.b32.xlu0 %v1725, 109
      %v1741 = vpop.permute.xlu0 %1740
      %1742 = vrot.lane.b32.xlu0 %v1736, 109
      %v1743 = vpop.permute.xlu0 %1742
      %1744 = vrot.lane.b32.xlu0 %v1726, 109
      %v1745 = vpop.permute.xlu0 %1744
      %1746 = vrot.lane.b32.xlu0 %v1737, 109
      %v1747 = vpop.permute.xlu0 %1746
      %1748 = vrot.lane.b32.xlu0 %v1727, 109
      %v1749 = vpop.permute.xlu0 %1748
      %1750 = vrot.lane.b32.xlu0 %v1738, 109
      %v1751 = vpop.permute.xlu0 %1750
      %1752 = vrot.lane.b32.xlu0 %v1728, 109
      %v1753 = vpop.permute.xlu0 %1752
      %1754 = vrot.lane.b32.xlu0 %v1739, 109
      %v1755 = vpop.permute.xlu0 %1754
      %vm1756 = vcmask 891904
      %v1757 = vsel %vm1756, %v1741, %v1743
      %v1758 = vsel %vm1756, %v1743, %v1745
      %v1759 = vsel %vm1756, %v1745, %v1747
      %v1760 = vsel %vm1756, %v1747, %v1749
      %v1761 = vsel %vm1756, %v1749, %v1751
      %v1762 = vsel %vm1756, %v1751, %v1753
      %v1763 = vsel %vm1756, %v1753, %v1755
      %v1765 = vsel %vm293, %v1730, 0
      %v1768 = vsel %vm293, %v1731, 0
      %v1770 = vsel %vm300, %v1757, 0
      %v1772 = vsel %vm300, %v1758, 0
      %v1774 = vsel %vm300, %v1759, 0
      %v1776 = vsel %vm300, %v1760, 0
      %v1778 = vsel %vm300, %v1761, 0
      %v1780 = vsel %vm300, %v1762, 0
      %v1782 = vsel %vm300, %v1763, 0
      %v1784 = vsel %vm300, %v1755, 0
      %1786 = vmatprep.subr.mxu0 0.0
      %1787 = vmatpush1.msra.mxu0 0.0
      %1788 = vmatprep.subr.mxu0 0.0
      %1789 = vmatpush1.msra.mxu0 0.0
      %1790 = vmatprep.subr.mxu0 0.0
      %1791 = vmatpush1.msra.mxu0 0.0
      %1792 = vmatprep.subr.mxu0 0.0
      %1793 = vmatpush1.msra.mxu0 0.0
      %1794 = vmatprep.subr.mxu0 0.0
      %1795 = vmatpush1.msra.mxu0 0.0
      %1796 = vmatprep.subr.mxu0 0.0
      %1797 = vmatpush1.msra.mxu0 0.0
      %1798 = vmatprep.subr.mxu0 0.0
      %1799 = vmatpush1.msra.mxu0 0.0
      %1800 = vmatprep.subr.mxu0 0.0
      %1801 = vmatpush1.msra.mxu0 0.0
      %1802 = vmatprep.subr.mxu0 0.0
      %1803 = vmatpush1.msra.mxu0 0.0
      %1804 = vmatprep.subr.mxu0 0.0
      %1805 = vmatpush1.msra.mxu0 0.0
      %1806 = vmatprep.subr.mxu0 0.0
      %1807 = vmatpush1.msra.mxu0 0.0
      %1808 = vmatprep.subr.mxu0 0.0
      %1809 = vmatpush1.msra.mxu0 0.0
      %1810 = vmatprep.subr.mxu0 0.0
      %1811 = vmatpush1.msra.mxu0 0.0
      %1812 = vmatprep.subr.mxu0 0.0
      %1813 = vmatpush1.msra.mxu0 0.0
      %1814 = vmatprep.subr.mxu0 0.0
      %1815 = vmatpush1.msra.mxu0 0.0
      %1816 = vmatprep.subr.mxu0 %v1772
      %1817 = vmatpush1.msra.mxu0 %v1770
      %1818 = vmatprep.subr.mxu0 0.0
      %1819 = vmatpush2.msra.mxu0 0.0
      %1820 = vmatprep.subr.mxu0 0.0
      %1821 = vmatpush2.msra.mxu0 0.0
      %1822 = vmatprep.subr.mxu0 0.0
      %1823 = vmatpush2.msra.mxu0 0.0
      %1824 = vmatprep.subr.mxu0 0.0
      %1825 = vmatpush2.msra.mxu0 0.0
      %1826 = vmatprep.subr.mxu0 0.0
      %1827 = vmatpush2.msra.mxu0 0.0
      %1828 = vmatprep.subr.mxu0 0.0
      %1829 = vmatpush2.msra.mxu0 0.0
      %1830 = vmatprep.subr.mxu0 0.0
      %1831 = vmatpush2.msra.mxu0 0.0
      %1832 = vmatprep.subr.mxu0 0.0
      %1833 = vmatpush2.msra.mxu0 0.0
      %1834 = vmatprep.subr.mxu0 0.0
      %1835 = vmatpush2.msra.mxu0 0.0
      %1836 = vmatprep.subr.mxu0 0.0
      %1837 = vmatpush2.msra.mxu0 0.0
      %1838 = vmatprep.subr.mxu0 0.0
      %1839 = vmatpush2.msra.mxu0 0.0
      %1840 = vmatprep.subr.mxu0 0.0
      %1841 = vmatpush2.msra.mxu0 0.0
      %1842 = vmatprep.subr.mxu0 0.0
      %1843 = vmatpush2.msra.mxu0 0.0
      %1844 = vmatprep.subr.mxu0 0.0
      %1845 = vmatpush2.msra.mxu0 0.0
      %1846 = vmatprep.subr.mxu0 0.0
      %1847 = vmatpush2.msra.mxu0 0.0
      %1848 = vmatprep.subr.mxu0 0.0
      %1849 = vmatpush2.msra.mxu0 0.0
      %1850 = vmatprep.mubr.f32.mxu0 0.0
      %1851 = vmatmul.mubr.f32.gmra.mxu0 %v1765
      %v1852 = vpop.f32.mrf.mxu0
      %v1853 = vadd.f32 0.0, %v1852
      %v1854 = vpop.f32.mrf.mxu0
      %v1855 = vadd.f32 0.0, %v1854
      %1856 = vmatprep.mubr.f32.mxu0 0.0
      %1857 = vmatmul.mubr.f32.gmra.mxu0 %v1768
      %v1858 = vpop.f32.mrf.mxu0
      %v1859 = vadd.f32 0.0, %v1858
      %v1860 = vpop.f32.mrf.mxu0
      %v1861 = vadd.f32 0.0, %v1860
      %1862 = vdwg.mxu0
      %1863 = vmatprep.subr.mxu0 0.0
      %1864 = vmatpush1.msra.mxu0 0.0
      %1865 = vmatprep.subr.mxu0 0.0
      %1866 = vmatpush1.msra.mxu0 0.0
      %1867 = vmatprep.subr.mxu0 0.0
      %1868 = vmatpush1.msra.mxu0 0.0
      %1869 = vmatprep.subr.mxu0 0.0
      %1870 = vmatpush1.msra.mxu0 0.0
      %1871 = vmatprep.subr.mxu0 0.0
      %1872 = vmatpush1.msra.mxu0 0.0
      %1873 = vmatprep.subr.mxu0 0.0
      %1874 = vmatpush1.msra.mxu0 0.0
      %1875 = vmatprep.subr.mxu0 0.0
      %1876 = vmatpush1.msra.mxu0 0.0
      %1877 = vmatprep.subr.mxu0 0.0
      %1878 = vmatpush1.msra.mxu0 0.0
      %1879 = vmatprep.subr.mxu0 0.0
      %1880 = vmatpush1.msra.mxu0 0.0
      %1881 = vmatprep.subr.mxu0 0.0
      %1882 = vmatpush1.msra.mxu0 0.0
      %1883 = vmatprep.subr.mxu0 0.0
      %1884 = vmatpush1.msra.mxu0 0.0
      %1885 = vmatprep.subr.mxu0 0.0
      %1886 = vmatpush1.msra.mxu0 0.0
      %1887 = vmatprep.subr.mxu0 0.0
      %1888 = vmatpush1.msra.mxu0 0.0
      %1889 = vmatprep.subr.mxu0 0.0
      %1890 = vmatpush1.msra.mxu0 0.0
      %1891 = vmatprep.subr.mxu0 0.0
      %1892 = vmatpush1.msra.mxu0 0.0
      %1893 = vmatprep.subr.mxu0 %v1776
      %1894 = vmatpush1.msra.mxu0 %v1774
      %1895 = vmatprep.subr.mxu0 0.0
      %1896 = vmatpush2.msra.mxu0 0.0
      %1897 = vmatprep.subr.mxu0 0.0
      %1898 = vmatpush2.msra.mxu0 0.0
      %1899 = vmatprep.subr.mxu0 0.0
      %1900 = vmatpush2.msra.mxu0 0.0
      %1901 = vmatprep.subr.mxu0 0.0
      %1902 = vmatpush2.msra.mxu0 0.0
      %1903 = vmatprep.subr.mxu0 0.0
      %1904 = vmatpush2.msra.mxu0 0.0
      %1905 = vmatprep.subr.mxu0 0.0
      %1906 = vmatpush2.msra.mxu0 0.0
      %1907 = vmatprep.subr.mxu0 0.0
      %1908 = vmatpush2.msra.mxu0 0.0
      %1909 = vmatprep.subr.mxu0 0.0
      %1910 = vmatpush2.msra.mxu0 0.0
      %1911 = vmatprep.subr.mxu0 0.0
      %1912 = vmatpush2.msra.mxu0 0.0
      %1913 = vmatprep.subr.mxu0 0.0
      %1914 = vmatpush2.msra.mxu0 0.0
      %1915 = vmatprep.subr.mxu0 0.0
      %1916 = vmatpush2.msra.mxu0 0.0
      %1917 = vmatprep.subr.mxu0 0.0
      %1918 = vmatpush2.msra.mxu0 0.0
      %1919 = vmatprep.subr.mxu0 0.0
      %1920 = vmatpush2.msra.mxu0 0.0
      %1921 = vmatprep.subr.mxu0 0.0
      %1922 = vmatpush2.msra.mxu0 0.0
      %1923 = vmatprep.subr.mxu0 0.0
      %1924 = vmatpush2.msra.mxu0 0.0
      %1925 = vmatprep.subr.mxu0 0.0
      %1926 = vmatpush2.msra.mxu0 0.0
      %1927 = vmatprep.mubr.f32.mxu0 0.0
      %1928 = vmatmul.mubr.f32.gmra.mxu0 %v1765
      %v1929 = vpop.f32.mrf.mxu0
      %v1930 = vadd.f32 0.0, %v1929
      %v1931 = vpop.f32.mrf.mxu0
      %v1932 = vadd.f32 0.0, %v1931
      %1933 = vmatprep.mubr.f32.mxu0 0.0
      %1934 = vmatmul.mubr.f32.gmra.mxu0 %v1768
      %v1935 = vpop.f32.mrf.mxu0
      %v1936 = vadd.f32 0.0, %v1935
      %v1937 = vpop.f32.mrf.mxu0
      %v1938 = vadd.f32 0.0, %v1937
      %1939 = vdwg.mxu0
      %1940 = vmatprep.subr.mxu0 0.0
      %1941 = vmatpush1.msra.mxu0 0.0
      %1942 = vmatprep.subr.mxu0 0.0
      %1943 = vmatpush1.msra.mxu0 0.0
      %1944 = vmatprep.subr.mxu0 0.0
      %1945 = vmatpush1.msra.mxu0 0.0
      %1946 = vmatprep.subr.mxu0 0.0
      %1947 = vmatpush1.msra.mxu0 0.0
      %1948 = vmatprep.subr.mxu0 0.0
      %1949 = vmatpush1.msra.mxu0 0.0
      %1950 = vmatprep.subr.mxu0 0.0
      %1951 = vmatpush1.msra.mxu0 0.0
      %1952 = vmatprep.subr.mxu0 0.0
      %1953 = vmatpush1.msra.mxu0 0.0
      %1954 = vmatprep.subr.mxu0 0.0
      %1955 = vmatpush1.msra.mxu0 0.0
      %1956 = vmatprep.subr.mxu0 0.0
      %1957 = vmatpush1.msra.mxu0 0.0
      %1958 = vmatprep.subr.mxu0 0.0
      %1959 = vmatpush1.msra.mxu0 0.0
      %1960 = vmatprep.subr.mxu0 0.0
      %1961 = vmatpush1.msra.mxu0 0.0
      %1962 = vmatprep.subr.mxu0 0.0
      %1963 = vmatpush1.msra.mxu0 0.0
      %1964 = vmatprep.subr.mxu0 0.0
      %1965 = vmatpush1.msra.mxu0 0.0
      %1966 = vmatprep.subr.mxu0 0.0
      %1967 = vmatpush1.msra.mxu0 0.0
      %1968 = vmatprep.subr.mxu0 0.0
      %1969 = vmatpush1.msra.mxu0 0.0
      %1970 = vmatprep.subr.mxu0 %v1780
      %1971 = vmatpush1.msra.mxu0 %v1778
      %1972 = vmatprep.subr.mxu0 0.0
      %1973 = vmatpush2.msra.mxu0 0.0
      %1974 = vmatprep.subr.mxu0 0.0
      %1975 = vmatpush2.msra.mxu0 0.0
      %1976 = vmatprep.subr.mxu0 0.0
      %1977 = vmatpush2.msra.mxu0 0.0
      %1978 = vmatprep.subr.mxu0 0.0
      %1979 = vmatpush2.msra.mxu0 0.0
      %1980 = vmatprep.subr.mxu0 0.0
      %1981 = vmatpush2.msra.mxu0 0.0
      %1982 = vmatprep.subr.mxu0 0.0
      %1983 = vmatpush2.msra.mxu0 0.0
      %1984 = vmatprep.subr.mxu0 0.0
      %1985 = vmatpush2.msra.mxu0 0.0
      %1986 = vmatprep.subr.mxu0 0.0
      %1987 = vmatpush2.msra.mxu0 0.0
      %1988 = vmatprep.subr.mxu0 0.0
      %1989 = vmatpush2.msra.mxu0 0.0
      %1990 = vmatprep.subr.mxu0 0.0
      %1991 = vmatpush2.msra.mxu0 0.0
      %1992 = vmatprep.subr.mxu0 0.0
      %1993 = vmatpush2.msra.mxu0 0.0
      %1994 = vmatprep.subr.mxu0 0.0
      %1995 = vmatpush2.msra.mxu0 0.0
      %1996 = vmatprep.subr.mxu0 0.0
      %1997 = vmatpush2.msra.mxu0 0.0
      %1998 = vmatprep.subr.mxu0 0.0
      %1999 = vmatpush2.msra.mxu0 0.0
      %2000 = vmatprep.subr.mxu0 0.0
      %2001 = vmatpush2.msra.mxu0 0.0
      %2002 = vmatprep.subr.mxu0 0.0
      %2003 = vmatpush2.msra.mxu0 0.0
      %2004 = vmatprep.mubr.f32.mxu0 0.0
      %2005 = vmatmul.mubr.f32.gmra.mxu0 %v1765
      %v2006 = vpop.f32.mrf.mxu0
      %v2007 = vadd.f32 0.0, %v2006
      %v2008 = vpop.f32.mrf.mxu0
      %v2009 = vadd.f32 0.0, %v2008
      %2010 = vmatprep.mubr.f32.mxu0 0.0
      %2011 = vmatmul.mubr.f32.gmra.mxu0 %v1768
      %v2012 = vpop.f32.mrf.mxu0
      %v2013 = vadd.f32 0.0, %v2012
      %v2014 = vpop.f32.mrf.mxu0
      %v2015 = vadd.f32 0.0, %v2014
      %2016 = vdwg.mxu0
      %2017 = vmatprep.subr.mxu0 0.0
      %2018 = vmatpush1.msra.mxu0 0.0
      %2019 = vmatprep.subr.mxu0 0.0
      %2020 = vmatpush1.msra.mxu0 0.0
      %2021 = vmatprep.subr.mxu0 0.0
      %2022 = vmatpush1.msra.mxu0 0.0
      %2023 = vmatprep.subr.mxu0 0.0
      %2024 = vmatpush1.msra.mxu0 0.0
      %2025 = vmatprep.subr.mxu0 0.0
      %2026 = vmatpush1.msra.mxu0 0.0
      %2027 = vmatprep.subr.mxu0 0.0
      %2028 = vmatpush1.msra.mxu0 0.0
      %2029 = vmatprep.subr.mxu0 0.0
      %2030 = vmatpush1.msra.mxu0 0.0
      %2031 = vmatprep.subr.mxu0 0.0
      %2032 = vmatpush1.msra.mxu0 0.0
      %2033 = vmatprep.subr.mxu0 0.0
      %2034 = vmatpush1.msra.mxu0 0.0
      %2035 = vmatprep.subr.mxu0 0.0
      %2036 = vmatpush1.msra.mxu0 0.0
      %2037 = vmatprep.subr.mxu0 0.0
      %2038 = vmatpush1.msra.mxu0 0.0
      %2039 = vmatprep.subr.mxu0 0.0
      %2040 = vmatpush1.msra.mxu0 0.0
      %2041 = vmatprep.subr.mxu0 0.0
      %2042 = vmatpush1.msra.mxu0 0.0
      %2043 = vmatprep.subr.mxu0 0.0
      %2044 = vmatpush1.msra.mxu0 0.0
      %2045 = vmatprep.subr.mxu0 0.0
      %2046 = vmatpush1.msra.mxu0 0.0
      %2047 = vmatprep.subr.mxu0 %v1784
      %2048 = vmatpush1.msra.mxu0 %v1782
      %2049 = vmatprep.subr.mxu0 0.0
      %2050 = vmatpush2.msra.mxu0 0.0
      %2051 = vmatprep.subr.mxu0 0.0
      %2052 = vmatpush2.msra.mxu0 0.0
      %2053 = vmatprep.subr.mxu0 0.0
      %2054 = vmatpush2.msra.mxu0 0.0
      %2055 = vmatprep.subr.mxu0 0.0
      %2056 = vmatpush2.msra.mxu0 0.0
      %2057 = vmatprep.subr.mxu0 0.0
      %2058 = vmatpush2.msra.mxu0 0.0
      %2059 = vmatprep.subr.mxu0 0.0
      %2060 = vmatpush2.msra.mxu0 0.0
      %2061 = vmatprep.subr.mxu0 0.0
      %2062 = vmatpush2.msra.mxu0 0.0
      %2063 = vmatprep.subr.mxu0 0.0
      %2064 = vmatpush2.msra.mxu0 0.0
      %2065 = vmatprep.subr.mxu0 0.0
      %2066 = vmatpush2.msra.mxu0 0.0
      %2067 = vmatprep.subr.mxu0 0.0
      %2068 = vmatpush2.msra.mxu0 0.0
      %2069 = vmatprep.subr.mxu0 0.0
      %2070 = vmatpush2.msra.mxu0 0.0
      %2071 = vmatprep.subr.mxu0 0.0
      %2072 = vmatpush2.msra.mxu0 0.0
      %2073 = vmatprep.subr.mxu0 0.0
      %2074 = vmatpush2.msra.mxu0 0.0
      %2075 = vmatprep.subr.mxu0 0.0
      %2076 = vmatpush2.msra.mxu0 0.0
      %2077 = vmatprep.subr.mxu0 0.0
      %2078 = vmatpush2.msra.mxu0 0.0
      %2079 = vmatprep.subr.mxu0 0.0
      %2080 = vmatpush2.msra.mxu0 0.0
      %2081 = vmatprep.mubr.f32.mxu0 0.0
      %2082 = vmatmul.mubr.f32.gmra.mxu0 %v1765
      %v2083 = vpop.f32.mrf.mxu0
      %v2084 = vadd.f32 0.0, %v2083
      %v2085 = vpop.f32.mrf.mxu0
      %v2086 = vadd.f32 0.0, %v2085
      %2087 = vmatprep.mubr.f32.mxu0 0.0
      %2088 = vmatmul.mubr.f32.gmra.mxu0 %v1768
      %v2089 = vpop.f32.mrf.mxu0
      %v2090 = vadd.f32 0.0, %v2089
      %v2091 = vpop.f32.mrf.mxu0
      %v2092 = vadd.f32 0.0, %v2091
      %2093 = vdwg.mxu0
      %v2094 = vadd.f32 %v1709, %v1853
      %v2095 = vadd.f32 %v1710, %v1855
      %v2096 = vadd.f32 %v1711, %v1930
      %v2097 = vadd.f32 %v1712, %v1932
      %v2098 = vadd.f32 %v1713, %v2007
      %v2099 = vadd.f32 %v1714, %v2009
      %v2100 = vadd.f32 %v1715, %v2084
      %v2101 = vadd.f32 %v1716, %v2086
      %v2102 = vadd.f32 %v1717, %v1859
      %v2103 = vadd.f32 %v1718, %v1861
      %v2104 = vadd.f32 %v1719, %v1936
      %v2105 = vadd.f32 %v1720, %v1938
      %v2106 = vadd.f32 %v1721, %v2013
      %v2107 = vadd.f32 %v1722, %v2015
      %v2108 = vadd.f32 %v1723, %v2090
      %v2109 = vadd.f32 %v1724, %v2092
      %v2110 = vld [vmem:[%s246] sm:$0xff]
      %v2111 = vld [vmem:[%s246 + $0x8] sm:$0xff]
      %v2112 = vld [vmem:[%s246 + $0x10] sm:$0xff]
      %v2113 = vld [vmem:[%s246 + $0x18] sm:$0xff]
      %s2114 = scalar_lea.vmem %s1, 80
      %v2115 = vld [vmem:[%s2114] sm:$0xff]
      %v2116 = vld [vmem:[%s2114 + $0x8] sm:$0xff]
      %v2121 = vcombine.high %v2110, %v2110
      %v2122 = vcombine.high %v2111, %v2111
      %v2123 = vcombine.high %v2112, %v2112
      %v2124 = vcombine.high %v2113, %v2113
      %2125 = vrot.lane.b32.xlu0 %v2110, 108
      %v2126 = vpop.permute.xlu0 %2125
      %2127 = vrot.lane.b32.xlu0 %v2121, 108
      %v2128 = vpop.permute.xlu0 %2127
      %2129 = vrot.lane.b32.xlu0 %v2111, 108
      %v2130 = vpop.permute.xlu0 %2129
      %2131 = vrot.lane.b32.xlu0 %v2122, 108
      %v2132 = vpop.permute.xlu0 %2131
      %2133 = vrot.lane.b32.xlu0 %v2112, 108
      %v2134 = vpop.permute.xlu0 %2133
      %2135 = vrot.lane.b32.xlu0 %v2123, 108
      %v2136 = vpop.permute.xlu0 %2135
      %2137 = vrot.lane.b32.xlu0 %v2113, 108
      %v2138 = vpop.permute.xlu0 %2137
      %2139 = vrot.lane.b32.xlu0 %v2124, 108
      %v2140 = vpop.permute.xlu0 %2139
      %vm2141 = vcmask 883712
      %v2142 = vsel %vm2141, %v2126, %v2128
      %v2143 = vsel %vm2141, %v2128, %v2130
      %v2144 = vsel %vm2141, %v2130, %v2132
      %v2145 = vsel %vm2141, %v2132, %v2134
      %v2146 = vsel %vm2141, %v2134, %v2136
      %v2147 = vsel %vm2141, %v2136, %v2138
      %v2148 = vsel %vm2141, %v2138, %v2140
      %v2150 = vsel %vm293, %v2115, 0
      %v2153 = vsel %vm293, %v2116, 0
      %v2155 = vsel %vm300, %v2142, 0
      %v2157 = vsel %vm300, %v2143, 0
      %v2159 = vsel %vm300, %v2144, 0
      %v2161 = vsel %vm300, %v2145, 0
      %v2163 = vsel %vm300, %v2146, 0
      %v2165 = vsel %vm300, %v2147, 0
      %v2167 = vsel %vm300, %v2148, 0
      %v2169 = vsel %vm300, %v2140, 0
      %2171 = vmatprep.subr.mxu0 0.0
      %2172 = vmatpush1.msra.mxu0 0.0
      %2173 = vmatprep.subr.mxu0 0.0
      %2174 = vmatpush1.msra.mxu0 0.0
      %2175 = vmatprep.subr.mxu0 0.0
      %2176 = vmatpush1.msra.mxu0 0.0
      %2177 = vmatprep.subr.mxu0 0.0
      %2178 = vmatpush1.msra.mxu0 0.0
      %2179 = vmatprep.subr.mxu0 0.0
      %2180 = vmatpush1.msra.mxu0 0.0
      %2181 = vmatprep.subr.mxu0 0.0
      %2182 = vmatpush1.msra.mxu0 0.0
      %2183 = vmatprep.subr.mxu0 0.0
      %2184 = vmatpush1.msra.mxu0 0.0
      %2185 = vmatprep.subr.mxu0 0.0
      %2186 = vmatpush1.msra.mxu0 0.0
      %2187 = vmatprep.subr.mxu0 0.0
      %2188 = vmatpush1.msra.mxu0 0.0
      %2189 = vmatprep.subr.mxu0 0.0
      %2190 = vmatpush1.msra.mxu0 0.0
      %2191 = vmatprep.subr.mxu0 0.0
      %2192 = vmatpush1.msra.mxu0 0.0
      %2193 = vmatprep.subr.mxu0 0.0
      %2194 = vmatpush1.msra.mxu0 0.0
      %2195 = vmatprep.subr.mxu0 0.0
      %2196 = vmatpush1.msra.mxu0 0.0
      %2197 = vmatprep.subr.mxu0 0.0
      %2198 = vmatpush1.msra.mxu0 0.0
      %2199 = vmatprep.subr.mxu0 0.0
      %2200 = vmatpush1.msra.mxu0 0.0
      %2201 = vmatprep.subr.mxu0 %v2157
      %2202 = vmatpush1.msra.mxu0 %v2155
      %2203 = vmatprep.subr.mxu0 0.0
      %2204 = vmatpush2.msra.mxu0 0.0
      %2205 = vmatprep.subr.mxu0 0.0
      %2206 = vmatpush2.msra.mxu0 0.0
      %2207 = vmatprep.subr.mxu0 0.0
      %2208 = vmatpush2.msra.mxu0 0.0
      %2209 = vmatprep.subr.mxu0 0.0
      %2210 = vmatpush2.msra.mxu0 0.0
      %2211 = vmatprep.subr.mxu0 0.0
      %2212 = vmatpush2.msra.mxu0 0.0
      %2213 = vmatprep.subr.mxu0 0.0
      %2214 = vmatpush2.msra.mxu0 0.0
      %2215 = vmatprep.subr.mxu0 0.0
      %2216 = vmatpush2.msra.mxu0 0.0
      %2217 = vmatprep.subr.mxu0 0.0
      %2218 = vmatpush2.msra.mxu0 0.0
      %2219 = vmatprep.subr.mxu0 0.0
      %2220 = vmatpush2.msra.mxu0 0.0
      %2221 = vmatprep.subr.mxu0 0.0
      %2222 = vmatpush2.msra.mxu0 0.0
      %2223 = vmatprep.subr.mxu0 0.0
      %2224 = vmatpush2.msra.mxu0 0.0
      %2225 = vmatprep.subr.mxu0 0.0
      %2226 = vmatpush2.msra.mxu0 0.0
      %2227 = vmatprep.subr.mxu0 0.0
      %2228 = vmatpush2.msra.mxu0 0.0
      %2229 = vmatprep.subr.mxu0 0.0
      %2230 = vmatpush2.msra.mxu0 0.0
      %2231 = vmatprep.subr.mxu0 0.0
      %2232 = vmatpush2.msra.mxu0 0.0
      %2233 = vmatprep.subr.mxu0 0.0
      %2234 = vmatpush2.msra.mxu0 0.0
      %2235 = vmatprep.mubr.f32.mxu0 0.0
      %2236 = vmatmul.mubr.f32.gmra.mxu0 %v2150
      %v2237 = vpop.f32.mrf.mxu0
      %v2238 = vadd.f32 0.0, %v2237
      %v2239 = vpop.f32.mrf.mxu0
      %v2240 = vadd.f32 0.0, %v2239
      %2241 = vmatprep.mubr.f32.mxu0 0.0
      %2242 = vmatmul.mubr.f32.gmra.mxu0 %v2153
      %v2243 = vpop.f32.mrf.mxu0
      %v2244 = vadd.f32 0.0, %v2243
      %v2245 = vpop.f32.mrf.mxu0
      %v2246 = vadd.f32 0.0, %v2245
      %2247 = vdwg.mxu0
      %2248 = vmatprep.subr.mxu0 0.0
      %2249 = vmatpush1.msra.mxu0 0.0
      %2250 = vmatprep.subr.mxu0 0.0
      %2251 = vmatpush1.msra.mxu0 0.0
      %2252 = vmatprep.subr.mxu0 0.0
      %2253 = vmatpush1.msra.mxu0 0.0
      %2254 = vmatprep.subr.mxu0 0.0
      %2255 = vmatpush1.msra.mxu0 0.0
      %2256 = vmatprep.subr.mxu0 0.0
      %2257 = vmatpush1.msra.mxu0 0.0
      %2258 = vmatprep.subr.mxu0 0.0
      %2259 = vmatpush1.msra.mxu0 0.0
      %2260 = vmatprep.subr.mxu0 0.0
      %2261 = vmatpush1.msra.mxu0 0.0
      %2262 = vmatprep.subr.mxu0 0.0
      %2263 = vmatpush1.msra.mxu0 0.0
      %2264 = vmatprep.subr.mxu0 0.0
      %2265 = vmatpush1.msra.mxu0 0.0
      %2266 = vmatprep.subr.mxu0 0.0
      %2267 = vmatpush1.msra.mxu0 0.0
      %2268 = vmatprep.subr.mxu0 0.0
      %2269 = vmatpush1.msra.mxu0 0.0
      %2270 = vmatprep.subr.mxu0 0.0
      %2271 = vmatpush1.msra.mxu0 0.0
      %2272 = vmatprep.subr.mxu0 0.0
      %2273 = vmatpush1.msra.mxu0 0.0
      %2274 = vmatprep.subr.mxu0 0.0
      %2275 = vmatpush1.msra.mxu0 0.0
      %2276 = vmatprep.subr.mxu0 0.0
      %2277 = vmatpush1.msra.mxu0 0.0
      %2278 = vmatprep.subr.mxu0 %v2161
      %2279 = vmatpush1.msra.mxu0 %v2159
      %2280 = vmatprep.subr.mxu0 0.0
      %2281 = vmatpush2.msra.mxu0 0.0
      %2282 = vmatprep.subr.mxu0 0.0
      %2283 = vmatpush2.msra.mxu0 0.0
      %2284 = vmatprep.subr.mxu0 0.0
      %2285 = vmatpush2.msra.mxu0 0.0
      %2286 = vmatprep.subr.mxu0 0.0
      %2287 = vmatpush2.msra.mxu0 0.0
      %2288 = vmatprep.subr.mxu0 0.0
      %2289 = vmatpush2.msra.mxu0 0.0
      %2290 = vmatprep.subr.mxu0 0.0
      %2291 = vmatpush2.msra.mxu0 0.0
      %2292 = vmatprep.subr.mxu0 0.0
      %2293 = vmatpush2.msra.mxu0 0.0
      %2294 = vmatprep.subr.mxu0 0.0
      %2295 = vmatpush2.msra.mxu0 0.0
      %2296 = vmatprep.subr.mxu0 0.0
      %2297 = vmatpush2.msra.mxu0 0.0
      %2298 = vmatprep.subr.mxu0 0.0
      %2299 = vmatpush2.msra.mxu0 0.0
      %2300 = vmatprep.subr.mxu0 0.0
      %2301 = vmatpush2.msra.mxu0 0.0
      %2302 = vmatprep.subr.mxu0 0.0
      %2303 = vmatpush2.msra.mxu0 0.0
      %2304 = vmatprep.subr.mxu0 0.0
      %2305 = vmatpush2.msra.mxu0 0.0
      %2306 = vmatprep.subr.mxu0 0.0
      %2307 = vmatpush2.msra.mxu0 0.0
      %2308 = vmatprep.subr.mxu0 0.0
      %2309 = vmatpush2.msra.mxu0 0.0
      %2310 = vmatprep.subr.mxu0 0.0
      %2311 = vmatpush2.msra.mxu0 0.0
      %2312 = vmatprep.mubr.f32.mxu0 0.0
      %2313 = vmatmul.mubr.f32.gmra.mxu0 %v2150
      %v2314 = vpop.f32.mrf.mxu0
      %v2315 = vadd.f32 0.0, %v2314
      %v2316 = vpop.f32.mrf.mxu0
      %v2317 = vadd.f32 0.0, %v2316
      %2318 = vmatprep.mubr.f32.mxu0 0.0
      %2319 = vmatmul.mubr.f32.gmra.mxu0 %v2153
      %v2320 = vpop.f32.mrf.mxu0
      %v2321 = vadd.f32 0.0, %v2320
      %v2322 = vpop.f32.mrf.mxu0
      %v2323 = vadd.f32 0.0, %v2322
      %2324 = vdwg.mxu0
      %2325 = vmatprep.subr.mxu0 0.0
      %2326 = vmatpush1.msra.mxu0 0.0
      %2327 = vmatprep.subr.mxu0 0.0
      %2328 = vmatpush1.msra.mxu0 0.0
      %2329 = vmatprep.subr.mxu0 0.0
      %2330 = vmatpush1.msra.mxu0 0.0
      %2331 = vmatprep.subr.mxu0 0.0
      %2332 = vmatpush1.msra.mxu0 0.0
      %2333 = vmatprep.subr.mxu0 0.0
      %2334 = vmatpush1.msra.mxu0 0.0
      %2335 = vmatprep.subr.mxu0 0.0
      %2336 = vmatpush1.msra.mxu0 0.0
      %2337 = vmatprep.subr.mxu0 0.0
      %2338 = vmatpush1.msra.mxu0 0.0
      %2339 = vmatprep.subr.mxu0 0.0
      %2340 = vmatpush1.msra.mxu0 0.0
      %2341 = vmatprep.subr.mxu0 0.0
      %2342 = vmatpush1.msra.mxu0 0.0
      %2343 = vmatprep.subr.mxu0 0.0
      %2344 = vmatpush1.msra.mxu0 0.0
      %2345 = vmatprep.subr.mxu0 0.0
      %2346 = vmatpush1.msra.mxu0 0.0
      %2347 = vmatprep.subr.mxu0 0.0
      %2348 = vmatpush1.msra.mxu0 0.0
      %2349 = vmatprep.subr.mxu0 0.0
      %2350 = vmatpush1.msra.mxu0 0.0
      %2351 = vmatprep.subr.mxu0 0.0
      %2352 = vmatpush1.msra.mxu0 0.0
      %2353 = vmatprep.subr.mxu0 0.0
      %2354 = vmatpush1.msra.mxu0 0.0
      %2355 = vmatprep.subr.mxu0 %v2165
      %2356 = vmatpush1.msra.mxu0 %v2163
      %2357 = vmatprep.subr.mxu0 0.0
      %2358 = vmatpush2.msra.mxu0 0.0
      %2359 = vmatprep.subr.mxu0 0.0
      %2360 = vmatpush2.msra.mxu0 0.0
      %2361 = vmatprep.subr.mxu0 0.0
      %2362 = vmatpush2.msra.mxu0 0.0
      %2363 = vmatprep.subr.mxu0 0.0
      %2364 = vmatpush2.msra.mxu0 0.0
      %2365 = vmatprep.subr.mxu0 0.0
      %2366 = vmatpush2.msra.mxu0 0.0
      %2367 = vmatprep.subr.mxu0 0.0
      %2368 = vmatpush2.msra.mxu0 0.0
      %2369 = vmatprep.subr.mxu0 0.0
      %2370 = vmatpush2.msra.mxu0 0.0
      %2371 = vmatprep.subr.mxu0 0.0
      %2372 = vmatpush2.msra.mxu0 0.0
      %2373 = vmatprep.subr.mxu0 0.0
      %2374 = vmatpush2.msra.mxu0 0.0
      %2375 = vmatprep.subr.mxu0 0.0
      %2376 = vmatpush2.msra.mxu0 0.0
      %2377 = vmatprep.subr.mxu0 0.0
      %2378 = vmatpush2.msra.mxu0 0.0
      %2379 = vmatprep.subr.mxu0 0.0
      %2380 = vmatpush2.msra.mxu0 0.0
      %2381 = vmatprep.subr.mxu0 0.0
      %2382 = vmatpush2.msra.mxu0 0.0
      %2383 = vmatprep.subr.mxu0 0.0
      %2384 = vmatpush2.msra.mxu0 0.0
      %2385 = vmatprep.subr.mxu0 0.0
      %2386 = vmatpush2.msra.mxu0 0.0
      %2387 = vmatprep.subr.mxu0 0.0
      %2388 = vmatpush2.msra.mxu0 0.0
      %2389 = vmatprep.mubr.f32.mxu0 0.0
      %2390 = vmatmul.mubr.f32.gmra.mxu0 %v2150
      %v2391 = vpop.f32.mrf.mxu0
      %v2392 = vadd.f32 0.0, %v2391
      %v2393 = vpop.f32.mrf.mxu0
      %v2394 = vadd.f32 0.0, %v2393
      %2395 = vmatprep.mubr.f32.mxu0 0.0
      %2396 = vmatmul.mubr.f32.gmra.mxu0 %v2153
      %v2397 = vpop.f32.mrf.mxu0
      %v2398 = vadd.f32 0.0, %v2397
      %v2399 = vpop.f32.mrf.mxu0
      %v2400 = vadd.f32 0.0, %v2399
      %2401 = vdwg.mxu0
      %2402 = vmatprep.subr.mxu0 0.0
      %2403 = vmatpush1.msra.mxu0 0.0
      %2404 = vmatprep.subr.mxu0 0.0
      %2405 = vmatpush1.msra.mxu0 0.0
      %2406 = vmatprep.subr.mxu0 0.0
      %2407 = vmatpush1.msra.mxu0 0.0
      %2408 = vmatprep.subr.mxu0 0.0
      %2409 = vmatpush1.msra.mxu0 0.0
      %2410 = vmatprep.subr.mxu0 0.0
      %2411 = vmatpush1.msra.mxu0 0.0
      %2412 = vmatprep.subr.mxu0 0.0
      %2413 = vmatpush1.msra.mxu0 0.0
      %2414 = vmatprep.subr.mxu0 0.0
      %2415 = vmatpush1.msra.mxu0 0.0
      %2416 = vmatprep.subr.mxu0 0.0
      %2417 = vmatpush1.msra.mxu0 0.0
      %2418 = vmatprep.subr.mxu0 0.0
      %2419 = vmatpush1.msra.mxu0 0.0
      %2420 = vmatprep.subr.mxu0 0.0
      %2421 = vmatpush1.msra.mxu0 0.0
      %2422 = vmatprep.subr.mxu0 0.0
      %2423 = vmatpush1.msra.mxu0 0.0
      %2424 = vmatprep.subr.mxu0 0.0
      %2425 = vmatpush1.msra.mxu0 0.0
      %2426 = vmatprep.subr.mxu0 0.0
      %2427 = vmatpush1.msra.mxu0 0.0
      %2428 = vmatprep.subr.mxu0 0.0
      %2429 = vmatpush1.msra.mxu0 0.0
      %2430 = vmatprep.subr.mxu0 0.0
      %2431 = vmatpush1.msra.mxu0 0.0
      %2432 = vmatprep.subr.mxu0 %v2169
      %2433 = vmatpush1.msra.mxu0 %v2167
      %2434 = vmatprep.subr.mxu0 0.0
      %2435 = vmatpush2.msra.mxu0 0.0
      %2436 = vmatprep.subr.mxu0 0.0
      %2437 = vmatpush2.msra.mxu0 0.0
      %2438 = vmatprep.subr.mxu0 0.0
      %2439 = vmatpush2.msra.mxu0 0.0
      %2440 = vmatprep.subr.mxu0 0.0
      %2441 = vmatpush2.msra.mxu0 0.0
      %2442 = vmatprep.subr.mxu0 0.0
      %2443 = vmatpush2.msra.mxu0 0.0
      %2444 = vmatprep.subr.mxu0 0.0
      %2445 = vmatpush2.msra.mxu0 0.0
      %2446 = vmatprep.subr.mxu0 0.0
      %2447 = vmatpush2.msra.mxu0 0.0
      %2448 = vmatprep.subr.mxu0 0.0
      %2449 = vmatpush2.msra.mxu0 0.0
      %2450 = vmatprep.subr.mxu0 0.0
      %2451 = vmatpush2.msra.mxu0 0.0
      %2452 = vmatprep.subr.mxu0 0.0
      %2453 = vmatpush2.msra.mxu0 0.0
      %2454 = vmatprep.subr.mxu0 0.0
      %2455 = vmatpush2.msra.mxu0 0.0
      %2456 = vmatprep.subr.mxu0 0.0
      %2457 = vmatpush2.msra.mxu0 0.0
      %2458 = vmatprep.subr.mxu0 0.0
      %2459 = vmatpush2.msra.mxu0 0.0
      %2460 = vmatprep.subr.mxu0 0.0
      %2461 = vmatpush2.msra.mxu0 0.0
      %2462 = vmatprep.subr.mxu0 0.0
      %2463 = vmatpush2.msra.mxu0 0.0
      %2464 = vmatprep.subr.mxu0 0.0
      %2465 = vmatpush2.msra.mxu0 0.0
      %2466 = vmatprep.mubr.f32.mxu0 0.0
      %2467 = vmatmul.mubr.f32.gmra.mxu0 %v2150
      %v2468 = vpop.f32.mrf.mxu0
      %v2469 = vadd.f32 0.0, %v2468
      %v2470 = vpop.f32.mrf.mxu0
      %v2471 = vadd.f32 0.0, %v2470
      %2472 = vmatprep.mubr.f32.mxu0 0.0
      %2473 = vmatmul.mubr.f32.gmra.mxu0 %v2153
      %v2474 = vpop.f32.mrf.mxu0
      %v2475 = vadd.f32 0.0, %v2474
      %v2476 = vpop.f32.mrf.mxu0
      %v2477 = vadd.f32 0.0, %v2476
      %2478 = vdwg.mxu0
      %v2479 = vadd.f32 %v2094, %v2238
      %v2480 = vadd.f32 %v2095, %v2240
      %v2481 = vadd.f32 %v2096, %v2315
      %v2482 = vadd.f32 %v2097, %v2317
      %v2483 = vadd.f32 %v2098, %v2392
      %v2484 = vadd.f32 %v2099, %v2394
      %v2485 = vadd.f32 %v2100, %v2469
      %v2486 = vadd.f32 %v2101, %v2471
      %v2487 = vadd.f32 %v2102, %v2244
      %v2488 = vadd.f32 %v2103, %v2246
      %v2489 = vadd.f32 %v2104, %v2321
      %v2490 = vadd.f32 %v2105, %v2323
      %v2491 = vadd.f32 %v2106, %v2398
      %v2492 = vadd.f32 %v2107, %v2400
      %v2493 = vadd.f32 %v2108, %v2475
      %v2494 = vadd.f32 %v2109, %v2477
      %v2495 = vld [vmem:[%s246] sm:$0xff]
      %v2496 = vld [vmem:[%s246 + $0x8] sm:$0xff]
      %v2497 = vld [vmem:[%s246 + $0x10] sm:$0xff]
      %v2498 = vld [vmem:[%s246 + $0x18] sm:$0xff]
      %s2499 = scalar_lea.vmem %s1, 96
      %v2500 = vld [vmem:[%s2499] sm:$0xff]
      %v2501 = vld [vmem:[%s2499 + $0x8] sm:$0xff]
      %v2506 = vcombine.high %v2495, %v2495
      %v2507 = vcombine.high %v2496, %v2496
      %v2508 = vcombine.high %v2497, %v2497
      %v2509 = vcombine.high %v2498, %v2498
      %2510 = vrot.lane.b32.xlu0 %v2495, 92
      %v2511 = vpop.permute.xlu0 %2510
      %2512 = vrot.lane.b32.xlu0 %v2506, 92
      %v2513 = vpop.permute.xlu0 %2512
      %2514 = vrot.lane.b32.xlu0 %v2496, 92
      %v2515 = vpop.permute.xlu0 %2514
      %2516 = vrot.lane.b32.xlu0 %v2507, 92
      %v2517 = vpop.permute.xlu0 %2516
      %2518 = vrot.lane.b32.xlu0 %v2497, 92
      %v2519 = vpop.permute.xlu0 %2518
      %2520 = vrot.lane.b32.xlu0 %v2508, 92
      %v2521 = vpop.permute.xlu0 %2520
      %2522 = vrot.lane.b32.xlu0 %v2498, 92
      %v2523 = vpop.permute.xlu0 %2522
      %2524 = vrot.lane.b32.xlu0 %v2509, 92
      %v2525 = vpop.permute.xlu0 %2524
      %vm2526 = vcmask 752640
      %v2527 = vsel %vm2526, %v2511, %v2513
      %v2528 = vsel %vm2526, %v2513, %v2515
      %v2529 = vsel %vm2526, %v2515, %v2517
      %v2530 = vsel %vm2526, %v2517, %v2519
      %v2531 = vsel %vm2526, %v2519, %v2521
      %v2532 = vsel %vm2526, %v2521, %v2523
      %v2533 = vsel %vm2526, %v2523, %v2525
      %v2535 = vsel %vm293, %v2500, 0
      %v2538 = vsel %vm293, %v2501, 0
      %v2540 = vsel %vm300, %v2527, 0
      %v2542 = vsel %vm300, %v2528, 0
      %v2544 = vsel %vm300, %v2529, 0
      %v2546 = vsel %vm300, %v2530, 0
      %v2548 = vsel %vm300, %v2531, 0
      %v2550 = vsel %vm300, %v2532, 0
      %v2552 = vsel %vm300, %v2533, 0
      %v2554 = vsel %vm300, %v2525, 0
      %2556 = vmatprep.subr.mxu0 0.0
      %2557 = vmatpush1.msra.mxu0 0.0
      %2558 = vmatprep.subr.mxu0 0.0
      %2559 = vmatpush1.msra.mxu0 0.0
      %2560 = vmatprep.subr.mxu0 0.0
      %2561 = vmatpush1.msra.mxu0 0.0
      %2562 = vmatprep.subr.mxu0 0.0
      %2563 = vmatpush1.msra.mxu0 0.0
      %2564 = vmatprep.subr.mxu0 0.0
      %2565 = vmatpush1.msra.mxu0 0.0
      %2566 = vmatprep.subr.mxu0 0.0
      %2567 = vmatpush1.msra.mxu0 0.0
      %2568 = vmatprep.subr.mxu0 0.0
      %2569 = vmatpush1.msra.mxu0 0.0
      %2570 = vmatprep.subr.mxu0 0.0
      %2571 = vmatpush1.msra.mxu0 0.0
      %2572 = vmatprep.subr.mxu0 0.0
      %2573 = vmatpush1.msra.mxu0 0.0
      %2574 = vmatprep.subr.mxu0 0.0
      %2575 = vmatpush1.msra.mxu0 0.0
      %2576 = vmatprep.subr.mxu0 0.0
      %2577 = vmatpush1.msra.mxu0 0.0
      %2578 = vmatprep.subr.mxu0 0.0
      %2579 = vmatpush1.msra.mxu0 0.0
      %2580 = vmatprep.subr.mxu0 0.0
      %2581 = vmatpush1.msra.mxu0 0.0
      %2582 = vmatprep.subr.mxu0 0.0
      %2583 = vmatpush1.msra.mxu0 0.0
      %2584 = vmatprep.subr.mxu0 0.0
      %2585 = vmatpush1.msra.mxu0 0.0
      %2586 = vmatprep.subr.mxu0 %v2542
      %2587 = vmatpush1.msra.mxu0 %v2540
      %2588 = vmatprep.subr.mxu0 0.0
      %2589 = vmatpush2.msra.mxu0 0.0
      %2590 = vmatprep.subr.mxu0 0.0
      %2591 = vmatpush2.msra.mxu0 0.0
      %2592 = vmatprep.subr.mxu0 0.0
      %2593 = vmatpush2.msra.mxu0 0.0
      %2594 = vmatprep.subr.mxu0 0.0
      %2595 = vmatpush2.msra.mxu0 0.0
      %2596 = vmatprep.subr.mxu0 0.0
      %2597 = vmatpush2.msra.mxu0 0.0
      %2598 = vmatprep.subr.mxu0 0.0
      %2599 = vmatpush2.msra.mxu0 0.0
      %2600 = vmatprep.subr.mxu0 0.0
      %2601 = vmatpush2.msra.mxu0 0.0
      %2602 = vmatprep.subr.mxu0 0.0
      %2603 = vmatpush2.msra.mxu0 0.0
      %2604 = vmatprep.subr.mxu0 0.0
      %2605 = vmatpush2.msra.mxu0 0.0
      %2606 = vmatprep.subr.mxu0 0.0
      %2607 = vmatpush2.msra.mxu0 0.0
      %2608 = vmatprep.subr.mxu0 0.0
      %2609 = vmatpush2.msra.mxu0 0.0
      %2610 = vmatprep.subr.mxu0 0.0
      %2611 = vmatpush2.msra.mxu0 0.0
      %2612 = vmatprep.subr.mxu0 0.0
      %2613 = vmatpush2.msra.mxu0 0.0
      %2614 = vmatprep.subr.mxu0 0.0
      %2615 = vmatpush2.msra.mxu0 0.0
      %2616 = vmatprep.subr.mxu0 0.0
      %2617 = vmatpush2.msra.mxu0 0.0
      %2618 = vmatprep.subr.mxu0 0.0
      %2619 = vmatpush2.msra.mxu0 0.0
      %2620 = vmatprep.mubr.f32.mxu0 0.0
      %2621 = vmatmul.mubr.f32.gmra.mxu0 %v2535
      %v2622 = vpop.f32.mrf.mxu0
      %v2623 = vadd.f32 0.0, %v2622
      %v2624 = vpop.f32.mrf.mxu0
      %v2625 = vadd.f32 0.0, %v2624
      %2626 = vmatprep.mubr.f32.mxu0 0.0
      %2627 = vmatmul.mubr.f32.gmra.mxu0 %v2538
      %v2628 = vpop.f32.mrf.mxu0
      %v2629 = vadd.f32 0.0, %v2628
      %v2630 = vpop.f32.mrf.mxu0
      %v2631 = vadd.f32 0.0, %v2630
      %2632 = vdwg.mxu0
      %2633 = vmatprep.subr.mxu0 0.0
      %2634 = vmatpush1.msra.mxu0 0.0
      %2635 = vmatprep.subr.mxu0 0.0
      %2636 = vmatpush1.msra.mxu0 0.0
      %2637 = vmatprep.subr.mxu0 0.0
      %2638 = vmatpush1.msra.mxu0 0.0
      %2639 = vmatprep.subr.mxu0 0.0
      %2640 = vmatpush1.msra.mxu0 0.0
      %2641 = vmatprep.subr.mxu0 0.0
      %2642 = vmatpush1.msra.mxu0 0.0
      %2643 = vmatprep.subr.mxu0 0.0
      %2644 = vmatpush1.msra.mxu0 0.0
      %2645 = vmatprep.subr.mxu0 0.0
      %2646 = vmatpush1.msra.mxu0 0.0
      %2647 = vmatprep.subr.mxu0 0.0
      %2648 = vmatpush1.msra.mxu0 0.0
      %2649 = vmatprep.subr.mxu0 0.0
      %2650 = vmatpush1.msra.mxu0 0.0
      %2651 = vmatprep.subr.mxu0 0.0
      %2652 = vmatpush1.msra.mxu0 0.0
      %2653 = vmatprep.subr.mxu0 0.0
      %2654 = vmatpush1.msra.mxu0 0.0
      %2655 = vmatprep.subr.mxu0 0.0
      %2656 = vmatpush1.msra.mxu0 0.0
      %2657 = vmatprep.subr.mxu0 0.0
      %2658 = vmatpush1.msra.mxu0 0.0
      %2659 = vmatprep.subr.mxu0 0.0
      %2660 = vmatpush1.msra.mxu0 0.0
      %2661 = vmatprep.subr.mxu0 0.0
      %2662 = vmatpush1.msra.mxu0 0.0
      %2663 = vmatprep.subr.mxu0 %v2546
      %2664 = vmatpush1.msra.mxu0 %v2544
      %2665 = vmatprep.subr.mxu0 0.0
      %2666 = vmatpush2.msra.mxu0 0.0
      %2667 = vmatprep.subr.mxu0 0.0
      %2668 = vmatpush2.msra.mxu0 0.0
      %2669 = vmatprep.subr.mxu0 0.0
      %2670 = vmatpush2.msra.mxu0 0.0
      %2671 = vmatprep.subr.mxu0 0.0
      %2672 = vmatpush2.msra.mxu0 0.0
      %2673 = vmatprep.subr.mxu0 0.0
      %2674 = vmatpush2.msra.mxu0 0.0
      %2675 = vmatprep.subr.mxu0 0.0
      %2676 = vmatpush2.msra.mxu0 0.0
      %2677 = vmatprep.subr.mxu0 0.0
      %2678 = vmatpush2.msra.mxu0 0.0
      %2679 = vmatprep.subr.mxu0 0.0
      %2680 = vmatpush2.msra.mxu0 0.0
      %2681 = vmatprep.subr.mxu0 0.0
      %2682 = vmatpush2.msra.mxu0 0.0
      %2683 = vmatprep.subr.mxu0 0.0
      %2684 = vmatpush2.msra.mxu0 0.0
      %2685 = vmatprep.subr.mxu0 0.0
      %2686 = vmatpush2.msra.mxu0 0.0
      %2687 = vmatprep.subr.mxu0 0.0
      %2688 = vmatpush2.msra.mxu0 0.0
      %2689 = vmatprep.subr.mxu0 0.0
      %2690 = vmatpush2.msra.mxu0 0.0
      %2691 = vmatprep.subr.mxu0 0.0
      %2692 = vmatpush2.msra.mxu0 0.0
      %2693 = vmatprep.subr.mxu0 0.0
      %2694 = vmatpush2.msra.mxu0 0.0
      %2695 = vmatprep.subr.mxu0 0.0
      %2696 = vmatpush2.msra.mxu0 0.0
      %2697 = vmatprep.mubr.f32.mxu0 0.0
      %2698 = vmatmul.mubr.f32.gmra.mxu0 %v2535
      %v2699 = vpop.f32.mrf.mxu0
      %v2700 = vadd.f32 0.0, %v2699
      %v2701 = vpop.f32.mrf.mxu0
      %v2702 = vadd.f32 0.0, %v2701
      %2703 = vmatprep.mubr.f32.mxu0 0.0
      %2704 = vmatmul.mubr.f32.gmra.mxu0 %v2538
      %v2705 = vpop.f32.mrf.mxu0
      %v2706 = vadd.f32 0.0, %v2705
      %v2707 = vpop.f32.mrf.mxu0
      %v2708 = vadd.f32 0.0, %v2707
      %2709 = vdwg.mxu0
      %2710 = vmatprep.subr.mxu0 0.0
      %2711 = vmatpush1.msra.mxu0 0.0
      %2712 = vmatprep.subr.mxu0 0.0
      %2713 = vmatpush1.msra.mxu0 0.0
      %2714 = vmatprep.subr.mxu0 0.0
      %2715 = vmatpush1.msra.mxu0 0.0
      %2716 = vmatprep.subr.mxu0 0.0
      %2717 = vmatpush1.msra.mxu0 0.0
      %2718 = vmatprep.subr.mxu0 0.0
      %2719 = vmatpush1.msra.mxu0 0.0
      %2720 = vmatprep.subr.mxu0 0.0
      %2721 = vmatpush1.msra.mxu0 0.0
      %2722 = vmatprep.subr.mxu0 0.0
      %2723 = vmatpush1.msra.mxu0 0.0
      %2724 = vmatprep.subr.mxu0 0.0
      %2725 = vmatpush1.msra.mxu0 0.0
      %2726 = vmatprep.subr.mxu0 0.0
      %2727 = vmatpush1.msra.mxu0 0.0
      %2728 = vmatprep.subr.mxu0 0.0
      %2729 = vmatpush1.msra.mxu0 0.0
      %2730 = vmatprep.subr.mxu0 0.0
      %2731 = vmatpush1.msra.mxu0 0.0
      %2732 = vmatprep.subr.mxu0 0.0
      %2733 = vmatpush1.msra.mxu0 0.0
      %2734 = vmatprep.subr.mxu0 0.0
      %2735 = vmatpush1.msra.mxu0 0.0
      %2736 = vmatprep.subr.mxu0 0.0
      %2737 = vmatpush1.msra.mxu0 0.0
      %2738 = vmatprep.subr.mxu0 0.0
      %2739 = vmatpush1.msra.mxu0 0.0
      %2740 = vmatprep.subr.mxu0 %v2550
      %2741 = vmatpush1.msra.mxu0 %v2548
      %2742 = vmatprep.subr.mxu0 0.0
      %2743 = vmatpush2.msra.mxu0 0.0
      %2744 = vmatprep.subr.mxu0 0.0
      %2745 = vmatpush2.msra.mxu0 0.0
      %2746 = vmatprep.subr.mxu0 0.0
      %2747 = vmatpush2.msra.mxu0 0.0
      %2748 = vmatprep.subr.mxu0 0.0
      %2749 = vmatpush2.msra.mxu0 0.0
      %2750 = vmatprep.subr.mxu0 0.0
      %2751 = vmatpush2.msra.mxu0 0.0
      %2752 = vmatprep.subr.mxu0 0.0
      %2753 = vmatpush2.msra.mxu0 0.0
      %2754 = vmatprep.subr.mxu0 0.0
      %2755 = vmatpush2.msra.mxu0 0.0
      %2756 = vmatprep.subr.mxu0 0.0
      %2757 = vmatpush2.msra.mxu0 0.0
      %2758 = vmatprep.subr.mxu0 0.0
      %2759 = vmatpush2.msra.mxu0 0.0
      %2760 = vmatprep.subr.mxu0 0.0
      %2761 = vmatpush2.msra.mxu0 0.0
      %2762 = vmatprep.subr.mxu0 0.0
      %2763 = vmatpush2.msra.mxu0 0.0
      %2764 = vmatprep.subr.mxu0 0.0
      %2765 = vmatpush2.msra.mxu0 0.0
      %2766 = vmatprep.subr.mxu0 0.0
      %2767 = vmatpush2.msra.mxu0 0.0
      %2768 = vmatprep.subr.mxu0 0.0
      %2769 = vmatpush2.msra.mxu0 0.0
      %2770 = vmatprep.subr.mxu0 0.0
      %2771 = vmatpush2.msra.mxu0 0.0
      %2772 = vmatprep.subr.mxu0 0.0
      %2773 = vmatpush2.msra.mxu0 0.0
      %2774 = vmatprep.mubr.f32.mxu0 0.0
      %2775 = vmatmul.mubr.f32.gmra.mxu0 %v2535
      %v2776 = vpop.f32.mrf.mxu0
      %v2777 = vadd.f32 0.0, %v2776
      %v2778 = vpop.f32.mrf.mxu0
      %v2779 = vadd.f32 0.0, %v2778
      %2780 = vmatprep.mubr.f32.mxu0 0.0
      %2781 = vmatmul.mubr.f32.gmra.mxu0 %v2538
      %v2782 = vpop.f32.mrf.mxu0
      %v2783 = vadd.f32 0.0, %v2782
      %v2784 = vpop.f32.mrf.mxu0
      %v2785 = vadd.f32 0.0, %v2784
      %2786 = vdwg.mxu0
      %2787 = vmatprep.subr.mxu0 0.0
      %2788 = vmatpush1.msra.mxu0 0.0
      %2789 = vmatprep.subr.mxu0 0.0
      %2790 = vmatpush1.msra.mxu0 0.0
      %2791 = vmatprep.subr.mxu0 0.0
      %2792 = vmatpush1.msra.mxu0 0.0
      %2793 = vmatprep.subr.mxu0 0.0
      %2794 = vmatpush1.msra.mxu0 0.0
      %2795 = vmatprep.subr.mxu0 0.0
      %2796 = vmatpush1.msra.mxu0 0.0
      %2797 = vmatprep.subr.mxu0 0.0
      %2798 = vmatpush1.msra.mxu0 0.0
      %2799 = vmatprep.subr.mxu0 0.0
      %2800 = vmatpush1.msra.mxu0 0.0
      %2801 = vmatprep.subr.mxu0 0.0
      %2802 = vmatpush1.msra.mxu0 0.0
      %2803 = vmatprep.subr.mxu0 0.0
      %2804 = vmatpush1.msra.mxu0 0.0
      %2805 = vmatprep.subr.mxu0 0.0
      %2806 = vmatpush1.msra.mxu0 0.0
      %2807 = vmatprep.subr.mxu0 0.0
      %2808 = vmatpush1.msra.mxu0 0.0
      %2809 = vmatprep.subr.mxu0 0.0
      %2810 = vmatpush1.msra.mxu0 0.0
      %2811 = vmatprep.subr.mxu0 0.0
      %2812 = vmatpush1.msra.mxu0 0.0
      %2813 = vmatprep.subr.mxu0 0.0
      %2814 = vmatpush1.msra.mxu0 0.0
      %2815 = vmatprep.subr.mxu0 0.0
      %2816 = vmatpush1.msra.mxu0 0.0
      %2817 = vmatprep.subr.mxu0 %v2554
      %2818 = vmatpush1.msra.mxu0 %v2552
      %2819 = vmatprep.subr.mxu0 0.0
      %2820 = vmatpush2.msra.mxu0 0.0
      %2821 = vmatprep.subr.mxu0 0.0
      %2822 = vmatpush2.msra.mxu0 0.0
      %2823 = vmatprep.subr.mxu0 0.0
      %2824 = vmatpush2.msra.mxu0 0.0
      %2825 = vmatprep.subr.mxu0 0.0
      %2826 = vmatpush2.msra.mxu0 0.0
      %2827 = vmatprep.subr.mxu0 0.0
      %2828 = vmatpush2.msra.mxu0 0.0
      %2829 = vmatprep.subr.mxu0 0.0
      %2830 = vmatpush2.msra.mxu0 0.0
      %2831 = vmatprep.subr.mxu0 0.0
      %2832 = vmatpush2.msra.mxu0 0.0
      %2833 = vmatprep.subr.mxu0 0.0
      %2834 = vmatpush2.msra.mxu0 0.0
      %2835 = vmatprep.subr.mxu0 0.0
      %2836 = vmatpush2.msra.mxu0 0.0
      %2837 = vmatprep.subr.mxu0 0.0
      %2838 = vmatpush2.msra.mxu0 0.0
      %2839 = vmatprep.subr.mxu0 0.0
      %2840 = vmatpush2.msra.mxu0 0.0
      %2841 = vmatprep.subr.mxu0 0.0
      %2842 = vmatpush2.msra.mxu0 0.0
      %2843 = vmatprep.subr.mxu0 0.0
      %2844 = vmatpush2.msra.mxu0 0.0
      %2845 = vmatprep.subr.mxu0 0.0
      %2846 = vmatpush2.msra.mxu0 0.0
      %2847 = vmatprep.subr.mxu0 0.0
      %2848 = vmatpush2.msra.mxu0 0.0
      %2849 = vmatprep.subr.mxu0 0.0
      %2850 = vmatpush2.msra.mxu0 0.0
      %2851 = vmatprep.mubr.f32.mxu0 0.0
      %2852 = vmatmul.mubr.f32.gmra.mxu0 %v2535
      %v2853 = vpop.f32.mrf.mxu0
      %v2854 = vadd.f32 0.0, %v2853
      %v2855 = vpop.f32.mrf.mxu0
      %v2856 = vadd.f32 0.0, %v2855
      %2857 = vmatprep.mubr.f32.mxu0 0.0
      %2858 = vmatmul.mubr.f32.gmra.mxu0 %v2538
      %v2859 = vpop.f32.mrf.mxu0
      %v2860 = vadd.f32 0.0, %v2859
      %v2861 = vpop.f32.mrf.mxu0
      %v2862 = vadd.f32 0.0, %v2861
      %2863 = vdwg.mxu0
      %v2864 = vadd.f32 %v2479, %v2623
      %v2865 = vadd.f32 %v2480, %v2625
      %v2866 = vadd.f32 %v2481, %v2700
      %v2867 = vadd.f32 %v2482, %v2702
      %v2868 = vadd.f32 %v2483, %v2777
      %v2869 = vadd.f32 %v2484, %v2779
      %v2870 = vadd.f32 %v2485, %v2854
      %v2871 = vadd.f32 %v2486, %v2856
      %v2872 = vadd.f32 %v2487, %v2629
      %v2873 = vadd.f32 %v2488, %v2631
      %v2874 = vadd.f32 %v2489, %v2706
      %v2875 = vadd.f32 %v2490, %v2708
      %v2876 = vadd.f32 %v2491, %v2783
      %v2877 = vadd.f32 %v2492, %v2785
      %v2878 = vadd.f32 %v2493, %v2860
      %v2879 = vadd.f32 %v2494, %v2862
      %v2880 = vld [vmem:[%s246] sm:$0xff]
      %v2881 = vld [vmem:[%s246 + $0x8] sm:$0xff]
      %v2882 = vld [vmem:[%s246 + $0x10] sm:$0xff]
      %v2883 = vld [vmem:[%s246 + $0x18] sm:$0xff]
      %s2884 = scalar_lea.vmem %s1, 112
      %v2885 = vld [vmem:[%s2884] sm:$0xff]
      %v2886 = vld [vmem:[%s2884 + $0x8] sm:$0xff]
      %v2891 = vcombine.high %v2880, %v2880
      %v2892 = vcombine.high %v2881, %v2881
      %v2893 = vcombine.high %v2882, %v2882
      %v2894 = vcombine.high %v2883, %v2883
      %2895 = vrot.lane.b32.xlu0 %v2880, 91
      %v2896 = vpop.permute.xlu0 %2895
      %2897 = vrot.lane.b32.xlu0 %v2891, 91
      %v2898 = vpop.permute.xlu0 %2897
      %2899 = vrot.lane.b32.xlu0 %v2881, 91
      %v2900 = vpop.permute.xlu0 %2899
      %2901 = vrot.lane.b32.xlu0 %v2892, 91
      %v2902 = vpop.permute.xlu0 %2901
      %2903 = vrot.lane.b32.xlu0 %v2882, 91
      %v2904 = vpop.permute.xlu0 %2903
      %2905 = vrot.lane.b32.xlu0 %v2893, 91
      %v2906 = vpop.permute.xlu0 %2905
      %2907 = vrot.lane.b32.xlu0 %v2883, 91
      %v2908 = vpop.permute.xlu0 %2907
      %2909 = vrot.lane.b32.xlu0 %v2894, 91
      %v2910 = vpop.permute.xlu0 %2909
      %vm2911 = vcmask 744448
      %v2912 = vsel %vm2911, %v2896, %v2898
      %v2913 = vsel %vm2911, %v2898, %v2900
      %v2914 = vsel %vm2911, %v2900, %v2902
      %v2915 = vsel %vm2911, %v2902, %v2904
      %v2916 = vsel %vm2911, %v2904, %v2906
      %v2917 = vsel %vm2911, %v2906, %v2908
      %v2918 = vsel %vm2911, %v2908, %v2910
      %v2920 = vsel %vm293, %v2885, 0
      %v2923 = vsel %vm293, %v2886, 0
      %v2925 = vsel %vm300, %v2912, 0
      %v2927 = vsel %vm300, %v2913, 0
      %v2929 = vsel %vm300, %v2914, 0
      %v2931 = vsel %vm300, %v2915, 0
      %v2933 = vsel %vm300, %v2916, 0
      %v2935 = vsel %vm300, %v2917, 0
      %v2937 = vsel %vm300, %v2918, 0
      %v2939 = vsel %vm300, %v2910, 0
      %2941 = vmatprep.subr.mxu0 0.0
      %2942 = vmatpush1.msra.mxu0 0.0
      %2943 = vmatprep.subr.mxu0 0.0
      %2944 = vmatpush1.msra.mxu0 0.0
      %2945 = vmatprep.subr.mxu0 0.0
      %2946 = vmatpush1.msra.mxu0 0.0
      %2947 = vmatprep.subr.mxu0 0.0
      %2948 = vmatpush1.msra.mxu0 0.0
      %2949 = vmatprep.subr.mxu0 0.0
      %2950 = vmatpush1.msra.mxu0 0.0
      %2951 = vmatprep.subr.mxu0 0.0
      %2952 = vmatpush1.msra.mxu0 0.0
      %2953 = vmatprep.subr.mxu0 0.0
      %2954 = vmatpush1.msra.mxu0 0.0
      %2955 = vmatprep.subr.mxu0 0.0
      %2956 = vmatpush1.msra.mxu0 0.0
      %2957 = vmatprep.subr.mxu0 0.0
      %2958 = vmatpush1.msra.mxu0 0.0
      %2959 = vmatprep.subr.mxu0 0.0
      %2960 = vmatpush1.msra.mxu0 0.0
      %2961 = vmatprep.subr.mxu0 0.0
      %2962 = vmatpush1.msra.mxu0 0.0
      %2963 = vmatprep.subr.mxu0 0.0
      %2964 = vmatpush1.msra.mxu0 0.0
      %2965 = vmatprep.subr.mxu0 0.0
      %2966 = vmatpush1.msra.mxu0 0.0
      %2967 = vmatprep.subr.mxu0 0.0
      %2968 = vmatpush1.msra.mxu0 0.0
      %2969 = vmatprep.subr.mxu0 0.0
      %2970 = vmatpush1.msra.mxu0 0.0
      %2971 = vmatprep.subr.mxu0 %v2927
      %2972 = vmatpush1.msra.mxu0 %v2925
      %2973 = vmatprep.subr.mxu0 0.0
      %2974 = vmatpush2.msra.mxu0 0.0
      %2975 = vmatprep.subr.mxu0 0.0
      %2976 = vmatpush2.msra.mxu0 0.0
      %2977 = vmatprep.subr.mxu0 0.0
      %2978 = vmatpush2.msra.mxu0 0.0
      %2979 = vmatprep.subr.mxu0 0.0
      %2980 = vmatpush2.msra.mxu0 0.0
      %2981 = vmatprep.subr.mxu0 0.0
      %2982 = vmatpush2.msra.mxu0 0.0
      %2983 = vmatprep.subr.mxu0 0.0
      %2984 = vmatpush2.msra.mxu0 0.0
      %2985 = vmatprep.subr.mxu0 0.0
      %2986 = vmatpush2.msra.mxu0 0.0
      %2987 = vmatprep.subr.mxu0 0.0
      %2988 = vmatpush2.msra.mxu0 0.0
      %2989 = vmatprep.subr.mxu0 0.0
      %2990 = vmatpush2.msra.mxu0 0.0
      %2991 = vmatprep.subr.mxu0 0.0
      %2992 = vmatpush2.msra.mxu0 0.0
      %2993 = vmatprep.subr.mxu0 0.0
      %2994 = vmatpush2.msra.mxu0 0.0
      %2995 = vmatprep.subr.mxu0 0.0
      %2996 = vmatpush2.msra.mxu0 0.0
      %2997 = vmatprep.subr.mxu0 0.0
      %2998 = vmatpush2.msra.mxu0 0.0
      %2999 = vmatprep.subr.mxu0 0.0
      %3000 = vmatpush2.msra.mxu0 0.0
      %3001 = vmatprep.subr.mxu0 0.0
      %3002 = vmatpush2.msra.mxu0 0.0
      %3003 = vmatprep.subr.mxu0 0.0
      %3004 = vmatpush2.msra.mxu0 0.0
      %3005 = vmatprep.mubr.f32.mxu0 0.0
      %3006 = vmatmul.mubr.f32.gmra.mxu0 %v2920
      %v3007 = vpop.f32.mrf.mxu0
      %v3008 = vadd.f32 0.0, %v3007
      %v3009 = vpop.f32.mrf.mxu0
      %v3010 = vadd.f32 0.0, %v3009
      %3011 = vmatprep.mubr.f32.mxu0 0.0
      %3012 = vmatmul.mubr.f32.gmra.mxu0 %v2923
      %v3013 = vpop.f32.mrf.mxu0
      %v3014 = vadd.f32 0.0, %v3013
      %v3015 = vpop.f32.mrf.mxu0
      %v3016 = vadd.f32 0.0, %v3015
      %3017 = vdwg.mxu0
      %3018 = vmatprep.subr.mxu0 0.0
      %3019 = vmatpush1.msra.mxu0 0.0
      %3020 = vmatprep.subr.mxu0 0.0
      %3021 = vmatpush1.msra.mxu0 0.0
      %3022 = vmatprep.subr.mxu0 0.0
      %3023 = vmatpush1.msra.mxu0 0.0
      %3024 = vmatprep.subr.mxu0 0.0
      %3025 = vmatpush1.msra.mxu0 0.0
      %3026 = vmatprep.subr.mxu0 0.0
      %3027 = vmatpush1.msra.mxu0 0.0
      %3028 = vmatprep.subr.mxu0 0.0
      %3029 = vmatpush1.msra.mxu0 0.0
      %3030 = vmatprep.subr.mxu0 0.0
      %3031 = vmatpush1.msra.mxu0 0.0
      %3032 = vmatprep.subr.mxu0 0.0
      %3033 = vmatpush1.msra.mxu0 0.0
      %3034 = vmatprep.subr.mxu0 0.0
      %3035 = vmatpush1.msra.mxu0 0.0
      %3036 = vmatprep.subr.mxu0 0.0
      %3037 = vmatpush1.msra.mxu0 0.0
      %3038 = vmatprep.subr.mxu0 0.0
      %3039 = vmatpush1.msra.mxu0 0.0
      %3040 = vmatprep.subr.mxu0 0.0
      %3041 = vmatpush1.msra.mxu0 0.0
      %3042 = vmatprep.subr.mxu0 0.0
      %3043 = vmatpush1.msra.mxu0 0.0
      %3044 = vmatprep.subr.mxu0 0.0
      %3045 = vmatpush1.msra.mxu0 0.0
      %3046 = vmatprep.subr.mxu0 0.0
      %3047 = vmatpush1.msra.mxu0 0.0
      %3048 = vmatprep.subr.mxu0 %v2931
      %3049 = vmatpush1.msra.mxu0 %v2929
      %3050 = vmatprep.subr.mxu0 0.0
      %3051 = vmatpush2.msra.mxu0 0.0
      %3052 = vmatprep.subr.mxu0 0.0
      %3053 = vmatpush2.msra.mxu0 0.0
      %3054 = vmatprep.subr.mxu0 0.0
      %3055 = vmatpush2.msra.mxu0 0.0
      %3056 = vmatprep.subr.mxu0 0.0
      %3057 = vmatpush2.msra.mxu0 0.0
      %3058 = vmatprep.subr.mxu0 0.0
      %3059 = vmatpush2.msra.mxu0 0.0
      %3060 = vmatprep.subr.mxu0 0.0
      %3061 = vmatpush2.msra.mxu0 0.0
      %3062 = vmatprep.subr.mxu0 0.0
      %3063 = vmatpush2.msra.mxu0 0.0
      %3064 = vmatprep.subr.mxu0 0.0
      %3065 = vmatpush2.msra.mxu0 0.0
      %3066 = vmatprep.subr.mxu0 0.0
      %3067 = vmatpush2.msra.mxu0 0.0
      %3068 = vmatprep.subr.mxu0 0.0
      %3069 = vmatpush2.msra.mxu0 0.0
      %3070 = vmatprep.subr.mxu0 0.0
      %3071 = vmatpush2.msra.mxu0 0.0
      %3072 = vmatprep.subr.mxu0 0.0
      %3073 = vmatpush2.msra.mxu0 0.0
      %3074 = vmatprep.subr.mxu0 0.0
      %3075 = vmatpush2.msra.mxu0 0.0
      %3076 = vmatprep.subr.mxu0 0.0
      %3077 = vmatpush2.msra.mxu0 0.0
      %3078 = vmatprep.subr.mxu0 0.0
      %3079 = vmatpush2.msra.mxu0 0.0
      %3080 = vmatprep.subr.mxu0 0.0
      %3081 = vmatpush2.msra.mxu0 0.0
      %3082 = vmatprep.mubr.f32.mxu0 0.0
      %3083 = vmatmul.mubr.f32.gmra.mxu0 %v2920
      %v3084 = vpop.f32.mrf.mxu0
      %v3085 = vadd.f32 0.0, %v3084
      %v3086 = vpop.f32.mrf.mxu0
      %v3087 = vadd.f32 0.0, %v3086
      %3088 = vmatprep.mubr.f32.mxu0 0.0
      %3089 = vmatmul.mubr.f32.gmra.mxu0 %v2923
      %v3090 = vpop.f32.mrf.mxu0
      %v3091 = vadd.f32 0.0, %v3090
      %v3092 = vpop.f32.mrf.mxu0
      %v3093 = vadd.f32 0.0, %v3092
      %3094 = vdwg.mxu0
      %3095 = vmatprep.subr.mxu0 0.0
      %3096 = vmatpush1.msra.mxu0 0.0
      %3097 = vmatprep.subr.mxu0 0.0
      %3098 = vmatpush1.msra.mxu0 0.0
      %3099 = vmatprep.subr.mxu0 0.0
      %3100 = vmatpush1.msra.mxu0 0.0
      %3101 = vmatprep.subr.mxu0 0.0
      %3102 = vmatpush1.msra.mxu0 0.0
      %3103 = vmatprep.subr.mxu0 0.0
      %3104 = vmatpush1.msra.mxu0 0.0
      %3105 = vmatprep.subr.mxu0 0.0
      %3106 = vmatpush1.msra.mxu0 0.0
      %3107 = vmatprep.subr.mxu0 0.0
      %3108 = vmatpush1.msra.mxu0 0.0
      %3109 = vmatprep.subr.mxu0 0.0
      %3110 = vmatpush1.msra.mxu0 0.0
      %3111 = vmatprep.subr.mxu0 0.0
      %3112 = vmatpush1.msra.mxu0 0.0
      %3113 = vmatprep.subr.mxu0 0.0
      %3114 = vmatpush1.msra.mxu0 0.0
      %3115 = vmatprep.subr.mxu0 0.0
      %3116 = vmatpush1.msra.mxu0 0.0
      %3117 = vmatprep.subr.mxu0 0.0
      %3118 = vmatpush1.msra.mxu0 0.0
      %3119 = vmatprep.subr.mxu0 0.0
      %3120 = vmatpush1.msra.mxu0 0.0
      %3121 = vmatprep.subr.mxu0 0.0
      %3122 = vmatpush1.msra.mxu0 0.0
      %3123 = vmatprep.subr.mxu0 0.0
      %3124 = vmatpush1.msra.mxu0 0.0
      %3125 = vmatprep.subr.mxu0 %v2935
      %3126 = vmatpush1.msra.mxu0 %v2933
      %3127 = vmatprep.subr.mxu0 0.0
      %3128 = vmatpush2.msra.mxu0 0.0
      %3129 = vmatprep.subr.mxu0 0.0
      %3130 = vmatpush2.msra.mxu0 0.0
      %3131 = vmatprep.subr.mxu0 0.0
      %3132 = vmatpush2.msra.mxu0 0.0
      %3133 = vmatprep.subr.mxu0 0.0
      %3134 = vmatpush2.msra.mxu0 0.0
      %3135 = vmatprep.subr.mxu0 0.0
      %3136 = vmatpush2.msra.mxu0 0.0
      %3137 = vmatprep.subr.mxu0 0.0
      %3138 = vmatpush2.msra.mxu0 0.0
      %3139 = vmatprep.subr.mxu0 0.0
      %3140 = vmatpush2.msra.mxu0 0.0
      %3141 = vmatprep.subr.mxu0 0.0
      %3142 = vmatpush2.msra.mxu0 0.0
      %3143 = vmatprep.subr.mxu0 0.0
      %3144 = vmatpush2.msra.mxu0 0.0
      %3145 = vmatprep.subr.mxu0 0.0
      %3146 = vmatpush2.msra.mxu0 0.0
      %3147 = vmatprep.subr.mxu0 0.0
      %3148 = vmatpush2.msra.mxu0 0.0
      %3149 = vmatprep.subr.mxu0 0.0
      %3150 = vmatpush2.msra.mxu0 0.0
      %3151 = vmatprep.subr.mxu0 0.0
      %3152 = vmatpush2.msra.mxu0 0.0
      %3153 = vmatprep.subr.mxu0 0.0
      %3154 = vmatpush2.msra.mxu0 0.0
      %3155 = vmatprep.subr.mxu0 0.0
      %3156 = vmatpush2.msra.mxu0 0.0
      %3157 = vmatprep.subr.mxu0 0.0
      %3158 = vmatpush2.msra.mxu0 0.0
      %3159 = vmatprep.mubr.f32.mxu0 0.0
      %3160 = vmatmul.mubr.f32.gmra.mxu0 %v2920
      %v3161 = vpop.f32.mrf.mxu0
      %v3162 = vadd.f32 0.0, %v3161
      %v3163 = vpop.f32.mrf.mxu0
      %v3164 = vadd.f32 0.0, %v3163
      %3165 = vmatprep.mubr.f32.mxu0 0.0
      %3166 = vmatmul.mubr.f32.gmra.mxu0 %v2923
      %v3167 = vpop.f32.mrf.mxu0
      %v3168 = vadd.f32 0.0, %v3167
      %v3169 = vpop.f32.mrf.mxu0
      %v3170 = vadd.f32 0.0, %v3169
      %3171 = vdwg.mxu0
      %3172 = vmatprep.subr.mxu0 0.0
      %3173 = vmatpush1.msra.mxu0 0.0
      %3174 = vmatprep.subr.mxu0 0.0
      %3175 = vmatpush1.msra.mxu0 0.0
      %3176 = vmatprep.subr.mxu0 0.0
      %3177 = vmatpush1.msra.mxu0 0.0
      %3178 = vmatprep.subr.mxu0 0.0
      %3179 = vmatpush1.msra.mxu0 0.0
      %3180 = vmatprep.subr.mxu0 0.0
      %3181 = vmatpush1.msra.mxu0 0.0
      %3182 = vmatprep.subr.mxu0 0.0
      %3183 = vmatpush1.msra.mxu0 0.0
      %3184 = vmatprep.subr.mxu0 0.0
      %3185 = vmatpush1.msra.mxu0 0.0
      %3186 = vmatprep.subr.mxu0 0.0
      %3187 = vmatpush1.msra.mxu0 0.0
      %3188 = vmatprep.subr.mxu0 0.0
      %3189 = vmatpush1.msra.mxu0 0.0
      %3190 = vmatprep.subr.mxu0 0.0
      %3191 = vmatpush1.msra.mxu0 0.0
      %3192 = vmatprep.subr.mxu0 0.0
      %3193 = vmatpush1.msra.mxu0 0.0
      %3194 = vmatprep.subr.mxu0 0.0
      %3195 = vmatpush1.msra.mxu0 0.0
      %3196 = vmatprep.subr.mxu0 0.0
      %3197 = vmatpush1.msra.mxu0 0.0
      %3198 = vmatprep.subr.mxu0 0.0
      %3199 = vmatpush1.msra.mxu0 0.0
      %3200 = vmatprep.subr.mxu0 0.0
      %3201 = vmatpush1.msra.mxu0 0.0
      %3202 = vmatprep.subr.mxu0 %v2939
      %3203 = vmatpush1.msra.mxu0 %v2937
      %3204 = vmatprep.subr.mxu0 0.0
      %3205 = vmatpush2.msra.mxu0 0.0
      %3206 = vmatprep.subr.mxu0 0.0
      %3207 = vmatpush2.msra.mxu0 0.0
      %3208 = vmatprep.subr.mxu0 0.0
      %3209 = vmatpush2.msra.mxu0 0.0
      %3210 = vmatprep.subr.mxu0 0.0
      %3211 = vmatpush2.msra.mxu0 0.0
      %3212 = vmatprep.subr.mxu0 0.0
      %3213 = vmatpush2.msra.mxu0 0.0
      %3214 = vmatprep.subr.mxu0 0.0
      %3215 = vmatpush2.msra.mxu0 0.0
      %3216 = vmatprep.subr.mxu0 0.0
      %3217 = vmatpush2.msra.mxu0 0.0
      %3218 = vmatprep.subr.mxu0 0.0
      %3219 = vmatpush2.msra.mxu0 0.0
      %3220 = vmatprep.subr.mxu0 0.0
      %3221 = vmatpush2.msra.mxu0 0.0
      %3222 = vmatprep.subr.mxu0 0.0
      %3223 = vmatpush2.msra.mxu0 0.0
      %3224 = vmatprep.subr.mxu0 0.0
      %3225 = vmatpush2.msra.mxu0 0.0
      %3226 = vmatprep.subr.mxu0 0.0
      %3227 = vmatpush2.msra.mxu0 0.0
      %3228 = vmatprep.subr.mxu0 0.0
      %3229 = vmatpush2.msra.mxu0 0.0
      %3230 = vmatprep.subr.mxu0 0.0
      %3231 = vmatpush2.msra.mxu0 0.0
      %3232 = vmatprep.subr.mxu0 0.0
      %3233 = vmatpush2.msra.mxu0 0.0
      %3234 = vmatprep.subr.mxu0 0.0
      %3235 = vmatpush2.msra.mxu0 0.0
      %3236 = vmatprep.mubr.f32.mxu0 0.0
      %3237 = vmatmul.mubr.f32.gmra.mxu0 %v2920
      %v3238 = vpop.f32.mrf.mxu0
      %v3239 = vadd.f32 0.0, %v3238
      %v3240 = vpop.f32.mrf.mxu0
      %v3241 = vadd.f32 0.0, %v3240
      %3242 = vmatprep.mubr.f32.mxu0 0.0
      %3243 = vmatmul.mubr.f32.gmra.mxu0 %v2923
      %v3244 = vpop.f32.mrf.mxu0
      %v3245 = vadd.f32 0.0, %v3244
      %v3246 = vpop.f32.mrf.mxu0
      %v3247 = vadd.f32 0.0, %v3246
      %3248 = vdwg.mxu0
      %v3249 = vadd.f32 %v2864, %v3008
      %v3250 = vadd.f32 %v2865, %v3010
      %v3251 = vadd.f32 %v2866, %v3085
      %v3252 = vadd.f32 %v2867, %v3087
      %v3253 = vadd.f32 %v2868, %v3162
      %v3254 = vadd.f32 %v2869, %v3164
      %v3255 = vadd.f32 %v2870, %v3239
      %v3256 = vadd.f32 %v2871, %v3241
      %v3257 = vadd.f32 %v2872, %v3014
      %v3258 = vadd.f32 %v2873, %v3016
      %v3259 = vadd.f32 %v2874, %v3091
      %v3260 = vadd.f32 %v2875, %v3093
      %v3261 = vadd.f32 %v2876, %v3168
      %v3262 = vadd.f32 %v2877, %v3170
      %v3263 = vadd.f32 %v2878, %v3245
      %v3264 = vadd.f32 %v2879, %v3247
      %v3265 = vld [vmem:[%s246] sm:$0xff]
      %v3266 = vld [vmem:[%s246 + $0x8] sm:$0xff]
      %v3267 = vld [vmem:[%s246 + $0x10] sm:$0xff]
      %v3268 = vld [vmem:[%s246 + $0x18] sm:$0xff]
      %s3269 = scalar_lea.vmem %s1, 128
      %v3270 = vld [vmem:[%s3269] sm:$0xff]
      %v3271 = vld [vmem:[%s3269 + $0x8] sm:$0xff]
      %v3276 = vcombine.high %v3265, %v3265
      %v3277 = vcombine.high %v3266, %v3266
      %v3278 = vcombine.high %v3267, %v3267
      %v3279 = vcombine.high %v3268, %v3268
      %3280 = vrot.lane.b32.xlu0 %v3265, 90
      %v3281 = vpop.permute.xlu0 %3280
      %3282 = vrot.lane.b32.xlu0 %v3276, 90
      %v3283 = vpop.permute.xlu0 %3282
      %3284 = vrot.lane.b32.xlu0 %v3266, 90
      %v3285 = vpop.permute.xlu0 %3284
      %3286 = vrot.lane.b32.xlu0 %v3277, 90
      %v3287 = vpop.permute.xlu0 %3286
      %3288 = vrot.lane.b32.xlu0 %v3267, 90
      %v3289 = vpop.permute.xlu0 %3288
      %3290 = vrot.lane.b32.xlu0 %v3278, 90
      %v3291 = vpop.permute.xlu0 %3290
      %3292 = vrot.lane.b32.xlu0 %v3268, 90
      %v3293 = vpop.permute.xlu0 %3292
      %3294 = vrot.lane.b32.xlu0 %v3279, 90
      %v3295 = vpop.permute.xlu0 %3294
      %vm3296 = vcmask 736256
      %v3297 = vsel %vm3296, %v3281, %v3283
      %v3298 = vsel %vm3296, %v3283, %v3285
      %v3299 = vsel %vm3296, %v3285, %v3287
      %v3300 = vsel %vm3296, %v3287, %v3289
      %v3301 = vsel %vm3296, %v3289, %v3291
      %v3302 = vsel %vm3296, %v3291, %v3293
      %v3303 = vsel %vm3296, %v3293, %v3295
      %v3305 = vsel %vm293, %v3270, 0
      %v3308 = vsel %vm293, %v3271, 0
      %v3310 = vsel %vm300, %v3297, 0
      %v3312 = vsel %vm300, %v3298, 0
      %v3314 = vsel %vm300, %v3299, 0
      %v3316 = vsel %vm300, %v3300, 0
      %v3318 = vsel %vm300, %v3301, 0
      %v3320 = vsel %vm300, %v3302, 0
      %v3322 = vsel %vm300, %v3303, 0
      %v3324 = vsel %vm300, %v3295, 0
      %3326 = vmatprep.subr.mxu0 0.0
      %3327 = vmatpush1.msra.mxu0 0.0
      %3328 = vmatprep.subr.mxu0 0.0
      %3329 = vmatpush1.msra.mxu0 0.0
      %3330 = vmatprep.subr.mxu0 0.0
      %3331 = vmatpush1.msra.mxu0 0.0
      %3332 = vmatprep.subr.mxu0 0.0
      %3333 = vmatpush1.msra.mxu0 0.0
      %3334 = vmatprep.subr.mxu0 0.0
      %3335 = vmatpush1.msra.mxu0 0.0
      %3336 = vmatprep.subr.mxu0 0.0
      %3337 = vmatpush1.msra.mxu0 0.0
      %3338 = vmatprep.subr.mxu0 0.0
      %3339 = vmatpush1.msra.mxu0 0.0
      %3340 = vmatprep.subr.mxu0 0.0
      %3341 = vmatpush1.msra.mxu0 0.0
      %3342 = vmatprep.subr.mxu0 0.0
      %3343 = vmatpush1.msra.mxu0 0.0
      %3344 = vmatprep.subr.mxu0 0.0
      %3345 = vmatpush1.msra.mxu0 0.0
      %3346 = vmatprep.subr.mxu0 0.0
      %3347 = vmatpush1.msra.mxu0 0.0
      %3348 = vmatprep.subr.mxu0 0.0
      %3349 = vmatpush1.msra.mxu0 0.0
      %3350 = vmatprep.subr.mxu0 0.0
      %3351 = vmatpush1.msra.mxu0 0.0
      %3352 = vmatprep.subr.mxu0 0.0
      %3353 = vmatpush1.msra.mxu0 0.0
      %3354 = vmatprep.subr.mxu0 0.0
      %3355 = vmatpush1.msra.mxu0 0.0
      %3356 = vmatprep.subr.mxu0 %v3312
      %3357 = vmatpush1.msra.mxu0 %v3310
      %3358 = vmatprep.subr.mxu0 0.0
      %3359 = vmatpush2.msra.mxu0 0.0
      %3360 = vmatprep.subr.mxu0 0.0
      %3361 = vmatpush2.msra.mxu0 0.0
      %3362 = vmatprep.subr.mxu0 0.0
      %3363 = vmatpush2.msra.mxu0 0.0
      %3364 = vmatprep.subr.mxu0 0.0
      %3365 = vmatpush2.msra.mxu0 0.0
      %3366 = vmatprep.subr.mxu0 0.0
      %3367 = vmatpush2.msra.mxu0 0.0
      %3368 = vmatprep.subr.mxu0 0.0
      %3369 = vmatpush2.msra.mxu0 0.0
      %3370 = vmatprep.subr.mxu0 0.0
      %3371 = vmatpush2.msra.mxu0 0.0
      %3372 = vmatprep.subr.mxu0 0.0
      %3373 = vmatpush2.msra.mxu0 0.0
      %3374 = vmatprep.subr.mxu0 0.0
      %3375 = vmatpush2.msra.mxu0 0.0
      %3376 = vmatprep.subr.mxu0 0.0
      %3377 = vmatpush2.msra.mxu0 0.0
      %3378 = vmatprep.subr.mxu0 0.0
      %3379 = vmatpush2.msra.mxu0 0.0
      %3380 = vmatprep.subr.mxu0 0.0
      %3381 = vmatpush2.msra.mxu0 0.0
      %3382 = vmatprep.subr.mxu0 0.0
      %3383 = vmatpush2.msra.mxu0 0.0
      %3384 = vmatprep.subr.mxu0 0.0
      %3385 = vmatpush2.msra.mxu0 0.0
      %3386 = vmatprep.subr.mxu0 0.0
      %3387 = vmatpush2.msra.mxu0 0.0
      %3388 = vmatprep.subr.mxu0 0.0
      %3389 = vmatpush2.msra.mxu0 0.0
      %3390 = vmatprep.mubr.f32.mxu0 0.0
      %3391 = vmatmul.mubr.f32.gmra.mxu0 %v3305
      %v3392 = vpop.f32.mrf.mxu0
      %v3393 = vadd.f32 0.0, %v3392
      %v3394 = vpop.f32.mrf.mxu0
      %v3395 = vadd.f32 0.0, %v3394
      %3396 = vmatprep.mubr.f32.mxu0 0.0
      %3397 = vmatmul.mubr.f32.gmra.mxu0 %v3308
      %v3398 = vpop.f32.mrf.mxu0
      %v3399 = vadd.f32 0.0, %v3398
      %v3400 = vpop.f32.mrf.mxu0
      %v3401 = vadd.f32 0.0, %v3400
      %3402 = vdwg.mxu0
      %3403 = vmatprep.subr.mxu0 0.0
      %3404 = vmatpush1.msra.mxu0 0.0
      %3405 = vmatprep.subr.mxu0 0.0
      %3406 = vmatpush1.msra.mxu0 0.0
      %3407 = vmatprep.subr.mxu0 0.0
      %3408 = vmatpush1.msra.mxu0 0.0
      %3409 = vmatprep.subr.mxu0 0.0
      %3410 = vmatpush1.msra.mxu0 0.0
      %3411 = vmatprep.subr.mxu0 0.0
      %3412 = vmatpush1.msra.mxu0 0.0
      %3413 = vmatprep.subr.mxu0 0.0
      %3414 = vmatpush1.msra.mxu0 0.0
      %3415 = vmatprep.subr.mxu0 0.0
      %3416 = vmatpush1.msra.mxu0 0.0
      %3417 = vmatprep.subr.mxu0 0.0
      %3418 = vmatpush1.msra.mxu0 0.0
      %3419 = vmatprep.subr.mxu0 0.0
      %3420 = vmatpush1.msra.mxu0 0.0
      %3421 = vmatprep.subr.mxu0 0.0
      %3422 = vmatpush1.msra.mxu0 0.0
      %3423 = vmatprep.subr.mxu0 0.0
      %3424 = vmatpush1.msra.mxu0 0.0
      %3425 = vmatprep.subr.mxu0 0.0
      %3426 = vmatpush1.msra.mxu0 0.0
      %3427 = vmatprep.subr.mxu0 0.0
      %3428 = vmatpush1.msra.mxu0 0.0
      %3429 = vmatprep.subr.mxu0 0.0
      %3430 = vmatpush1.msra.mxu0 0.0
      %3431 = vmatprep.subr.mxu0 0.0
      %3432 = vmatpush1.msra.mxu0 0.0
      %3433 = vmatprep.subr.mxu0 %v3316
      %3434 = vmatpush1.msra.mxu0 %v3314
      %3435 = vmatprep.subr.mxu0 0.0
      %3436 = vmatpush2.msra.mxu0 0.0
      %3437 = vmatprep.subr.mxu0 0.0
      %3438 = vmatpush2.msra.mxu0 0.0
      %3439 = vmatprep.subr.mxu0 0.0
      %3440 = vmatpush2.msra.mxu0 0.0
      %3441 = vmatprep.subr.mxu0 0.0
      %3442 = vmatpush2.msra.mxu0 0.0
      %3443 = vmatprep.subr.mxu0 0.0
      %3444 = vmatpush2.msra.mxu0 0.0
      %3445 = vmatprep.subr.mxu0 0.0
      %3446 = vmatpush2.msra.mxu0 0.0
      %3447 = vmatprep.subr.mxu0 0.0
      %3448 = vmatpush2.msra.mxu0 0.0
      %3449 = vmatprep.subr.mxu0 0.0
      %3450 = vmatpush2.msra.mxu0 0.0
      %3451 = vmatprep.subr.mxu0 0.0
      %3452 = vmatpush2.msra.mxu0 0.0
      %3453 = vmatprep.subr.mxu0 0.0
      %3454 = vmatpush2.msra.mxu0 0.0
      %3455 = vmatprep.subr.mxu0 0.0
      %3456 = vmatpush2.msra.mxu0 0.0
      %3457 = vmatprep.subr.mxu0 0.0
      %3458 = vmatpush2.msra.mxu0 0.0
      %3459 = vmatprep.subr.mxu0 0.0
      %3460 = vmatpush2.msra.mxu0 0.0
      %3461 = vmatprep.subr.mxu0 0.0
      %3462 = vmatpush2.msra.mxu0 0.0
      %3463 = vmatprep.subr.mxu0 0.0
      %3464 = vmatpush2.msra.mxu0 0.0
      %3465 = vmatprep.subr.mxu0 0.0
      %3466 = vmatpush2.msra.mxu0 0.0
      %3467 = vmatprep.mubr.f32.mxu0 0.0
      %3468 = vmatmul.mubr.f32.gmra.mxu0 %v3305
      %v3469 = vpop.f32.mrf.mxu0
      %v3470 = vadd.f32 0.0, %v3469
      %v3471 = vpop.f32.mrf.mxu0
      %v3472 = vadd.f32 0.0, %v3471
      %3473 = vmatprep.mubr.f32.mxu0 0.0
      %3474 = vmatmul.mubr.f32.gmra.mxu0 %v3308
      %v3475 = vpop.f32.mrf.mxu0
      %v3476 = vadd.f32 0.0, %v3475
      %v3477 = vpop.f32.mrf.mxu0
      %v3478 = vadd.f32 0.0, %v3477
      %3479 = vdwg.mxu0
      %3480 = vmatprep.subr.mxu0 0.0
      %3481 = vmatpush1.msra.mxu0 0.0
      %3482 = vmatprep.subr.mxu0 0.0
      %3483 = vmatpush1.msra.mxu0 0.0
      %3484 = vmatprep.subr.mxu0 0.0
      %3485 = vmatpush1.msra.mxu0 0.0
      %3486 = vmatprep.subr.mxu0 0.0
      %3487 = vmatpush1.msra.mxu0 0.0
      %3488 = vmatprep.subr.mxu0 0.0
      %3489 = vmatpush1.msra.mxu0 0.0
      %3490 = vmatprep.subr.mxu0 0.0
      %3491 = vmatpush1.msra.mxu0 0.0
      %3492 = vmatprep.subr.mxu0 0.0
      %3493 = vmatpush1.msra.mxu0 0.0
      %3494 = vmatprep.subr.mxu0 0.0
      %3495 = vmatpush1.msra.mxu0 0.0
      %3496 = vmatprep.subr.mxu0 0.0
      %3497 = vmatpush1.msra.mxu0 0.0
      %3498 = vmatprep.subr.mxu0 0.0
      %3499 = vmatpush1.msra.mxu0 0.0
      %3500 = vmatprep.subr.mxu0 0.0
      %3501 = vmatpush1.msra.mxu0 0.0
      %3502 = vmatprep.subr.mxu0 0.0
      %3503 = vmatpush1.msra.mxu0 0.0
      %3504 = vmatprep.subr.mxu0 0.0
      %3505 = vmatpush1.msra.mxu0 0.0
      %3506 = vmatprep.subr.mxu0 0.0
      %3507 = vmatpush1.msra.mxu0 0.0
      %3508 = vmatprep.subr.mxu0 0.0
      %3509 = vmatpush1.msra.mxu0 0.0
      %3510 = vmatprep.subr.mxu0 %v3320
      %3511 = vmatpush1.msra.mxu0 %v3318
      %3512 = vmatprep.subr.mxu0 0.0
      %3513 = vmatpush2.msra.mxu0 0.0
      %3514 = vmatprep.subr.mxu0 0.0
      %3515 = vmatpush2.msra.mxu0 0.0
      %3516 = vmatprep.subr.mxu0 0.0
      %3517 = vmatpush2.msra.mxu0 0.0
      %3518 = vmatprep.subr.mxu0 0.0
      %3519 = vmatpush2.msra.mxu0 0.0
      %3520 = vmatprep.subr.mxu0 0.0
      %3521 = vmatpush2.msra.mxu0 0.0
      %3522 = vmatprep.subr.mxu0 0.0
      %3523 = vmatpush2.msra.mxu0 0.0
      %3524 = vmatprep.subr.mxu0 0.0
      %3525 = vmatpush2.msra.mxu0 0.0
      %3526 = vmatprep.subr.mxu0 0.0
      %3527 = vmatpush2.msra.mxu0 0.0
      %3528 = vmatprep.subr.mxu0 0.0
      %3529 = vmatpush2.msra.mxu0 0.0
      %3530 = vmatprep.subr.mxu0 0.0
      %3531 = vmatpush2.msra.mxu0 0.0
      %3532 = vmatprep.subr.mxu0 0.0
      %3533 = vmatpush2.msra.mxu0 0.0
      %3534 = vmatprep.subr.mxu0 0.0
      %3535 = vmatpush2.msra.mxu0 0.0
      %3536 = vmatprep.subr.mxu0 0.0
      %3537 = vmatpush2.msra.mxu0 0.0
      %3538 = vmatprep.subr.mxu0 0.0
      %3539 = vmatpush2.msra.mxu0 0.0
      %3540 = vmatprep.subr.mxu0 0.0
      %3541 = vmatpush2.msra.mxu0 0.0
      %3542 = vmatprep.subr.mxu0 0.0
      %3543 = vmatpush2.msra.mxu0 0.0
      %3544 = vmatprep.mubr.f32.mxu0 0.0
      %3545 = vmatmul.mubr.f32.gmra.mxu0 %v3305
      %v3546 = vpop.f32.mrf.mxu0
      %v3547 = vadd.f32 0.0, %v3546
      %v3548 = vpop.f32.mrf.mxu0
      %v3549 = vadd.f32 0.0, %v3548
      %3550 = vmatprep.mubr.f32.mxu0 0.0
      %3551 = vmatmul.mubr.f32.gmra.mxu0 %v3308
      %v3552 = vpop.f32.mrf.mxu0
      %v3553 = vadd.f32 0.0, %v3552
      %v3554 = vpop.f32.mrf.mxu0
      %v3555 = vadd.f32 0.0, %v3554
      %3556 = vdwg.mxu0
      %3557 = vmatprep.subr.mxu0 0.0
      %3558 = vmatpush1.msra.mxu0 0.0
      %3559 = vmatprep.subr.mxu0 0.0
      %3560 = vmatpush1.msra.mxu0 0.0
      %3561 = vmatprep.subr.mxu0 0.0
      %3562 = vmatpush1.msra.mxu0 0.0
      %3563 = vmatprep.subr.mxu0 0.0
      %3564 = vmatpush1.msra.mxu0 0.0
      %3565 = vmatprep.subr.mxu0 0.0
      %3566 = vmatpush1.msra.mxu0 0.0
      %3567 = vmatprep.subr.mxu0 0.0
      %3568 = vmatpush1.msra.mxu0 0.0
      %3569 = vmatprep.subr.mxu0 0.0
      %3570 = vmatpush1.msra.mxu0 0.0
      %3571 = vmatprep.subr.mxu0 0.0
      %3572 = vmatpush1.msra.mxu0 0.0
      %3573 = vmatprep.subr.mxu0 0.0
      %3574 = vmatpush1.msra.mxu0 0.0
      %3575 = vmatprep.subr.mxu0 0.0
      %3576 = vmatpush1.msra.mxu0 0.0
      %3577 = vmatprep.subr.mxu0 0.0
      %3578 = vmatpush1.msra.mxu0 0.0
      %3579 = vmatprep.subr.mxu0 0.0
      %3580 = vmatpush1.msra.mxu0 0.0
      %3581 = vmatprep.subr.mxu0 0.0
      %3582 = vmatpush1.msra.mxu0 0.0
      %3583 = vmatprep.subr.mxu0 0.0
      %3584 = vmatpush1.msra.mxu0 0.0
      %3585 = vmatprep.subr.mxu0 0.0
      %3586 = vmatpush1.msra.mxu0 0.0
      %3587 = vmatprep.subr.mxu0 %v3324
      %3588 = vmatpush1.msra.mxu0 %v3322
      %3589 = vmatprep.subr.mxu0 0.0
      %3590 = vmatpush2.msra.mxu0 0.0
      %3591 = vmatprep.subr.mxu0 0.0
      %3592 = vmatpush2.msra.mxu0 0.0
      %3593 = vmatprep.subr.mxu0 0.0
      %3594 = vmatpush2.msra.mxu0 0.0
      %3595 = vmatprep.subr.mxu0 0.0
      %3596 = vmatpush2.msra.mxu0 0.0
      %3597 = vmatprep.subr.mxu0 0.0
      %3598 = vmatpush2.msra.mxu0 0.0
      %3599 = vmatprep.subr.mxu0 0.0
      %3600 = vmatpush2.msra.mxu0 0.0
      %3601 = vmatprep.subr.mxu0 0.0
      %3602 = vmatpush2.msra.mxu0 0.0
      %3603 = vmatprep.subr.mxu0 0.0
      %3604 = vmatpush2.msra.mxu0 0.0
      %3605 = vmatprep.subr.mxu0 0.0
      %3606 = vmatpush2.msra.mxu0 0.0
      %3607 = vmatprep.subr.mxu0 0.0
      %3608 = vmatpush2.msra.mxu0 0.0
      %3609 = vmatprep.subr.mxu0 0.0
      %3610 = vmatpush2.msra.mxu0 0.0
      %3611 = vmatprep.subr.mxu0 0.0
      %3612 = vmatpush2.msra.mxu0 0.0
      %3613 = vmatprep.subr.mxu0 0.0
      %3614 = vmatpush2.msra.mxu0 0.0
      %3615 = vmatprep.subr.mxu0 0.0
      %3616 = vmatpush2.msra.mxu0 0.0
      %3617 = vmatprep.subr.mxu0 0.0
      %3618 = vmatpush2.msra.mxu0 0.0
      %3619 = vmatprep.subr.mxu0 0.0
      %3620 = vmatpush2.msra.mxu0 0.0
      %3621 = vmatprep.mubr.f32.mxu0 0.0
      %3622 = vmatmul.mubr.f32.gmra.mxu0 %v3305
      %v3623 = vpop.f32.mrf.mxu0
      %v3624 = vadd.f32 0.0, %v3623
      %v3625 = vpop.f32.mrf.mxu0
      %v3626 = vadd.f32 0.0, %v3625
      %3627 = vmatprep.mubr.f32.mxu0 0.0
      %3628 = vmatmul.mubr.f32.gmra.mxu0 %v3308
      %v3629 = vpop.f32.mrf.mxu0
      %v3630 = vadd.f32 0.0, %v3629
      %v3631 = vpop.f32.mrf.mxu0
      %v3632 = vadd.f32 0.0, %v3631
      %3633 = vdwg.mxu0
      %v3634 = vadd.f32 %v3249, %v3393
      %v3635 = vadd.f32 %v3250, %v3395
      %v3636 = vadd.f32 %v3251, %v3470
      %v3637 = vadd.f32 %v3252, %v3472
      %v3638 = vadd.f32 %v3253, %v3547
      %v3639 = vadd.f32 %v3254, %v3549
      %v3640 = vadd.f32 %v3255, %v3624
      %v3641 = vadd.f32 %v3256, %v3626
      %v3642 = vadd.f32 %v3257, %v3399
      %v3643 = vadd.f32 %v3258, %v3401
      %v3644 = vadd.f32 %v3259, %v3476
      %v3645 = vadd.f32 %v3260, %v3478
      %v3646 = vadd.f32 %v3261, %v3553
      %v3647 = vadd.f32 %v3262, %v3555
      %v3648 = vadd.f32 %v3263, %v3630
      %v3649 = vadd.f32 %v3264, %v3632
      %v3650 = vld [vmem:[%s2] sm:$0xff]
      %v3651 = vld [vmem:[%s2 + $0x8] sm:$0xff]
      %3653 = vset.pattern.permute.xlu0 0
      %3654 = vperm.xlu0 %3653, %v3650
      %v3655 = vpop.permute.xlu0 %3654
      %3658 = vset.pattern.permute.xlu0 0
      %3659 = vperm.xlu0 %3658, %v3651
      %v3660 = vpop.permute.xlu0 %3659
      %v3662 = vadd.f32 %v3634, %v3655
      %v3663 = vadd.f32 %v3635, %v3655
      %v3664 = vadd.f32 %v3636, %v3655
      %v3665 = vadd.f32 %v3637, %v3655
      %v3666 = vadd.f32 %v3638, %v3655
      %v3667 = vadd.f32 %v3639, %v3655
      %v3668 = vadd.f32 %v3640, %v3655
      %v3669 = vadd.f32 %v3641, %v3655
      %v3670 = vadd.f32 %v3642, %v3660
      %v3671 = vadd.f32 %v3643, %v3660
      %v3672 = vadd.f32 %v3644, %v3660
      %v3673 = vadd.f32 %v3645, %v3660
      %v3674 = vadd.f32 %v3646, %v3660
      %v3675 = vadd.f32 %v3647, %v3660
      %v3676 = vadd.f32 %v3648, %v3660
      %v3677 = vadd.f32 %v3649, %v3660
      %v3678 = vmax.f32 %v3662, 0.0
      %v3679 = vmax.f32 %v3663, 0.0
      %v3680 = vmax.f32 %v3664, 0.0
      %v3681 = vmax.f32 %v3665, 0.0
      %v3682 = vmax.f32 %v3666, 0.0
      %v3683 = vmax.f32 %v3667, 0.0
      %v3684 = vmax.f32 %v3668, 0.0
      %v3685 = vmax.f32 %v3669, 0.0
      %v3686 = vmax.f32 %v3670, 0.0
      %v3687 = vmax.f32 %v3671, 0.0
      %v3688 = vmax.f32 %v3672, 0.0
      %v3689 = vmax.f32 %v3673, 0.0
      %v3690 = vmax.f32 %v3674, 0.0
      %v3691 = vmax.f32 %v3675, 0.0
      %v3692 = vmax.f32 %v3676, 0.0
      %v3693 = vmax.f32 %v3677, 0.0
      %v3694 = vld [vmem:[%s3] sm:$0xff]
      %v3696 = vlaneseq
      %v3697 = vshrl.u32 %v3696, 7
      %v3698 = vsub.s32 0, %v3697
      %v3699 = vrot.slane %v3694, %v3698
      %v3700 = vlaneseq
      %v3701 = vshrl.u32 %v3700, 7
      %v3702 = vsub.s32 1, %v3701
      %v3703 = vrot.slane %v3694, %v3702
      %v3704 = vlaneseq
      %v3705 = vshrl.u32 %v3704, 7
      %v3706 = vsub.s32 2, %v3705
      %v3707 = vrot.slane %v3694, %v3706
      %v3708 = vlaneseq
      %v3709 = vshrl.u32 %v3708, 7
      %v3710 = vsub.s32 3, %v3709
      %v3711 = vrot.slane %v3694, %v3710
      %v3712 = vlaneseq
      %v3713 = vshrl.u32 %v3712, 7
      %v3714 = vsub.s32 4, %v3713
      %v3715 = vrot.slane %v3694, %v3714
      %v3716 = vlaneseq
      %v3717 = vshrl.u32 %v3716, 7
      %v3718 = vsub.s32 5, %v3717
      %v3719 = vrot.slane %v3694, %v3718
      %v3720 = vlaneseq
      %v3721 = vshrl.u32 %v3720, 7
      %v3722 = vsub.s32 6, %v3721
      %v3723 = vrot.slane %v3694, %v3722
      %v3724 = vlaneseq
      %v3725 = vshrl.u32 %v3724, 7
      %v3726 = vsub.s32 7, %v3725
      %v3727 = vrot.slane %v3694, %v3726
      %v3736 = vmul.f32 %v3678, %v3699
      %v3737 = vmul.f32 %v3679, %v3703
      %v3738 = vmul.f32 %v3680, %v3707
      %v3739 = vmul.f32 %v3681, %v3711
      %v3740 = vmul.f32 %v3682, %v3715
      %v3741 = vmul.f32 %v3683, %v3719
      %v3742 = vmul.f32 %v3684, %v3723
      %v3743 = vmul.f32 %v3685, %v3727
      %v3744 = vmul.f32 %v3686, %v3699
      %v3745 = vmul.f32 %v3687, %v3703
      %v3746 = vmul.f32 %v3688, %v3707
      %v3747 = vmul.f32 %v3689, %v3711
      %v3748 = vmul.f32 %v3690, %v3715
      %v3749 = vmul.f32 %v3691, %v3719
      %v3750 = vmul.f32 %v3692, %v3723
      %v3751 = vmul.f32 %v3693, %v3727
      %v3752 = vadd.f32 %v3736, %v3737
      %v3753 = vadd.f32 %v3752, %v3738
      %v3754 = vadd.f32 %v3753, %v3739
      %v3755 = vadd.f32 %v3754, %v3740
      %v3756 = vadd.f32 %v3755, %v3741
      %v3757 = vadd.f32 %v3756, %v3742
      %vm3758 = vcmask 621568
      %v3759 = vsel %vm3758, %v3743, 0.0
      %v3760 = vadd.f32 %v3757, %v3759
      %3761 = vadd.xlane.f32.xlu0 %v3760
      %v3762 = vpop.xlane.xlu0 %3761
      %v3763 = vadd.f32 %v3744, %v3745
      %v3764 = vadd.f32 %v3763, %v3746
      %v3765 = vadd.f32 %v3764, %v3747
      %v3766 = vadd.f32 %v3765, %v3748
      %v3767 = vadd.f32 %v3766, %v3749
      %v3768 = vadd.f32 %v3767, %v3750
      %v3769 = vsel %vm3758, %v3751, 0.0
      %v3770 = vadd.f32 %v3768, %v3769
      %3771 = vadd.xlane.f32.xlu0 %v3770
      %v3772 = vpop.xlane.xlu0 %3771
      %v3773 = vmul.f32 %v3762, 0.0013020834
      %v3774 = vmul.f32 %v3772, 0.0013020834
      %v3775 = vld [vmem:[%s4] sm:$0xff]
      %v3776 = vld [vmem:[%s4 + $0x8] sm:$0xff]
      %v3777 = vld [vmem:[%s4 + $0x10] sm:$0xff]
      %v3778 = vld [vmem:[%s4 + $0x18] sm:$0xff]
      %v3779 = vld [vmem:[%s4 + $0x20] sm:$0xff]
      %v3780 = vld [vmem:[%s4 + $0x28] sm:$0xff]
      %v3781 = vld [vmem:[%s4 + $0x30] sm:$0xff]
      %v3782 = vld [vmem:[%s4 + $0x38] sm:$0xff]
      %v3783 = vld [vmem:[%s4 + $0x40] sm:$0xff]
      %v3784 = vld [vmem:[%s4 + $0x48] sm:$0xff]
      %v3785 = vld [vmem:[%s4 + $0x50] sm:$0xff]
      %v3786 = vld [vmem:[%s4 + $0x58] sm:$0xff]
      %v3787 = vld [vmem:[%s4 + $0x60] sm:$0xff]
      %v3788 = vld [vmem:[%s4 + $0x68] sm:$0xff]
      %v3789 = vld [vmem:[%s4 + $0x70] sm:$0xff]
      %v3790 = vld [vmem:[%s4 + $0x78] sm:$0xff]
      %v3791 = vld [vmem:[%s5] sm:$0xff]
      %v3792 = vld [vmem:[%s5 + $0x8] sm:$0xff]
      %v3793 = vld [vmem:[%s5 + $0x10] sm:$0xff]
      %v3794 = vld [vmem:[%s5 + $0x18] sm:$0xff]
      %v3795 = vld [vmem:[%s5 + $0x20] sm:$0xff]
      %v3796 = vld [vmem:[%s5 + $0x28] sm:$0xff]
      %v3797 = vld [vmem:[%s5 + $0x30] sm:$0xff]
      %v3798 = vld [vmem:[%s5 + $0x38] sm:$0xff]
      %v3799 = vld [vmem:[%s5 + $0x40] sm:$0xff]
      %v3800 = vld [vmem:[%s5 + $0x48] sm:$0xff]
      %v3801 = vld [vmem:[%s5 + $0x50] sm:$0xff]
      %v3802 = vld [vmem:[%s5 + $0x58] sm:$0xff]
      %v3803 = vld [vmem:[%s5 + $0x60] sm:$0xff]
      %v3804 = vld [vmem:[%s5 + $0x68] sm:$0xff]
      %v3805 = vld [vmem:[%s5 + $0x70] sm:$0xff]
      %v3806 = vld [vmem:[%s5 + $0x78] sm:$0xff]
      %vm3807 = vcmask 130048
      %v3809 = vsel %vm3807, %v3775, 0
      %v3812 = vsel %vm3807, %v3776, 0
      %v3815 = vsel %vm3807, %v3777, 0
      %v3818 = vsel %vm3807, %v3778, 0
      %v3821 = vsel %vm3807, %v3779, 0
      %v3824 = vsel %vm3807, %v3780, 0
      %v3827 = vsel %vm3807, %v3781, 0
      %v3830 = vsel %vm3807, %v3782, 0
      %v3833 = vsel %vm3807, %v3783, 0
      %v3836 = vsel %vm3807, %v3784, 0
      %v3839 = vsel %vm3807, %v3785, 0
      %v3842 = vsel %vm3807, %v3786, 0
      %v3845 = vsel %vm3807, %v3787, 0
      %v3848 = vsel %vm3807, %v3788, 0
      %v3851 = vsel %vm3807, %v3789, 0
      %v3854 = vsel %vm3807, %v3790, 0
      %3856 = vmatprep.subr.mxu0 0.0
      %3857 = vmatpush1.msra.mxu0 0.0
      %3858 = vmatprep.subr.mxu0 0.0
      %3859 = vmatpush1.msra.mxu0 0.0
      %3860 = vmatprep.subr.mxu0 0.0
      %3861 = vmatpush1.msra.mxu0 0.0
      %3862 = vmatprep.subr.mxu0 0.0
      %3863 = vmatpush1.msra.mxu0 0.0
      %3864 = vmatprep.subr.mxu0 0.0
      %3865 = vmatpush1.msra.mxu0 0.0
      %3866 = vmatprep.subr.mxu0 0.0
      %3867 = vmatpush1.msra.mxu0 0.0
      %3868 = vmatprep.subr.mxu0 0.0
      %3869 = vmatpush1.msra.mxu0 0.0
      %3870 = vmatprep.subr.mxu0 0.0
      %3871 = vmatpush1.msra.mxu0 0.0
      %3872 = vmatprep.subr.mxu0 0.0
      %3873 = vmatpush1.msra.mxu0 0.0
      %3874 = vmatprep.subr.mxu0 0.0
      %3875 = vmatpush1.msra.mxu0 0.0
      %3876 = vmatprep.subr.mxu0 0.0
      %3877 = vmatpush1.msra.mxu0 0.0
      %3878 = vmatprep.subr.mxu0 0.0
      %3879 = vmatpush1.msra.mxu0 0.0
      %3880 = vmatprep.subr.mxu0 0.0
      %3881 = vmatpush1.msra.mxu0 0.0
      %3882 = vmatprep.subr.mxu0 0.0
      %3883 = vmatpush1.msra.mxu0 0.0
      %3884 = vmatprep.subr.mxu0 0.0
      %3885 = vmatpush1.msra.mxu0 %v3774
      %3886 = vmatprep.subr.mxu0 0.0
      %3887 = vmatpush1.msra.mxu0 %v3773
      %3888 = vmatprep.subr.mxu0 0.0
      %3889 = vmatpush2.msra.mxu0 0.0
      %3890 = vmatprep.subr.mxu0 0.0
      %3891 = vmatpush2.msra.mxu0 0.0
      %3892 = vmatprep.subr.mxu0 0.0
      %3893 = vmatpush2.msra.mxu0 0.0
      %3894 = vmatprep.subr.mxu0 0.0
      %3895 = vmatpush2.msra.mxu0 0.0
      %3896 = vmatprep.subr.mxu0 0.0
      %3897 = vmatpush2.msra.mxu0 0.0
      %3898 = vmatprep.subr.mxu0 0.0
      %3899 = vmatpush2.msra.mxu0 0.0
      %3900 = vmatprep.subr.mxu0 0.0
      %3901 = vmatpush2.msra.mxu0 0.0
      %3902 = vmatprep.subr.mxu0 0.0
      %3903 = vmatpush2.msra.mxu0 0.0
      %3904 = vmatprep.subr.mxu0 0.0
      %3905 = vmatpush2.msra.mxu0 0.0
      %3906 = vmatprep.subr.mxu0 0.0
      %3907 = vmatpush2.msra.mxu0 0.0
      %3908 = vmatprep.subr.mxu0 0.0
      %3909 = vmatpush2.msra.mxu0 0.0
      %3910 = vmatprep.subr.mxu0 0.0
      %3911 = vmatpush2.msra.mxu0 0.0
      %3912 = vmatprep.subr.mxu0 0.0
      %3913 = vmatpush2.msra.mxu0 0.0
      %3914 = vmatprep.subr.mxu0 0.0
      %3915 = vmatpush2.msra.mxu0 0.0
      %3916 = vmatprep.subr.mxu0 0.0
      %3917 = vmatpush2.msra.mxu0 0.0
      %3918 = vmatprep.subr.mxu0 0.0
      %3919 = vmatpush2.msra.mxu0 0.0
      %3920 = vmatprep.mubr.f32.mxu0 0.0
      %3921 = vmatmul.mubr.f32.gmra.mxu0 %v3809
      %v3922 = vpop.f32.mrf.mxu0
      %v3923 = vadd.f32 %v3791, %v3922
      %v3924 = vpop.f32.mrf.mxu0
      %3925 = vmatprep.mubr.f32.mxu0 0.0
      %3926 = vmatmul.mubr.f32.gmra.mxu0 %v3812
      %v3927 = vpop.f32.mrf.mxu0
      %v3928 = vadd.f32 %v3792, %v3927
      %v3929 = vpop.f32.mrf.mxu0
      %3930 = vmatprep.mubr.f32.mxu0 0.0
      %3931 = vmatmul.mubr.f32.gmra.mxu0 %v3815
      %v3932 = vpop.f32.mrf.mxu0
      %v3933 = vadd.f32 %v3793, %v3932
      %v3934 = vpop.f32.mrf.mxu0
      %3935 = vmatprep.mubr.f32.mxu0 0.0
      %3936 = vmatmul.mubr.f32.gmra.mxu0 %v3818
      %v3937 = vpop.f32.mrf.mxu0
      %v3938 = vadd.f32 %v3794, %v3937
      %v3939 = vpop.f32.mrf.mxu0
      %3940 = vmatprep.mubr.f32.mxu0 0.0
      %3941 = vmatmul.mubr.f32.gmra.mxu0 %v3821
      %v3942 = vpop.f32.mrf.mxu0
      %v3943 = vadd.f32 %v3795, %v3942
      %v3944 = vpop.f32.mrf.mxu0
      %3945 = vmatprep.mubr.f32.mxu0 0.0
      %3946 = vmatmul.mubr.f32.gmra.mxu0 %v3824
      %v3947 = vpop.f32.mrf.mxu0
      %v3948 = vadd.f32 %v3796, %v3947
      %v3949 = vpop.f32.mrf.mxu0
      %3950 = vmatprep.mubr.f32.mxu0 0.0
      %3951 = vmatmul.mubr.f32.gmra.mxu0 %v3827
      %v3952 = vpop.f32.mrf.mxu0
      %v3953 = vadd.f32 %v3797, %v3952
      %v3954 = vpop.f32.mrf.mxu0
      %3955 = vmatprep.mubr.f32.mxu0 0.0
      %3956 = vmatmul.mubr.f32.gmra.mxu0 %v3830
      %v3957 = vpop.f32.mrf.mxu0
      %v3958 = vadd.f32 %v3798, %v3957
      %v3959 = vpop.f32.mrf.mxu0
      %3960 = vmatprep.mubr.f32.mxu0 0.0
      %3961 = vmatmul.mubr.f32.gmra.mxu0 %v3833
      %v3962 = vpop.f32.mrf.mxu0
      %v3963 = vadd.f32 %v3799, %v3962
      %v3964 = vpop.f32.mrf.mxu0
      %3965 = vmatprep.mubr.f32.mxu0 0.0
      %3966 = vmatmul.mubr.f32.gmra.mxu0 %v3836
      %v3967 = vpop.f32.mrf.mxu0
      %v3968 = vadd.f32 %v3800, %v3967
      %v3969 = vpop.f32.mrf.mxu0
      %3970 = vmatprep.mubr.f32.mxu0 0.0
      %3971 = vmatmul.mubr.f32.gmra.mxu0 %v3839
      %v3972 = vpop.f32.mrf.mxu0
      %v3973 = vadd.f32 %v3801, %v3972
      %v3974 = vpop.f32.mrf.mxu0
      %3975 = vmatprep.mubr.f32.mxu0 0.0
      %3976 = vmatmul.mubr.f32.gmra.mxu0 %v3842
      %v3977 = vpop.f32.mrf.mxu0
      %v3978 = vadd.f32 %v3802, %v3977
      %v3979 = vpop.f32.mrf.mxu0
      %3980 = vmatprep.mubr.f32.mxu0 0.0
      %3981 = vmatmul.mubr.f32.gmra.mxu0 %v3845
      %v3982 = vpop.f32.mrf.mxu0
      %v3983 = vadd.f32 %v3803, %v3982
      %v3984 = vpop.f32.mrf.mxu0
      %3985 = vmatprep.mubr.f32.mxu0 0.0
      %3986 = vmatmul.mubr.f32.gmra.mxu0 %v3848
      %v3987 = vpop.f32.mrf.mxu0
      %v3988 = vadd.f32 %v3804, %v3987
      %v3989 = vpop.f32.mrf.mxu0
      %3990 = vmatprep.mubr.f32.mxu0 0.0
      %3991 = vmatmul.mubr.f32.gmra.mxu0 %v3851
      %v3992 = vpop.f32.mrf.mxu0
      %v3993 = vadd.f32 %v3805, %v3992
      %v3994 = vpop.f32.mrf.mxu0
      %3995 = vmatprep.mubr.f32.mxu0 0.0
      %3996 = vmatmul.mubr.f32.gmra.mxu0 %v3854
      %v3997 = vpop.f32.mrf.mxu0
      %v3998 = vadd.f32 %v3806, %v3997
      %v3999 = vpop.f32.mrf.mxu0
      %4000 = vdwg.mxu0
      %vm4001 = vcmask 7168
      %4002 = vst.msk [vmem:[%s251] sm:$0xff] %vm4001, %v3923
      %4003 = vst.msk [vmem:[%s251 + $0x8] sm:$0xff] %vm4001, %v3928
      %4004 = vst.msk [vmem:[%s251 + $0x10] sm:$0xff] %vm4001, %v3933
      %4005 = vst.msk [vmem:[%s251 + $0x18] sm:$0xff] %vm4001, %v3938
      %4006 = vst.msk [vmem:[%s251 + $0x20] sm:$0xff] %vm4001, %v3943
      %4007 = vst.msk [vmem:[%s251 + $0x28] sm:$0xff] %vm4001, %v3948
      %4008 = vst.msk [vmem:[%s251 + $0x30] sm:$0xff] %vm4001, %v3953
      %4009 = vst.msk [vmem:[%s251 + $0x38] sm:$0xff] %vm4001, %v3958
      %4010 = vst.msk [vmem:[%s251 + $0x40] sm:$0xff] %vm4001, %v3963
      %4011 = vst.msk [vmem:[%s251 + $0x48] sm:$0xff] %vm4001, %v3968
      %4012 = vst.msk [vmem:[%s251 + $0x50] sm:$0xff] %vm4001, %v3973
      %4013 = vst.msk [vmem:[%s251 + $0x58] sm:$0xff] %vm4001, %v3978
      %4014 = vst.msk [vmem:[%s251 + $0x60] sm:$0xff] %vm4001, %v3983
      %4015 = vst.msk [vmem:[%s251 + $0x68] sm:$0xff] %vm4001, %v3988
      %4016 = vst.msk [vmem:[%s251 + $0x70] sm:$0xff] %vm4001, %v3993
      %4017 = vst.msk [vmem:[%s251 + $0x78] sm:$0xff] %vm4001, %v3998
      %p4018 = scmp.lt.s32.totalorder %s17, 1
      %s4019 = scalar_select %p4018, %s17, 1
      %s4020 = smul.addr %s4019, 16
      %s4021 = smul.addr %s4020, 8
      %s4022 = scalar_lea.vmem %s6, %s4021
      // Predicated region
      $region45: #{_lambda_.1} parent=43 // pred_check
        %p4023 = pneg %p166
      $region46: #{_lambda_.1} parent=43 // pred_check_branch
        %4025 = sbr.rel (%p4023) target = $region48
      $region47: #{_lambda_.1} parent=43 // pred_region
        _
      $region48: #{_lambda_.1} parent=43 // pred_fallthru
        _
    $region44: #{_lambda_.1} parent=5 // pred_fallthru
      _
    %p4026 = scmp.le.s32.totalorder 2, %s12
    // Predicated region
    $region49: #{_lambda_.1} parent=5 // pred_check
      %p4027 = pneg %p4026
    $region50: #{_lambda_.1} parent=5 // pred_check_branch
      %4029 = sbr.rel (%p4027) target = $region52
    $region51: #{_lambda_.1} parent=5 // pred_region
      %s4030 = ssub.s32 %s12, 2
      // Predicated region
      $region53: #{_lambda_.1} parent=51 // pred_check
        %p4031 = pneg %p172
      $region54: #{_lambda_.1} parent=51 // pred_check_branch
        %4033 = sbr.rel (%p4031) target = $region56
      $region55: #{_lambda_.1} parent=51 // pred_region
        %p4034 = scmp.lt.s32.totalorder %s18, 1
        %s4035 = scalar_select %p4034, %s18, 1
        %s4036 = smul.addr %s4035, 16
        %s4037 = smul.addr %s4036, 8
        %s4038 = scalar_lea.vmem %s6, %s4037
      $region56: #{_lambda_.1} parent=51 // pred_fallthru
        _
    $region52: #{_lambda_.1} parent=5 // pred_fallthru
      _
  $region6: #{_lambda_.1} parent=0 // loop_footer
    %s16 = sadd.s32 1, %s12
  $region7: #{_lambda_.1} parent=0 // loop_footer_branch
    %11 = sbr.rel target = $region3
  $region8: #{_lambda_.1} parent=0 // loop_exit
    _

</llo_original>
